<compile_context>
chip_gen: v7x
topology: tpu7x:2x2x1
jax: 0.10.0
libtpu: 0.0.40
codegen_flags: <defaults>
</compile_context>

<pallas_src>
import math

import jax
import jax.numpy as jnp
from jax import lax
from jax.experimental import pallas as pl
from jax.experimental.pallas import tpu as pltpu

NUM_HEADS = 4
LN_EPS = 1e-5
NEG_INF = -1e9


def _make_block_kernel(num_heads):
    H = num_heads

    def _block_kernel(
        x_ref,        # (Bb, T, D)      hidden_states tile
        mask_ref,     # (Bb, 1, T)      additive key-padding mask (0 / -1e9)
        bias_ref,     # (H, T, T)       additive position bias (shared across batch)
        wqkv_ref,     # (D, 3*H*dh)     bf16, fused [Q|K|V], Q pre-scaled by 1/sqrt(dh)
        bqkv_ref,     # (1, 3*H*dh)     f32
        wo_ref,       # (H*dh, D)       bf16
        bo_ref,       # (1, D)          f32
        w1_ref, b1_ref,   # (D, F) bf16, (1, F) f32
        w2_ref, b2_ref,   # (F, D) bf16, (1, D) f32
        lnw_ref, lnb_ref, # (2, D), (2, D) f32   [attn-LN, ffn-LN]
        out_ref,      # (Bb, T, D)
    ):
        Bb, T, D = x_ref.shape
        HD = wqkv_ref.shape[1] // 3            # = H * dh
        dh = HD // H

        # Flatten batch rows into sublanes; elementwise math in f32 (v5e VPU/EUP).
        x = x_ref[...].reshape(Bb * T, D).astype(jnp.float32)
        mask = mask_ref[...]                   # (Bb, 1, T), hoisted

        def layer_norm(h, idx):
            w = lnw_ref[idx:idx + 1, :]        # (1, D) static slice
            b = lnb_ref[idx:idx + 1, :]
            mu = jnp.mean(h, axis=-1, keepdims=True)
            var = jnp.mean((h - mu) ** 2, axis=-1, keepdims=True)
            return (h - mu) * lax.rsqrt(var + LN_EPS) * w + b

        def split_heads(flat):
            # (Bb*T, H*dh) f32 -> (H*Bb, T, dh) bf16; group dim ordered (head, batch).
            per_head = [flat[:, h * dh:(h + 1) * dh] for h in range(H)]
            g = jnp.stack(per_head, axis=0)                     # (H, Bb*T, dh)
            return g.reshape(H * Bb, T, dh).astype(jnp.bfloat16)

        # ---------------- self-attention (pre-LN) ----------------
        h_ln = layer_norm(x, 0)
        h_bf = h_ln.astype(jnp.bfloat16)       # bf16 operands -> native MXU path

        # One fused lane-dense QKV projection: (Bb*T,128) x (128,384).
        qkv = jnp.dot(h_bf, wqkv_ref[...],
                      preferred_element_type=jnp.float32) + bqkv_ref[...]
        q_g = split_heads(qkv[:, 0:HD])        # 1/sqrt(dh) already folded into weights
        k_g = split_heads(qkv[:, HD:2 * HD])
        v_g = split_heads(qkv[:, 2 * HD:3 * HD])

        # Batched-over-(head,batch) score matmul; additive masks (single VPU add).
        s = jnp.einsum('gqd,gkd->gqk', q_g, k_g,
                       preferred_element_type=jnp.float32)      # (H*Bb, T, T)
        s = (s.reshape(H, Bb, T, T)
             + bias_ref[...][:, None, :, :]                     # (H, 1, T, T)
             + mask[None, :, :, :])                             # (1, Bb, 1, T)

        # Explicit softmax in f32; reciprocal runs on the EUP slot (approx ~1e-3 rel).
        m = jnp.max(s, axis=-1, keepdims=True)
        e = jnp.exp(s - m)
        p = e * pl.reciprocal(jnp.sum(e, axis=-1, keepdims=True), approx=True)

        ctx = jnp.einsum('gqk,gkd->gqd',
                         p.reshape(H * Bb, T, T).astype(jnp.bfloat16), v_g,
                         preferred_element_type=jnp.float32)    # (H*Bb, T, dh)

        # Lane-concat heads back to (Bb*T, H*dh) and do ONE K=128 output projection.
        ctx_hb = ctx.reshape(H, Bb * T, dh)
        ctx_flat = jnp.concatenate([ctx_hb[h] for h in range(H)], axis=-1)
        attn = jnp.dot(ctx_flat.astype(jnp.bfloat16), wo_ref[...],
                       preferred_element_type=jnp.float32)

        h1 = x + attn + bo_ref[...]            # residual

        # ---------------- feed-forward (pre-LN) ----------------
        h2 = layer_norm(h1, 1).astype(jnp.bfloat16)
        f = jnp.dot(h2, w1_ref[...], preferred_element_type=jnp.float32) + b1_ref[...]
        # TODO(synk): torch F.gelu default is exact erf-GELU; tanh approximation used here.
        f = jax.nn.gelu(f, approximate=True)
        f = jnp.dot(f.astype(jnp.bfloat16), w2_ref[...],
                    preferred_element_type=jnp.float32) + b2_ref[...]
        out = h1 + f

        out_ref[...] = out.reshape(Bb, T, D).astype(out_ref.dtype)

    return _block_kernel


def _pick_block_batch(B):
    """v5e/v6e: single TensorCore -> the grid is a serial loop, so use the whole
    batch per step (max M rows, no per-step overhead).  v7x: 2 TCs -> split the
    batch so dimension_semantics=('parallel',) gives each core work."""
    kind = ""
    try:
        kind = jax.devices()[0].device_kind.lower()
    except Exception:
        pass
    if "v7" in kind and B % 2 == 0:
        return B // 2
    return B


def prepare_params(raw, num_heads=NUM_HEADS):
    """One-time weight preparation (call OUTSIDE the per-step hot path):
       - fuse per-head Q/K/V weights into one (D, 3*H*dh) matrix,
       - fold the 1/sqrt(dh) attention scale into the Q weight/bias,
       - flatten W_O to (H*dh, D),
       - pre-cast all matmul weights to bf16 (biases / LN stay f32)."""
    H, D, dh = raw["w_q"].shape
    assert H == num_heads
    scale = 1.0 / math.sqrt(dh)

    to_cols = lambda w: jnp.transpose(w, (1, 0, 2)).reshape(D, H * dh)  # (h,Din,dh)->(Din,h*dh)
    to_brow = lambda b: b.reshape(1, H * dh)                            # (h,1,dh)->(1,h*dh)
    w_qkv = jnp.concatenate(
        [to_cols(raw["w_q"]) * scale, to_cols(raw["w_k"]), to_cols(raw["w_v"])], axis=1)
    b_qkv = jnp.concatenate(
        [to_brow(raw["b_q"]) * scale, to_brow(raw["b_k"]), to_brow(raw["b_v"])], axis=1)

    bf = lambda a: a.astype(jnp.bfloat16)
    return {
        "num_heads": H,
        "w_qkv": bf(w_qkv), "b_qkv": b_qkv.astype(jnp.float32),
        "w_o": bf(raw["w_o"].reshape(H * dh, D)), "b_o": raw["b_o"].astype(jnp.float32),
        "w_f1": bf(raw["w_f1"]), "b_f1": raw["b_f1"].astype(jnp.float32),
        "w_f2": bf(raw["w_f2"]), "b_f2": raw["b_f2"].astype(jnp.float32),
        "ln_w": raw["ln_w"].astype(jnp.float32), "ln_b": raw["ln_b"].astype(jnp.float32),
    }


def checkpoint_wrapper_forward(params, hidden_states, attention_mask, position_bias,
                               use_checkpoint=False, training=False, block_batch=None):
    """Mirrors CheckpointWrapper.forward.

    torch.utils.checkpoint only affects backward-pass memory; forward values are
    identical on both branches, so both paths simply invoke the wrapped module
    (here: one fused pre-LN transformer block).  `params` must come from
    prepare_params (weights fused + bf16 once, not per call)."""
    del use_checkpoint, training  # no effect on forward values

    B, T, D = hidden_states.shape
    H = params["num_heads"]
    if position_bias.ndim == 4:               # accept (1, H, T, T) or (H, T, T)
        position_bias = position_bias[0]
    position_bias = position_bias.astype(jnp.float32)

    # Boolean key-padding mask (True = attendable) -> additive mask (cheap glue).
    # NOTE: assumes a boolean/0-1 mask; an HF-style already-additive float mask
    # would need to be passed through unchanged instead.
    add_mask = jnp.where(attention_mask.astype(jnp.bool_), 0.0, NEG_INF)
    add_mask = add_mask.astype(jnp.float32).reshape(B, 1, T)

    Bb = _pick_block_batch(B) if block_batch is None else block_batch
    assert B % Bb == 0, "batch must be divisible by block_batch"

    w = params
    weight_args = (
        w["w_qkv"], w["b_qkv"], w["w_o"], w["b_o"],
        w["w_f1"], w["b_f1"], w["w_f2"], w["b_f2"],
        w["ln_w"], w["ln_b"],
    )

    def _const_spec(a):                        # resident / grid-invariant inputs
        nd = a.ndim
        return pl.BlockSpec(a.shape, lambda b, _nd=nd: (0,) * _nd)

    in_specs = [
        pl.BlockSpec((Bb, T, D), lambda b: (b, 0, 0)),
        pl.BlockSpec((Bb, 1, T), lambda b: (b, 0, 0)),
        _const_spec(position_bias),
    ] + [_const_spec(a) for a in weight_args]

    out = pl.pallas_call(
        _make_block_kernel(H),
        out_shape=jax.ShapeDtypeStruct((B, T, D), hidden_states.dtype),
        grid=(B // Bb,),
        in_specs=in_specs,
        out_specs=pl.BlockSpec((Bb, T, D), lambda b: (b, 0, 0)),
        compiler_params=pltpu.CompilerParams(
            dimension_semantics=("parallel",),     # v7x: shard batch over 2 TCs
            vmem_limit_bytes=32 * 1024 * 1024,     # well under v7x's 64 MiB physical
        ),
    )(hidden_states, add_mask, position_bias, *weight_args)

    # Wrapped module returns a tuple; the wrapper passes it through unchanged
    # on the non-checkpoint path.
    return (out, position_bias)


def init_params(key, D, H, ffn):
    """Raw (torch-layout) parameters; run prepare_params on them once."""
    dh = D // H
    ks = jax.random.split(key, 8)
    n = lambda k, shape: (0.02 * jax.random.normal(k, shape)).astype(jnp.float32)
    return {
        "w_q": n(ks[0], (H, D, dh)), "b_q": jnp.zeros((H, 1, dh), jnp.float32),
        "w_k": n(ks[1], (H, D, dh)), "b_k": jnp.zeros((H, 1, dh), jnp.float32),
        "w_v": n(ks[2], (H, D, dh)), "b_v": jnp.zeros((H, 1, dh), jnp.float32),
        "w_o": n(ks[3], (H, dh, D)), "b_o": jnp.zeros((1, D), jnp.float32),
        "w_f1": n(ks[4], (D, ffn)),  "b_f1": jnp.zeros((1, ffn), jnp.float32),
        "w_f2": n(ks[5], (ffn, D)),  "b_f2": jnp.zeros((1, D), jnp.float32),
        "ln_w": jnp.ones((2, D), jnp.float32),
        "ln_b": jnp.zeros((2, D), jnp.float32),
    }


if __name__ == "__main__":
    B, T, D, H, FFN = 4, 16, 128, NUM_HEADS, 256  # D=128 keeps all tiles lane-dense
    key = jax.random.PRNGKey(0)
    kp, kh, kb = jax.random.split(key, 3)

    params = prepare_params(init_params(kp, D, H, FFN), num_heads=H)  # one-time prep
    hidden_states = jax.random.normal(kh, (B, T, D), dtype=jnp.float32)
    position_bias = 0.1 * jax.random.normal(kb, (1, H, T, T), dtype=jnp.float32)
    # True = attendable; last two tokens of the last batch row are padding.
    attention_mask = jnp.ones((B, T), jnp.bool_).at[B - 1, T - 2:].set(False)

    out, _ = checkpoint_wrapper_forward(
        params, hidden_states, attention_mask, position_bias,
        use_checkpoint=False, training=False)
    jax.block_until_ready(out)
    assert out.shape == (B, T, D) and out.dtype == jnp.float32
    print("KERNEL_OK")
</pallas_src>

<mosaic_0001>
module attributes {stable_mosaic.version = 11 : i64} {
  func.func @_block_kernel(%arg0: i32, %arg1: memref<4x16x128xf32, #tpu.memory_space<vmem>>, %arg2: memref<4x1x16xf32, #tpu.memory_space<vmem>>, %arg3: memref<4x16x16xf32, #tpu.memory_space<vmem>>, %arg4: memref<128x384xbf16, #tpu.memory_space<vmem>>, %arg5: memref<1x384xf32, #tpu.memory_space<vmem>>, %arg6: memref<128x128xbf16, #tpu.memory_space<vmem>>, %arg7: memref<1x128xf32, #tpu.memory_space<vmem>>, %arg8: memref<128x256xbf16, #tpu.memory_space<vmem>>, %arg9: memref<1x256xf32, #tpu.memory_space<vmem>>, %arg10: memref<256x128xbf16, #tpu.memory_space<vmem>>, %arg11: memref<1x128xf32, #tpu.memory_space<vmem>>, %arg12: memref<2x128xf32, #tpu.memory_space<vmem>>, %arg13: memref<2x128xf32, #tpu.memory_space<vmem>>, %arg14: memref<4x16x128xf32, #tpu.memory_space<vmem>>) attributes {dimension_semantics = [#tpu.dimension_semantics<parallel>], iteration_bounds = array<i64: 1>, scalar_prefetch = 0 : i64, scratch_operands = 0 : i64, tpu.core_type = #tpu.core_type<tc>, window_params = [{transform_indices = @transform_0, window_bounds = array<i64: 4, 16, 128>}, {transform_indices = @transform_1, window_bounds = array<i64: 4, 1, 16>}, {pipeline_mode = #tpu.pipeline_mode<synchronous>, transform_indices = @transform_2, window_bounds = array<i64: 4, 16, 16>}, {pipeline_mode = #tpu.pipeline_mode<synchronous>, transform_indices = @transform_3, window_bounds = array<i64: 128, 384>}, {pipeline_mode = #tpu.pipeline_mode<synchronous>, transform_indices = @transform_4, window_bounds = array<i64: 1, 384>}, {pipeline_mode = #tpu.pipeline_mode<synchronous>, transform_indices = @transform_5, window_bounds = array<i64: 128, 128>}, {pipeline_mode = #tpu.pipeline_mode<synchronous>, transform_indices = @transform_6, window_bounds = array<i64: 1, 128>}, {pipeline_mode = #tpu.pipeline_mode<synchronous>, transform_indices = @transform_7, window_bounds = array<i64: 128, 256>}, {pipeline_mode = #tpu.pipeline_mode<synchronous>, transform_indices = @transform_8, window_bounds = array<i64: 1, 256>}, {pipeline_mode = #tpu.pipeline_mode<synchronous>, transform_indices = @transform_9, window_bounds = array<i64: 256, 128>}, {pipeline_mode = #tpu.pipeline_mode<synchronous>, transform_indices = @transform_10, window_bounds = array<i64: 1, 128>}, {pipeline_mode = #tpu.pipeline_mode<synchronous>, transform_indices = @transform_11, window_bounds = array<i64: 2, 128>}, {pipeline_mode = #tpu.pipeline_mode<synchronous>, transform_indices = @transform_12, window_bounds = array<i64: 2, 128>}, {transform_indices = @transform_13, window_bounds = array<i64: 4, 16, 128>}]} {
    %c0 = arith.constant 0 : index
    %c0_0 = arith.constant 0 : index
    %c0_1 = arith.constant 0 : index
    %0 = vector.load %arg1[%c0, %c0_0, %c0_1] : memref<4x16x128xf32, #tpu.memory_space<vmem>>, vector<4x16x128xf32>
    %1 = vector.shape_cast %0 : vector<4x16x128xf32> to vector<64x128xf32>
    %c0_2 = arith.constant 0 : index
    %c0_3 = arith.constant 0 : index
    %c0_4 = arith.constant 0 : index
    %2 = vector.load %arg2[%c0_2, %c0_3, %c0_4] : memref<4x1x16xf32, #tpu.memory_space<vmem>>, vector<4x1x16xf32>
    %c0_5 = arith.constant 0 : index
    %c0_6 = arith.constant 0 : index
    %3 = vector.load %arg12[%c0_5, %c0_6] : memref<2x128xf32, #tpu.memory_space<vmem>>, vector<1x128xf32>
    %c0_7 = arith.constant 0 : index
    %c0_8 = arith.constant 0 : index
    %4 = vector.load %arg13[%c0_7, %c0_8] : memref<2x128xf32, #tpu.memory_space<vmem>>, vector<1x128xf32>
    %cst = arith.constant dense<0.000000e+00> : vector<64xf32>
    %5 = vector.multi_reduction <add>, %1, %cst [1] : vector<64x128xf32> to vector<64xf32>
    %6 = vector.shape_cast %5 : vector<64xf32> to vector<64x1xf32>
    %cst_9 = arith.constant 1.280000e+02 : f32
    %7 = vector.broadcast %cst_9 : f32 to vector<64x1xf32>
    %8 = arith.divf %6, %7 : vector<64x1xf32>
    %9 = vector.broadcast %8 : vector<64x1xf32> to vector<64x128xf32>
    %10 = arith.subf %1, %9 : vector<64x128xf32>
    %11 = arith.mulf %10, %10 : vector<64x128xf32>
    %cst_10 = arith.constant dense<0.000000e+00> : vector<64xf32>
    %12 = vector.multi_reduction <add>, %11, %cst_10 [1] : vector<64x128xf32> to vector<64xf32>
    %13 = vector.shape_cast %12 : vector<64xf32> to vector<64x1xf32>
    %cst_11 = arith.constant 1.280000e+02 : f32
    %14 = vector.broadcast %cst_11 : f32 to vector<64x1xf32>
    %15 = arith.divf %13, %14 : vector<64x1xf32>
    %16 = vector.broadcast %8 : vector<64x1xf32> to vector<64x128xf32>
    %17 = arith.subf %1, %16 : vector<64x128xf32>
    %cst_12 = arith.constant 9.99999974E-6 : f32
    %18 = vector.broadcast %cst_12 : f32 to vector<64x1xf32>
    %19 = arith.addf %15, %18 : vector<64x1xf32>
    %20 = math.rsqrt %19 : vector<64x1xf32>
    %21 = vector.broadcast %20 : vector<64x1xf32> to vector<64x128xf32>
    %22 = arith.mulf %17, %21 : vector<64x128xf32>
    %23 = vector.broadcast %3 : vector<1x128xf32> to vector<64x128xf32>
    %24 = arith.mulf %22, %23 : vector<64x128xf32>
    %25 = vector.broadcast %4 : vector<1x128xf32> to vector<64x128xf32>
    %26 = arith.addf %24, %25 : vector<64x128xf32>
    %27 = arith.truncf %26 : vector<64x128xf32> to vector<64x128xbf16>
    %c0_13 = arith.constant 0 : index
    %c0_14 = arith.constant 0 : index
    %28 = vector.load %arg4[%c0_13, %c0_14] : memref<128x384xbf16, #tpu.memory_space<vmem>>, vector<128x384xbf16>
    %cst_15 = arith.constant dense<0.000000e+00> : vector<64x384xf32>
    %29 = tpu.matmul %27, %28, %cst_15 {dimension_numbers = #tpu.dot_dimension_numbers<[1], [0], [0], [1], [0, 0, 1, 1], [], []>} : vector<64x128xbf16>, vector<128x384xbf16>, vector<64x384xf32> -> vector<64x384xf32>
    %c0_16 = arith.constant 0 : index
    %c0_17 = arith.constant 0 : index
    %30 = vector.load %arg5[%c0_16, %c0_17] : memref<1x384xf32, #tpu.memory_space<vmem>>, vector<1x384xf32>
    %31 = vector.broadcast %30 : vector<1x384xf32> to vector<64x384xf32>
    %32 = arith.addf %29, %31 : vector<64x384xf32>
    %33 = vector.extract_strided_slice %32 {offsets = [0, 0], sizes = [64, 128], strides = [1, 1]} : vector<64x384xf32> to vector<64x128xf32>
    %34 = vector.extract_strided_slice %33 {offsets = [0, 0], sizes = [64, 32], strides = [1, 1]} : vector<64x128xf32> to vector<64x32xf32>
    %35 = vector.extract_strided_slice %33 {offsets = [0, 32], sizes = [64, 32], strides = [1, 1]} : vector<64x128xf32> to vector<64x32xf32>
    %36 = vector.extract_strided_slice %33 {offsets = [0, 64], sizes = [64, 32], strides = [1, 1]} : vector<64x128xf32> to vector<64x32xf32>
    %37 = vector.extract_strided_slice %33 {offsets = [0, 96], sizes = [64, 32], strides = [1, 1]} : vector<64x128xf32> to vector<64x32xf32>
    %38 = vector.shape_cast %34 : vector<64x32xf32> to vector<1x64x32xf32>
    %39 = vector.shape_cast %35 : vector<64x32xf32> to vector<1x64x32xf32>
    %40 = vector.shape_cast %36 : vector<64x32xf32> to vector<1x64x32xf32>
    %41 = vector.shape_cast %37 : vector<64x32xf32> to vector<1x64x32xf32>
    %42 = tpu.concatenate %38, %39, %40, %41 in 0 : vector<1x64x32xf32>, vector<1x64x32xf32>, vector<1x64x32xf32>, vector<1x64x32xf32> -> vector<4x64x32xf32>
    %43 = vector.shape_cast %42 : vector<4x64x32xf32> to vector<16x16x32xf32>
    %44 = arith.truncf %43 : vector<16x16x32xf32> to vector<16x16x32xbf16>
    %45 = vector.extract_strided_slice %32 {offsets = [0, 128], sizes = [64, 128], strides = [1, 1]} : vector<64x384xf32> to vector<64x128xf32>
    %46 = vector.extract_strided_slice %45 {offsets = [0, 0], sizes = [64, 32], strides = [1, 1]} : vector<64x128xf32> to vector<64x32xf32>
    %47 = vector.extract_strided_slice %45 {offsets = [0, 32], sizes = [64, 32], strides = [1, 1]} : vector<64x128xf32> to vector<64x32xf32>
    %48 = vector.extract_strided_slice %45 {offsets = [0, 64], sizes = [64, 32], strides = [1, 1]} : vector<64x128xf32> to vector<64x32xf32>
    %49 = vector.extract_strided_slice %45 {offsets = [0, 96], sizes = [64, 32], strides = [1, 1]} : vector<64x128xf32> to vector<64x32xf32>
    %50 = vector.shape_cast %46 : vector<64x32xf32> to vector<1x64x32xf32>
    %51 = vector.shape_cast %47 : vector<64x32xf32> to vector<1x64x32xf32>
    %52 = vector.shape_cast %48 : vector<64x32xf32> to vector<1x64x32xf32>
    %53 = vector.shape_cast %49 : vector<64x32xf32> to vector<1x64x32xf32>
    %54 = tpu.concatenate %50, %51, %52, %53 in 0 : vector<1x64x32xf32>, vector<1x64x32xf32>, vector<1x64x32xf32>, vector<1x64x32xf32> -> vector<4x64x32xf32>
    %55 = vector.shape_cast %54 : vector<4x64x32xf32> to vector<16x16x32xf32>
    %56 = arith.truncf %55 : vector<16x16x32xf32> to vector<16x16x32xbf16>
    %57 = vector.extract_strided_slice %32 {offsets = [0, 256], sizes = [64, 128], strides = [1, 1]} : vector<64x384xf32> to vector<64x128xf32>
    %58 = vector.extract_strided_slice %57 {offsets = [0, 0], sizes = [64, 32], strides = [1, 1]} : vector<64x128xf32> to vector<64x32xf32>
    %59 = vector.extract_strided_slice %57 {offsets = [0, 32], sizes = [64, 32], strides = [1, 1]} : vector<64x128xf32> to vector<64x32xf32>
    %60 = vector.extract_strided_slice %57 {offsets = [0, 64], sizes = [64, 32], strides = [1, 1]} : vector<64x128xf32> to vector<64x32xf32>
    %61 = vector.extract_strided_slice %57 {offsets = [0, 96], sizes = [64, 32], strides = [1, 1]} : vector<64x128xf32> to vector<64x32xf32>
    %62 = vector.shape_cast %58 : vector<64x32xf32> to vector<1x64x32xf32>
    %63 = vector.shape_cast %59 : vector<64x32xf32> to vector<1x64x32xf32>
    %64 = vector.shape_cast %60 : vector<64x32xf32> to vector<1x64x32xf32>
    %65 = vector.shape_cast %61 : vector<64x32xf32> to vector<1x64x32xf32>
    %66 = tpu.concatenate %62, %63, %64, %65 in 0 : vector<1x64x32xf32>, vector<1x64x32xf32>, vector<1x64x32xf32>, vector<1x64x32xf32> -> vector<4x64x32xf32>
    %67 = vector.shape_cast %66 : vector<4x64x32xf32> to vector<16x16x32xf32>
    %68 = arith.truncf %67 : vector<16x16x32xf32> to vector<16x16x32xbf16>
    "tpu.trace_start"() <{level = 10 : i32, message = "gqd,gkd->gqk"}> : () -> ()
    %cst_18 = arith.constant dense<0.000000e+00> : vector<16x16x16xf32>
    %69 = tpu.matmul %44, %56, %cst_18 {dimension_numbers = #tpu.dot_dimension_numbers<[2], [2], [1], [1], [0, 0, 0, 1, 1, 1], [0], [0]>} : vector<16x16x32xbf16>, vector<16x16x32xbf16>, vector<16x16x16xf32> -> vector<16x16x16xf32>
    "tpu.trace_stop"() : () -> ()
    %70 = vector.shape_cast %69 : vector<16x16x16xf32> to vector<4x4x16x16xf32>
    %c0_19 = arith.constant 0 : index
    %c0_20 = arith.constant 0 : index
    %c0_21 = arith.constant 0 : index
    %71 = vector.load %arg3[%c0_19, %c0_20, %c0_21] : memref<4x16x16xf32, #tpu.memory_space<vmem>>, vector<4x16x16xf32>
    %72 = vector.shape_cast %71 : vector<4x16x16xf32> to vector<4x1x16x16xf32>
    %73 = vector.broadcast %72 : vector<4x1x16x16xf32> to vector<4x4x16x16xf32>
    %74 = arith.addf %70, %73 : vector<4x4x16x16xf32>
    %75 = vector.shape_cast %2 : vector<4x1x16xf32> to vector<1x4x1x16xf32>
    %76 = vector.broadcast %75 : vector<1x4x1x16xf32> to vector<4x4x16x16xf32>
    %77 = arith.addf %74, %76 : vector<4x4x16x16xf32>
    %cst_22 = arith.constant dense<0xFF800000> : vector<4x4x16xf32>
    %78 = vector.multi_reduction <maximumf>, %77, %cst_22 [3] : vector<4x4x16x16xf32> to vector<4x4x16xf32>
    %79 = vector.shape_cast %78 : vector<4x4x16xf32> to vector<4x4x16x1xf32>
    %80 = vector.broadcast %79 : vector<4x4x16x1xf32> to vector<4x4x16x16xf32>
    %81 = arith.subf %77, %80 : vector<4x4x16x16xf32>
    %82 = math.exp %81 : vector<4x4x16x16xf32>
    %cst_23 = arith.constant dense<0.000000e+00> : vector<4x4x16xf32>
    %83 = vector.multi_reduction <add>, %82, %cst_23 [3] : vector<4x4x16x16xf32> to vector<4x4x16xf32>
    %84 = vector.shape_cast %83 : vector<4x4x16xf32> to vector<4x4x16x1xf32>
    %85 = tpu.reciprocal %84 {approx = true} : vector<4x4x16x1xf32> -> vector<4x4x16x1xf32>
    %86 = vector.broadcast %85 : vector<4x4x16x1xf32> to vector<4x4x16x16xf32>
    %87 = arith.mulf %82, %86 : vector<4x4x16x16xf32>
    %88 = vector.shape_cast %87 : vector<4x4x16x16xf32> to vector<16x16x16xf32>
    %89 = arith.truncf %88 : vector<16x16x16xf32> to vector<16x16x16xbf16>
    "tpu.trace_start"() <{level = 10 : i32, message = "gqk,gkd->gqd"}> : () -> ()
    %cst_24 = arith.constant dense<0.000000e+00> : vector<16x16x32xf32>
    %90 = tpu.matmul %89, %68, %cst_24 {dimension_numbers = #tpu.dot_dimension_numbers<[2], [1], [1], [2], [0, 0, 0, 1, 1, 2], [0], [0]>} : vector<16x16x16xbf16>, vector<16x16x32xbf16>, vector<16x16x32xf32> -> vector<16x16x32xf32>
    "tpu.trace_stop"() : () -> ()
    %91 = vector.shape_cast %90 : vector<16x16x32xf32> to vector<4x64x32xf32>
    %92 = vector.extract_strided_slice %91 {offsets = [0, 0, 0], sizes = [1, 64, 32], strides = [1, 1, 1]} : vector<4x64x32xf32> to vector<1x64x32xf32>
    %93 = vector.shape_cast %92 : vector<1x64x32xf32> to vector<64x32xf32>
    %94 = vector.extract_strided_slice %91 {offsets = [1, 0, 0], sizes = [1, 64, 32], strides = [1, 1, 1]} : vector<4x64x32xf32> to vector<1x64x32xf32>
    %95 = vector.shape_cast %94 : vector<1x64x32xf32> to vector<64x32xf32>
    %96 = vector.extract_strided_slice %91 {offsets = [2, 0, 0], sizes = [1, 64, 32], strides = [1, 1, 1]} : vector<4x64x32xf32> to vector<1x64x32xf32>
    %97 = vector.shape_cast %96 : vector<1x64x32xf32> to vector<64x32xf32>
    %98 = vector.extract_strided_slice %91 {offsets = [3, 0, 0], sizes = [1, 64, 32], strides = [1, 1, 1]} : vector<4x64x32xf32> to vector<1x64x32xf32>
    %99 = vector.shape_cast %98 : vector<1x64x32xf32> to vector<64x32xf32>
    %100 = tpu.concatenate %93, %95, %97, %99 in 1 : vector<64x32xf32>, vector<64x32xf32>, vector<64x32xf32>, vector<64x32xf32> -> vector<64x128xf32>
    %101 = arith.truncf %100 : vector<64x128xf32> to vector<64x128xbf16>
    %c0_25 = arith.constant 0 : index
    %c0_26 = arith.constant 0 : index
    %102 = vector.load %arg6[%c0_25, %c0_26] : memref<128x128xbf16, #tpu.memory_space<vmem>>, vector<128x128xbf16>
    %cst_27 = arith.constant dense<0.000000e+00> : vector<64x128xf32>
    %103 = tpu.matmul %101, %102, %cst_27 {dimension_numbers = #tpu.dot_dimension_numbers<[1], [0], [0], [1], [0, 0, 1, 1], [], []>} : vector<64x128xbf16>, vector<128x128xbf16>, vector<64x128xf32> -> vector<64x128xf32>
    %104 = arith.addf %1, %103 : vector<64x128xf32>
    %c0_28 = arith.constant 0 : index
    %c0_29 = arith.constant 0 : index
    %105 = vector.load %arg7[%c0_28, %c0_29] : memref<1x128xf32, #tpu.memory_space<vmem>>, vector<1x128xf32>
    %106 = vector.broadcast %105 : vector<1x128xf32> to vector<64x128xf32>
    %107 = arith.addf %104, %106 : vector<64x128xf32>
    %c1 = arith.constant 1 : index
    %c0_30 = arith.constant 0 : index
    %108 = vector.load %arg12[%c1, %c0_30] : memref<2x128xf32, #tpu.memory_space<vmem>>, vector<1x128xf32>
    %c1_31 = arith.constant 1 : index
    %c0_32 = arith.constant 0 : index
    %109 = vector.load %arg13[%c1_31, %c0_32] : memref<2x128xf32, #tpu.memory_space<vmem>>, vector<1x128xf32>
    %cst_33 = arith.constant dense<0.000000e+00> : vector<64xf32>
    %110 = vector.multi_reduction <add>, %107, %cst_33 [1] : vector<64x128xf32> to vector<64xf32>
    %111 = vector.shape_cast %110 : vector<64xf32> to vector<64x1xf32>
    %cst_34 = arith.constant 1.280000e+02 : f32
    %112 = vector.broadcast %cst_34 : f32 to vector<64x1xf32>
    %113 = arith.divf %111, %112 : vector<64x1xf32>
    %114 = vector.broadcast %113 : vector<64x1xf32> to vector<64x128xf32>
    %115 = arith.subf %107, %114 : vector<64x128xf32>
    %116 = arith.mulf %115, %115 : vector<64x128xf32>
    %cst_35 = arith.constant dense<0.000000e+00> : vector<64xf32>
    %117 = vector.multi_reduction <add>, %116, %cst_35 [1] : vector<64x128xf32> to vector<64xf32>
    %118 = vector.shape_cast %117 : vector<64xf32> to vector<64x1xf32>
    %cst_36 = arith.constant 1.280000e+02 : f32
    %119 = vector.broadcast %cst_36 : f32 to vector<64x1xf32>
    %120 = arith.divf %118, %119 : vector<64x1xf32>
    %121 = vector.broadcast %113 : vector<64x1xf32> to vector<64x128xf32>
    %122 = arith.subf %107, %121 : vector<64x128xf32>
    %cst_37 = arith.constant 9.99999974E-6 : f32
    %123 = vector.broadcast %cst_37 : f32 to vector<64x1xf32>
    %124 = arith.addf %120, %123 : vector<64x1xf32>
    %125 = math.rsqrt %124 : vector<64x1xf32>
    %126 = vector.broadcast %125 : vector<64x1xf32> to vector<64x128xf32>
    %127 = arith.mulf %122, %126 : vector<64x128xf32>
    %128 = vector.broadcast %108 : vector<1x128xf32> to vector<64x128xf32>
    %129 = arith.mulf %127, %128 : vector<64x128xf32>
    %130 = vector.broadcast %109 : vector<1x128xf32> to vector<64x128xf32>
    %131 = arith.addf %129, %130 : vector<64x128xf32>
    %132 = arith.truncf %131 : vector<64x128xf32> to vector<64x128xbf16>
    %c0_38 = arith.constant 0 : index
    %c0_39 = arith.constant 0 : index
    %133 = vector.load %arg8[%c0_38, %c0_39] : memref<128x256xbf16, #tpu.memory_space<vmem>>, vector<128x256xbf16>
    %cst_40 = arith.constant dense<0.000000e+00> : vector<64x256xf32>
    %134 = tpu.matmul %132, %133, %cst_40 {dimension_numbers = #tpu.dot_dimension_numbers<[1], [0], [0], [1], [0, 0, 1, 1], [], []>} : vector<64x128xbf16>, vector<128x256xbf16>, vector<64x256xf32> -> vector<64x256xf32>
    %c0_41 = arith.constant 0 : index
    %c0_42 = arith.constant 0 : index
    %135 = vector.load %arg9[%c0_41, %c0_42] : memref<1x256xf32, #tpu.memory_space<vmem>>, vector<1x256xf32>
    %136 = vector.broadcast %135 : vector<1x256xf32> to vector<64x256xf32>
    %137 = arith.addf %134, %136 : vector<64x256xf32>
    %138 = arith.mulf %137, %137 : vector<64x256xf32>
    %139 = arith.mulf %137, %138 : vector<64x256xf32>
    %cst_43 = arith.constant 4.471500e-02 : f32
    %140 = vector.broadcast %cst_43 : f32 to vector<64x256xf32>
    %141 = arith.mulf %140, %139 : vector<64x256xf32>
    %142 = arith.addf %137, %141 : vector<64x256xf32>
    %cst_44 = arith.constant 0.797884583 : f32
    %143 = vector.broadcast %cst_44 : f32 to vector<64x256xf32>
    %144 = arith.mulf %143, %142 : vector<64x256xf32>
    %145 = math.tanh %144 : vector<64x256xf32>
    %cst_45 = arith.constant 1.000000e+00 : f32
    %146 = vector.broadcast %cst_45 : f32 to vector<64x256xf32>
    %147 = arith.addf %146, %145 : vector<64x256xf32>
    %cst_46 = arith.constant 5.000000e-01 : f32
    %148 = vector.broadcast %cst_46 : f32 to vector<64x256xf32>
    %149 = arith.mulf %148, %147 : vector<64x256xf32>
    %150 = arith.mulf %137, %149 : vector<64x256xf32>
    %151 = arith.truncf %150 : vector<64x256xf32> to vector<64x256xbf16>
    %c0_47 = arith.constant 0 : index
    %c0_48 = arith.constant 0 : index
    %152 = vector.load %arg10[%c0_47, %c0_48] : memref<256x128xbf16, #tpu.memory_space<vmem>>, vector<256x128xbf16>
    %cst_49 = arith.constant dense<0.000000e+00> : vector<64x128xf32>
    %153 = tpu.matmul %151, %152, %cst_49 {dimension_numbers = #tpu.dot_dimension_numbers<[1], [0], [0], [1], [0, 0, 1, 1], [], []>} : vector<64x256xbf16>, vector<256x128xbf16>, vector<64x128xf32> -> vector<64x128xf32>
    %c0_50 = arith.constant 0 : index
    %c0_51 = arith.constant 0 : index
    %154 = vector.load %arg11[%c0_50, %c0_51] : memref<1x128xf32, #tpu.memory_space<vmem>>, vector<1x128xf32>
    %155 = vector.broadcast %154 : vector<1x128xf32> to vector<64x128xf32>
    %156 = arith.addf %153, %155 : vector<64x128xf32>
    %157 = arith.addf %107, %156 : vector<64x128xf32>
    %158 = vector.shape_cast %157 : vector<64x128xf32> to vector<4x16x128xf32>
    %c0_52 = arith.constant 0 : index
    %c0_53 = arith.constant 0 : index
    %c0_54 = arith.constant 0 : index
    %159 = vector.load %arg14[%c0_52, %c0_53, %c0_54] : memref<4x16x128xf32, #tpu.memory_space<vmem>>, vector<4x16x128xf32>
    tpu.vector_store %arg14[%c0_52, %c0_53, %c0_54], %158 {strides = array<i32>} : memref<4x16x128xf32, #tpu.memory_space<vmem>>, vector<4x16x128xf32>,
    return
  }
  func.func @transform_0(%arg0: i32) -> (i32, i32, i32) {
    %c0_i32 = arith.constant 0 : i32
    %c0_i32_0 = arith.constant 0 : i32
    %c0_i32_1 = arith.constant 0 : i32
    return %arg0, %c0_i32, %c0_i32_0 : i32, i32, i32
  }
  func.func @transform_1(%arg0: i32) -> (i32, i32, i32) {
    %c0_i32 = arith.constant 0 : i32
    %c0_i32_0 = arith.constant 0 : i32
    %c0_i32_1 = arith.constant 0 : i32
    return %arg0, %c0_i32, %c0_i32_0 : i32, i32, i32
  }
  func.func @transform_2(%arg0: i32) -> (i32, i32, i32) {
    %c0_i32 = arith.constant 0 : i32
    %c0_i32_0 = arith.constant 0 : i32
    %c0_i32_1 = arith.constant 0 : i32
    %c0_i32_2 = arith.constant 0 : i32
    return %c0_i32, %c0_i32_0, %c0_i32_1 : i32, i32, i32
  }
  func.func @transform_3(%arg0: i32) -> (i32, i32) {
    %c0_i32 = arith.constant 0 : i32
    %c0_i32_0 = arith.constant 0 : i32
    %c0_i32_1 = arith.constant 0 : i32
    return %c0_i32, %c0_i32_0 : i32, i32
  }
  func.func @transform_4(%arg0: i32) -> (i32, i32) {
    %c0_i32 = arith.constant 0 : i32
    %c0_i32_0 = arith.constant 0 : i32
    %c0_i32_1 = arith.constant 0 : i32
    return %c0_i32, %c0_i32_0 : i32, i32
  }
  func.func @transform_5(%arg0: i32) -> (i32, i32) {
    %c0_i32 = arith.constant 0 : i32
    %c0_i32_0 = arith.constant 0 : i32
    %c0_i32_1 = arith.constant 0 : i32
    return %c0_i32, %c0_i32_0 : i32, i32
  }
  func.func @transform_6(%arg0: i32) -> (i32, i32) {
    %c0_i32 = arith.constant 0 : i32
    %c0_i32_0 = arith.constant 0 : i32
    %c0_i32_1 = arith.constant 0 : i32
    return %c0_i32, %c0_i32_0 : i32, i32
  }
  func.func @transform_7(%arg0: i32) -> (i32, i32) {
    %c0_i32 = arith.constant 0 : i32
    %c0_i32_0 = arith.constant 0 : i32
    %c0_i32_1 = arith.constant 0 : i32
    return %c0_i32, %c0_i32_0 : i32, i32
  }
  func.func @transform_8(%arg0: i32) -> (i32, i32) {
    %c0_i32 = arith.constant 0 : i32
    %c0_i32_0 = arith.constant 0 : i32
    %c0_i32_1 = arith.constant 0 : i32
    return %c0_i32, %c0_i32_0 : i32, i32
  }
  func.func @transform_9(%arg0: i32) -> (i32, i32) {
    %c0_i32 = arith.constant 0 : i32
    %c0_i32_0 = arith.constant 0 : i32
    %c0_i32_1 = arith.constant 0 : i32
    return %c0_i32, %c0_i32_0 : i32, i32
  }
  func.func @transform_10(%arg0: i32) -> (i32, i32) {
    %c0_i32 = arith.constant 0 : i32
    %c0_i32_0 = arith.constant 0 : i32
    %c0_i32_1 = arith.constant 0 : i32
    return %c0_i32, %c0_i32_0 : i32, i32
  }
  func.func @transform_11(%arg0: i32) -> (i32, i32) {
    %c0_i32 = arith.constant 0 : i32
    %c0_i32_0 = arith.constant 0 : i32
    %c0_i32_1 = arith.constant 0 : i32
    return %c0_i32, %c0_i32_0 : i32, i32
  }
  func.func @transform_12(%arg0: i32) -> (i32, i32) {
    %c0_i32 = arith.constant 0 : i32
    %c0_i32_0 = arith.constant 0 : i32
    %c0_i32_1 = arith.constant 0 : i32
    return %c0_i32, %c0_i32_0 : i32, i32
  }
  func.func @transform_13(%arg0: i32) -> (i32, i32, i32) {
    %c0_i32 = arith.constant 0 : i32
    %c0_i32_0 = arith.constant 0 : i32
    %c0_i32_1 = arith.constant 0 : i32
    return %arg0, %c0_i32, %c0_i32_0 : i32, i32, i32
  }
}

</mosaic_0001>

<llo_original>
// kernel: tpu_custom_call.1
$region0: #{tpu_custom_call.1}
  #allocation0 [shape = 'u32[]', space=smem, size = 0x4, offset = 0x4, fixed_abs, tag = 'smem constant byte address 0x4 - core index']
  #allocation1 [shape = 'u32[144,128]{1,0:T(1,128)}', space=vmem, size = 0x12000, scoped, tag = 'internal scratch']
  %s0 = inlined_call_operand.hbm [shape: f32[4,16,128], index: 0, kind: input, shape index: {}]
  %s1 = inlined_call_operand.hbm [shape: f32[4,1,16], index: 1, kind: input, shape index: {}]
  %s2 = inlined_call_operand.hbm [shape: f32[4,16,16], index: 2, kind: input, shape index: {}]
  %s3 = inlined_call_operand.hbm [shape: bf16[128,384], index: 3, kind: input, shape index: {}]
  %s4 = inlined_call_operand.vmem [shape: f32[1,384], index: 4, kind: input, shape index: {}]
  %s5 = inlined_call_operand.hbm [shape: bf16[128,128], index: 5, kind: input, shape index: {}]
  %s6 = inlined_call_operand.vmem [shape: f32[1,128], index: 6, kind: input, shape index: {}]
  %s7 = inlined_call_operand.hbm [shape: bf16[128,256], index: 7, kind: input, shape index: {}]
  %s8 = inlined_call_operand.vmem [shape: f32[1,256], index: 8, kind: input, shape index: {}]
  %s9 = inlined_call_operand.hbm [shape: bf16[256,128], index: 9, kind: input, shape index: {}]
  %s10 = inlined_call_operand.vmem [shape: f32[1,128], index: 10, kind: input, shape index: {}]
  %s11 = inlined_call_operand.vmem [shape: f32[2,128], index: 11, kind: input, shape index: {}]
  %s12 = inlined_call_operand.vmem [shape: f32[2,128], index: 12, kind: input, shape index: {}]
  %s13 = inlined_call_operand.hbm [shape: f32[4,16,128], index: 13, kind: output, shape index: {}]
  %s14 = sld [smem:[#allocation0]]
  $region90: #{tpu_custom_call.1} parent=0
    _
  %s16 = ssub.s32 1, %s14
  %s17 = scalar_select 0, %s16, %s14
  $region1: #{tpu_custom_call.1} parent=0
    #allocation2 [shape = 'u8[32768]{0}', space=vmem, size = 0x8000, scoped, tag = 'input window, operand 0, single buffered']
    #allocation3 [shape = 's32[1]{0}', space=sflag, size = 0x4, scoped, tag = 'scoped memory for tpu_custom_call.1']
    #allocation4 [shape = 's32[1]{0}', space=sflag, size = 0x4, scoped, tag = 'scoped memory for tpu_custom_call.1']
    #allocation5 [shape = 'u8[2048]{0}', space=vmem, size = 0x800, scoped, tag = 'input window, operand 1, single buffered']
    #allocation6 [shape = 's32[1]{0}', space=sflag, size = 0x4, scoped, tag = 'scoped memory for tpu_custom_call.1']
    #allocation7 [shape = 'u8[32768]{0}', space=vmem, size = 0x8000, scoped, tag = 'input window, operand 2, single buffered']
    #allocation8 [shape = 'u8[98304]{0}', space=vmem, size = 0x18000, scoped, tag = 'input window, operand 3, single buffered']
    #allocation9 [shape = 's32[1]{0}', space=sflag, size = 0x4, scoped, tag = 'scoped memory for tpu_custom_call.1']
    #allocation10 [shape = 'u8[32768]{0}', space=vmem, size = 0x8000, scoped, tag = 'input window, operand 5, single buffered']
    #allocation11 [shape = 'u8[65536]{0}', space=vmem, size = 0x10000, scoped, tag = 'input window, operand 7, single buffered']
    #allocation12 [shape = 's32[1]{0}', space=sflag, size = 0x4, scoped, tag = 'scoped memory for tpu_custom_call.1']
    #allocation13 [shape = 'u8[65536]{0}', space=vmem, size = 0x10000, scoped, tag = 'input window, operand 9, single buffered']
    #allocation14 [shape = 'u8[32768]{0}', space=vmem, size = 0x8000, scoped, tag = 'output window, operand 0, single buffered']
    %18 = vsyncpa [#allocation3], 0
    %19 = vsyncpa [#allocation6], 0
    %20 = vsyncpa [#allocation9], 0
    %21 = vsyncpa [#allocation12], 0
    %22 = vsyncpa [#allocation4], 0
    // Predicated region
    $region2: #{tpu_custom_call.1} parent=1 // pred_check
      _
    $region3: #{tpu_custom_call.1} parent=1 // pred_check_branch
      %24 = sbr.rel (0) target = $region5
    $region4: #{tpu_custom_call.1} parent=1 // pred_region
      %s26 = ssub.s32 1024, 1024
      %27 = vsyncadd [#allocation3], %s26
      %s28 = sshll.u32 [#allocation2], 4
      %s29 = int_to_ptr.vmem [resolvable:$true] %s28
      %34 = dma.hbm_to_vmem [thread:$0]  %s0, 1024, %s29, [#allocation3], 128, 128, 8
    $region5: #{tpu_custom_call.1} parent=1 // pred_fallthru
      _
    // Predicated region
    $region6: #{tpu_custom_call.1} parent=1 // pred_check
      _
    $region7: #{tpu_custom_call.1} parent=1 // pred_check_branch
      %36 = sbr.rel (0) target = $region9
    $region8: #{tpu_custom_call.1} parent=1 // pred_region
      %s38 = ssub.s32 64, 64
      %39 = vsyncadd [#allocation6], %s38
      %s40 = sshll.u32 [#allocation5], 4
      %s41 = int_to_ptr.vmem [resolvable:$true] %s40
      %46 = dma.hbm_to_vmem [thread:$0]  %s1, 64, %s41, [#allocation6], 16, 16, 1
    $region9: #{tpu_custom_call.1} parent=1 // pred_fallthru
      _
    // Predicated region
    $region10: #{tpu_custom_call.1} parent=1 // pred_check
      _
    $region11: #{tpu_custom_call.1} parent=1 // pred_check_branch
      %48 = sbr.rel (0) target = $region13
    $region12: #{tpu_custom_call.1} parent=1 // pred_region
      %s50 = ssub.s32 1024, 1024
      %51 = vsyncadd [#allocation6], %s50
      %s52 = sshll.u32 [#allocation7], 4
      %s53 = int_to_ptr.vmem [resolvable:$true] %s52
      %58 = dma.hbm_to_vmem [thread:$0]  %s2, 1024, %s53, [#allocation6], 128, 128, 8
    $region13: #{tpu_custom_call.1} parent=1 // pred_fallthru
      _
    // Predicated region
    $region14: #{tpu_custom_call.1} parent=1 // pred_check
      _
    $region15: #{tpu_custom_call.1} parent=1 // pred_check_branch
      %60 = sbr.rel (0) target = $region17
    $region16: #{tpu_custom_call.1} parent=1 // pred_region
      %s62 = ssub.s32 3072, 3072
      %63 = vsyncadd [#allocation9], %s62
      %s64 = sshll.u32 [#allocation8], 4
      %s65 = int_to_ptr.vmem [resolvable:$true] %s64
      %70 = dma.hbm_to_vmem [thread:$0]  %s3, 3072, %s65, [#allocation9], 192, 192, 12
    $region17: #{tpu_custom_call.1} parent=1 // pred_fallthru
      _
    // Predicated region
    $region18: #{tpu_custom_call.1} parent=1 // pred_check
      _
    $region19: #{tpu_custom_call.1} parent=1 // pred_check_branch
      %72 = sbr.rel (0) target = $region21
    $region20: #{tpu_custom_call.1} parent=1 // pred_region
      _
    $region21: #{tpu_custom_call.1} parent=1 // pred_fallthru
      _
    // Predicated region
    $region22: #{tpu_custom_call.1} parent=1 // pred_check
      _
    $region23: #{tpu_custom_call.1} parent=1 // pred_check_branch
      %74 = sbr.rel (0) target = $region25
    $region24: #{tpu_custom_call.1} parent=1 // pred_region
      %s76 = ssub.s32 1024, 1024
      %77 = vsyncadd [#allocation9], %s76
      %s78 = sshll.u32 [#allocation10], 4
      %s79 = int_to_ptr.vmem [resolvable:$true] %s78
      %84 = dma.hbm_to_vmem [thread:$0]  %s5, 1024, %s79, [#allocation9], 64, 64, 4
    $region25: #{tpu_custom_call.1} parent=1 // pred_fallthru
      _
    // Predicated region
    $region26: #{tpu_custom_call.1} parent=1 // pred_check
      _
    $region27: #{tpu_custom_call.1} parent=1 // pred_check_branch
      %86 = sbr.rel (0) target = $region29
    $region28: #{tpu_custom_call.1} parent=1 // pred_region
      _
    $region29: #{tpu_custom_call.1} parent=1 // pred_fallthru
      _
    // Predicated region
    $region30: #{tpu_custom_call.1} parent=1 // pred_check
      _
    $region31: #{tpu_custom_call.1} parent=1 // pred_check_branch
      %88 = sbr.rel (0) target = $region33
    $region32: #{tpu_custom_call.1} parent=1 // pred_region
      %s90 = ssub.s32 2048, 2048
      %91 = vsyncadd [#allocation12], %s90
      %s92 = sshll.u32 [#allocation11], 4
      %s93 = int_to_ptr.vmem [resolvable:$true] %s92
      %98 = dma.hbm_to_vmem [thread:$0]  %s7, 2048, %s93, [#allocation12], 128, 128, 8
    $region33: #{tpu_custom_call.1} parent=1 // pred_fallthru
      _
    // Predicated region
    $region34: #{tpu_custom_call.1} parent=1 // pred_check
      _
    $region35: #{tpu_custom_call.1} parent=1 // pred_check_branch
      %100 = sbr.rel (0) target = $region37
    $region36: #{tpu_custom_call.1} parent=1 // pred_region
      _
    $region37: #{tpu_custom_call.1} parent=1 // pred_fallthru
      _
    // Predicated region
    $region38: #{tpu_custom_call.1} parent=1 // pred_check
      _
    $region39: #{tpu_custom_call.1} parent=1 // pred_check_branch
      %102 = sbr.rel (0) target = $region41
    $region40: #{tpu_custom_call.1} parent=1 // pred_region
      %s104 = ssub.s32 2048, 2048
      %105 = vsyncadd [#allocation12], %s104
      %s106 = sshll.u32 [#allocation13], 4
      %s107 = int_to_ptr.vmem [resolvable:$true] %s106
      %112 = dma.hbm_to_vmem [thread:$0]  %s9, 2048, %s107, [#allocation12], 64, 64, 4
    $region41: #{tpu_custom_call.1} parent=1 // pred_fallthru
      _
    // Predicated region
    $region42: #{tpu_custom_call.1} parent=1 // pred_check
      _
    $region43: #{tpu_custom_call.1} parent=1 // pred_check_branch
      %114 = sbr.rel (0) target = $region45
    $region44: #{tpu_custom_call.1} parent=1 // pred_region
      _
    $region45: #{tpu_custom_call.1} parent=1 // pred_fallthru
      _
    // Predicated region
    $region46: #{tpu_custom_call.1} parent=1 // pred_check
      _
    $region47: #{tpu_custom_call.1} parent=1 // pred_check_branch
      %116 = sbr.rel (0) target = $region49
    $region48: #{tpu_custom_call.1} parent=1 // pred_region
      _
    $region49: #{tpu_custom_call.1} parent=1 // pred_fallthru
      _
    // Predicated region
    $region50: #{tpu_custom_call.1} parent=1 // pred_check
      _
    $region51: #{tpu_custom_call.1} parent=1 // pred_check_branch
      %118 = sbr.rel (0) target = $region53
    $region52: #{tpu_custom_call.1} parent=1 // pred_region
      _
    $region53: #{tpu_custom_call.1} parent=1 // pred_fallthru
      _
    // Predicated region
    $region54: #{tpu_custom_call.1} parent=1 // pred_check
      _
    $region55: #{tpu_custom_call.1} parent=1 // pred_check_branch
      %120 = sbr.rel (0) target = $region57
    $region56: #{tpu_custom_call.1} parent=1 // pred_region
      %121 = dma.done [#allocation3], 1024
    $region57: #{tpu_custom_call.1} parent=1 // pred_fallthru
      _
    // Predicated region
    $region58: #{tpu_custom_call.1} parent=1 // pred_check
      _
    $region59: #{tpu_custom_call.1} parent=1 // pred_check_branch
      %123 = sbr.rel (0) target = $region61
    $region60: #{tpu_custom_call.1} parent=1 // pred_region
      %124 = dma.done [#allocation6], 64
    $region61: #{tpu_custom_call.1} parent=1 // pred_fallthru
      _
    // Predicated region
    $region62: #{tpu_custom_call.1} parent=1 // pred_check
      _
    $region63: #{tpu_custom_call.1} parent=1 // pred_check_branch
      %126 = sbr.rel (0) target = $region65
    $region64: #{tpu_custom_call.1} parent=1 // pred_region
      %127 = dma.done [#allocation6], 1024
    $region65: #{tpu_custom_call.1} parent=1 // pred_fallthru
      _
    // Predicated region
    $region66: #{tpu_custom_call.1} parent=1 // pred_check
      _
    $region67: #{tpu_custom_call.1} parent=1 // pred_check_branch
      %129 = sbr.rel (0) target = $region69
    $region68: #{tpu_custom_call.1} parent=1 // pred_region
      %130 = dma.done [#allocation9], 3072
    $region69: #{tpu_custom_call.1} parent=1 // pred_fallthru
      _
    // Predicated region
    $region70: #{tpu_custom_call.1} parent=1 // pred_check
      _
    $region71: #{tpu_custom_call.1} parent=1 // pred_check_branch
      %132 = sbr.rel (0) target = $region73
    $region72: #{tpu_custom_call.1} parent=1 // pred_region
      %133 = dma.done [#allocation9], 1024
    $region73: #{tpu_custom_call.1} parent=1 // pred_fallthru
      _
    // Predicated region
    $region74: #{tpu_custom_call.1} parent=1 // pred_check
      _
    $region75: #{tpu_custom_call.1} parent=1 // pred_check_branch
      %135 = sbr.rel (0) target = $region77
    $region76: #{tpu_custom_call.1} parent=1 // pred_region
      %136 = dma.done [#allocation12], 2048
    $region77: #{tpu_custom_call.1} parent=1 // pred_fallthru
      _
    // Predicated region
    $region78: #{tpu_custom_call.1} parent=1 // pred_check
      _
    $region79: #{tpu_custom_call.1} parent=1 // pred_check_branch
      %138 = sbr.rel (0) target = $region81
    $region80: #{tpu_custom_call.1} parent=1 // pred_region
      %139 = dma.done [#allocation12], 2048
    $region81: #{tpu_custom_call.1} parent=1 // pred_fallthru
      _
    %v141 = vld [vmem:[#allocation2] sm:$0xff]
    %v142 = vld [vmem:[#allocation2 + $0x8] sm:$0xff]
    %v143 = vld [vmem:[#allocation2 + $0x10] sm:$0xff]
    %v144 = vld [vmem:[#allocation2 + $0x18] sm:$0xff]
    %v145 = vld [vmem:[#allocation2 + $0x20] sm:$0xff]
    %v146 = vld [vmem:[#allocation2 + $0x28] sm:$0xff]
    %v147 = vld [vmem:[#allocation2 + $0x30] sm:$0xff]
    %v148 = vld [vmem:[#allocation2 + $0x38] sm:$0xff]
    %v149 = vld [vmem:[#allocation5] sm:$0x1]
    %v150 = vld [vmem:[#allocation5 + $0x1] sm:$0x1]
    %v151 = vld [vmem:[#allocation5 + $0x2] sm:$0x1]
    %v152 = vld [vmem:[#allocation5 + $0x3] sm:$0x1]
    %v153 = vld [vmem:[%s11] sm:$0x1]
    %v154 = vld [vmem:[%s12] sm:$0x1]
    %155 = vadd.xlane.f32.xlu0 %v141
    %v156 = vpop.xlane.xlu0 %155
    %157 = vadd.xlane.f32.xlu0 %v142
    %v158 = vpop.xlane.xlu0 %157
    %159 = vadd.xlane.f32.xlu0 %v143
    %v160 = vpop.xlane.xlu0 %159
    %161 = vadd.xlane.f32.xlu0 %v144
    %v162 = vpop.xlane.xlu0 %161
    %163 = vadd.xlane.f32.xlu0 %v145
    %v164 = vpop.xlane.xlu0 %163
    %165 = vadd.xlane.f32.xlu0 %v146
    %v166 = vpop.xlane.xlu0 %165
    %167 = vadd.xlane.f32.xlu0 %v147
    %v168 = vpop.xlane.xlu0 %167
    %169 = vadd.xlane.f32.xlu0 %v148
    %v170 = vpop.xlane.xlu0 %169
    %v171 = vrcp.pop 128.0
    %v172 = vmul.f32 %v156, %v171
    %v173 = vmul.f32 %v158, %v171
    %v174 = vmul.f32 %v160, %v171
    %v175 = vmul.f32 %v162, %v171
    %v176 = vmul.f32 %v164, %v171
    %v177 = vmul.f32 %v166, %v171
    %v178 = vmul.f32 %v168, %v171
    %v179 = vmul.f32 %v170, %v171
    %v180 = vsub.f32 %v141, %v172
    %v181 = vsub.f32 %v142, %v173
    %v182 = vsub.f32 %v143, %v174
    %v183 = vsub.f32 %v144, %v175
    %v184 = vsub.f32 %v145, %v176
    %v185 = vsub.f32 %v146, %v177
    %v186 = vsub.f32 %v147, %v178
    %v187 = vsub.f32 %v148, %v179
    %v188 = vmul.f32 %v180, %v180
    %v189 = vmul.f32 %v181, %v181
    %v190 = vmul.f32 %v182, %v182
    %v191 = vmul.f32 %v183, %v183
    %v192 = vmul.f32 %v184, %v184
    %v193 = vmul.f32 %v185, %v185
    %v194 = vmul.f32 %v186, %v186
    %v195 = vmul.f32 %v187, %v187
    %196 = vadd.xlane.f32.xlu0 %v188
    %v197 = vpop.xlane.xlu0 %196
    %198 = vadd.xlane.f32.xlu0 %v189
    %v199 = vpop.xlane.xlu0 %198
    %200 = vadd.xlane.f32.xlu0 %v190
    %v201 = vpop.xlane.xlu0 %200
    %202 = vadd.xlane.f32.xlu0 %v191
    %v203 = vpop.xlane.xlu0 %202
    %204 = vadd.xlane.f32.xlu0 %v192
    %v205 = vpop.xlane.xlu0 %204
    %206 = vadd.xlane.f32.xlu0 %v193
    %v207 = vpop.xlane.xlu0 %206
    %208 = vadd.xlane.f32.xlu0 %v194
    %v209 = vpop.xlane.xlu0 %208
    %210 = vadd.xlane.f32.xlu0 %v195
    %v211 = vpop.xlane.xlu0 %210
    %v212 = vmul.f32 %v197, %v171
    %v213 = vmul.f32 %v199, %v171
    %v214 = vmul.f32 %v201, %v171
    %v215 = vmul.f32 %v203, %v171
    %v216 = vmul.f32 %v205, %v171
    %v217 = vmul.f32 %v207, %v171
    %v218 = vmul.f32 %v209, %v171
    %v219 = vmul.f32 %v211, %v171
    %v220 = vadd.f32 %v212, 1e-05
    %v221 = vadd.f32 %v213, 1e-05
    %v222 = vadd.f32 %v214, 1e-05
    %v223 = vadd.f32 %v215, 1e-05
    %v224 = vadd.f32 %v216, 1e-05
    %v225 = vadd.f32 %v217, 1e-05
    %v226 = vadd.f32 %v218, 1e-05
    %v227 = vadd.f32 %v219, 1e-05
    %v228 = vrsqrt.pop %v220
    %v229 = vrsqrt.pop %v221
    %v230 = vrsqrt.pop %v222
    %v231 = vrsqrt.pop %v223
    %v232 = vrsqrt.pop %v224
    %v233 = vrsqrt.pop %v225
    %v234 = vrsqrt.pop %v226
    %v235 = vrsqrt.pop %v227
    %v236 = vmul.f32 %v180, %v228
    %v237 = vmul.f32 %v181, %v229
    %v238 = vmul.f32 %v182, %v230
    %v239 = vmul.f32 %v183, %v231
    %v240 = vmul.f32 %v184, %v232
    %v241 = vmul.f32 %v185, %v233
    %v242 = vmul.f32 %v186, %v234
    %v243 = vmul.f32 %v187, %v235
    %v244 = vlaneseq
    %v245 = vshrl.u32 %v244, 7
    %v246 = vsub.s32 0, %v245
    %v247 = vrot.slane %v153, %v246
    %v248 = vmul.f32 %v236, %v247
    %v249 = vmul.f32 %v237, %v247
    %v250 = vmul.f32 %v238, %v247
    %v251 = vmul.f32 %v239, %v247
    %v252 = vmul.f32 %v240, %v247
    %v253 = vmul.f32 %v241, %v247
    %v254 = vmul.f32 %v242, %v247
    %v255 = vmul.f32 %v243, %v247
    %v256 = vlaneseq
    %v257 = vshrl.u32 %v256, 7
    %v258 = vsub.s32 0, %v257
    %v259 = vrot.slane %v154, %v258
    %v260 = vadd.f32 %v248, %v259
    %v261 = vadd.f32 %v249, %v259
    %v262 = vadd.f32 %v250, %v259
    %v263 = vadd.f32 %v251, %v259
    %v264 = vadd.f32 %v252, %v259
    %v265 = vadd.f32 %v253, %v259
    %v266 = vadd.f32 %v254, %v259
    %v267 = vadd.f32 %v255, %v259
    %v268 = vpack.c.bf16 %v261, %v260
    %v269 = vpack.c.bf16 %v263, %v262
    %v270 = vpack.c.bf16 %v265, %v264
    %v271 = vpack.c.bf16 %v267, %v266
    %v272 = vld [vmem:[#allocation8] sm:$0xff]
    %v273 = vld [vmem:[#allocation8 + $0x8] sm:$0xf]
    %v274 = vld [vmem:[#allocation8 + $0xc] sm:$0xff]
    %v275 = vld [vmem:[#allocation8 + $0x14] sm:$0xf]
    %v276 = vld [vmem:[#allocation8 + $0x18] sm:$0xff]
    %v277 = vld [vmem:[#allocation8 + $0x20] sm:$0xf]
    %v278 = vld [vmem:[#allocation8 + $0x24] sm:$0xff]
    %v279 = vld [vmem:[#allocation8 + $0x2c] sm:$0xf]
    %v280 = vld [vmem:[#allocation8 + $0x30] sm:$0xff]
    %v281 = vld [vmem:[#allocation8 + $0x38] sm:$0xf]
    %v282 = vld [vmem:[#allocation8 + $0x3c] sm:$0xff]
    %v283 = vld [vmem:[#allocation8 + $0x44] sm:$0xf]
    %v284 = vld [vmem:[#allocation8 + $0x48] sm:$0xff]
    %v285 = vld [vmem:[#allocation8 + $0x50] sm:$0xf]
    %v286 = vld [vmem:[#allocation8 + $0x54] sm:$0xff]
    %v287 = vld [vmem:[#allocation8 + $0x5c] sm:$0xf]
    %v288 = vld [vmem:[#allocation8 + $0x60] sm:$0xff]
    %v289 = vld [vmem:[#allocation8 + $0x68] sm:$0xf]
    %v290 = vld [vmem:[#allocation8 + $0x6c] sm:$0xff]
    %v291 = vld [vmem:[#allocation8 + $0x74] sm:$0xf]
    %v292 = vld [vmem:[#allocation8 + $0x78] sm:$0xff]
    %v293 = vld [vmem:[#allocation8 + $0x80] sm:$0xf]
    %v294 = vld [vmem:[#allocation8 + $0x84] sm:$0xff]
    %v295 = vld [vmem:[#allocation8 + $0x8c] sm:$0xf]
    %v296 = vld [vmem:[#allocation8 + $0x90] sm:$0xff]
    %v297 = vld [vmem:[#allocation8 + $0x98] sm:$0xf]
    %v298 = vld [vmem:[#allocation8 + $0x9c] sm:$0xff]
    %v299 = vld [vmem:[#allocation8 + $0xa4] sm:$0xf]
    %v300 = vld [vmem:[#allocation8 + $0xa8] sm:$0xff]
    %v301 = vld [vmem:[#allocation8 + $0xb0] sm:$0xf]
    %v302 = vld [vmem:[#allocation8 + $0xb4] sm:$0xff]
    %v303 = vld [vmem:[#allocation8 + $0xbc] sm:$0xf]
    %v304 = vld [vmem:[%s4] sm:$0x7]
    %v306 = vlaneseq
    %v307 = vshrl.u32 %v306, 7
    %v308 = vsub.s32 0, %v307
    %v309 = vrot.slane %v304, %v308
    %v310 = vlaneseq
    %v311 = vshrl.u32 %v310, 7
    %v312 = vsub.s32 1, %v311
    %v313 = vrot.slane %v304, %v312
    %v314 = vlaneseq
    %v315 = vshrl.u32 %v314, 7
    %v316 = vsub.s32 2, %v315
    %v317 = vrot.slane %v304, %v316
    %v353 = vunpack.c.l.b16 %v272
    %v354 = vunpack.c.h.b16 %v272
    %v355 = vunpack.c.l.b16 %v273
    %v356 = vunpack.c.l.b16 %v274
    %v357 = vunpack.c.h.b16 %v274
    %v358 = vunpack.c.l.b16 %v275
    %v359 = vunpack.c.l.b16 %v276
    %v360 = vunpack.c.h.b16 %v276
    %v361 = vunpack.c.l.b16 %v277
    %v362 = vunpack.c.l.b16 %v278
    %v363 = vunpack.c.h.b16 %v278
    %v364 = vunpack.c.l.b16 %v279
    %v365 = vunpack.c.l.b16 %v280
    %v366 = vunpack.c.h.b16 %v280
    %v367 = vunpack.c.l.b16 %v281
    %v368 = vunpack.c.l.b16 %v282
    %v369 = vunpack.c.h.b16 %v282
    %v370 = vunpack.c.l.b16 %v283
    %v371 = vunpack.c.l.b16 %v284
    %v372 = vunpack.c.h.b16 %v284
    %v373 = vunpack.c.l.b16 %v285
    %v374 = vunpack.c.l.b16 %v286
    %v375 = vunpack.c.h.b16 %v286
    %v376 = vunpack.c.l.b16 %v287
    %v377 = vunpack.c.l.b16 %v288
    %v378 = vunpack.c.h.b16 %v288
    %v379 = vunpack.c.l.b16 %v289
    %v380 = vunpack.c.l.b16 %v290
    %v381 = vunpack.c.h.b16 %v290
    %v382 = vunpack.c.l.b16 %v291
    %v383 = vunpack.c.l.b16 %v292
    %v384 = vunpack.c.h.b16 %v292
    %v385 = vunpack.c.l.b16 %v293
    %v386 = vunpack.c.l.b16 %v294
    %v387 = vunpack.c.h.b16 %v294
    %v388 = vunpack.c.l.b16 %v295
    %v389 = vunpack.c.l.b16 %v296
    %v390 = vunpack.c.h.b16 %v296
    %v391 = vunpack.c.l.b16 %v297
    %v392 = vunpack.c.l.b16 %v298
    %v393 = vunpack.c.h.b16 %v298
    %v394 = vunpack.c.l.b16 %v299
    %v395 = vunpack.c.l.b16 %v300
    %v396 = vunpack.c.h.b16 %v300
    %v397 = vunpack.c.l.b16 %v301
    %v398 = vunpack.c.l.b16 %v302
    %v399 = vunpack.c.h.b16 %v302
    %v400 = vunpack.c.l.b16 %v303
    %v401 = vpack.c.b16 %v356, %v353
    %v402 = vpack.c.b16 %v357, %v354
    %v403 = vpack.c.b16 %v358, %v355
    %v404 = vpack.c.b16 %v362, %v359
    %v405 = vpack.c.b16 %v363, %v360
    %v406 = vpack.c.b16 %v364, %v361
    %v407 = vpack.c.b16 %v368, %v365
    %v408 = vpack.c.b16 %v369, %v366
    %v409 = vpack.c.b16 %v370, %v367
    %v410 = vpack.c.b16 %v374, %v371
    %v411 = vpack.c.b16 %v375, %v372
    %v412 = vpack.c.b16 %v376, %v373
    %v413 = vpack.c.b16 %v380, %v377
    %v414 = vpack.c.b16 %v381, %v378
    %v415 = vpack.c.b16 %v382, %v379
    %v416 = vpack.c.b16 %v386, %v383
    %v417 = vpack.c.b16 %v387, %v384
    %v418 = vpack.c.b16 %v388, %v385
    %v419 = vpack.c.b16 %v392, %v389
    %v420 = vpack.c.b16 %v393, %v390
    %v421 = vpack.c.b16 %v394, %v391
    %v422 = vpack.c.b16 %v398, %v395
    %v423 = vpack.c.b16 %v399, %v396
    %v424 = vpack.c.b16 %v400, %v397
    %449 = vmatprep.subr.bf16.mxu0 %v402
    %450 = vmatpush1.bf16.msra.mxu0 %v401
    %451 = vmatprep.subr.bf16.mxu0 %v405
    %452 = vmatpush1.bf16.msra.mxu0 %v404
    %453 = vmatprep.subr.bf16.mxu0 %v408
    %454 = vmatpush1.bf16.msra.mxu0 %v407
    %455 = vmatprep.subr.bf16.mxu0 %v411
    %456 = vmatpush1.bf16.msra.mxu0 %v410
    %457 = vmatprep.subr.bf16.mxu0 %v414
    %458 = vmatpush1.bf16.msra.mxu0 %v413
    %459 = vmatprep.subr.bf16.mxu0 %v417
    %460 = vmatpush1.bf16.msra.mxu0 %v416
    %461 = vmatprep.subr.bf16.mxu0 %v420
    %462 = vmatpush1.bf16.msra.mxu0 %v419
    %463 = vmatprep.subr.bf16.mxu0 %v423
    %464 = vmatpush1.bf16.msra.mxu0 %v422
    %465 = vmatprep.subr.bf16.mxu0 0
    %466 = vmatpush1.bf16.msra.mxu0 0
    %467 = vmatprep.subr.bf16.mxu0 0
    %468 = vmatpush1.bf16.msra.mxu0 0
    %469 = vmatprep.subr.bf16.mxu0 0
    %470 = vmatpush1.bf16.msra.mxu0 0
    %471 = vmatprep.subr.bf16.mxu0 0
    %472 = vmatpush1.bf16.msra.mxu0 0
    %473 = vmatprep.subr.bf16.mxu0 0
    %474 = vmatpush1.bf16.msra.mxu0 0
    %475 = vmatprep.subr.bf16.mxu0 0
    %476 = vmatpush1.bf16.msra.mxu0 0
    %477 = vmatprep.subr.bf16.mxu0 0
    %478 = vmatpush1.bf16.msra.mxu0 0
    %479 = vmatprep.subr.bf16.mxu0 0
    %480 = vmatpush1.bf16.msra.mxu0 0
    %481 = vmatprep.mubr.bf16.mxu0 0
    %482 = vmatmul.mubr.bf16.gmra.mrb[0].mxu0 %v268
    %v483 = vpop.f32.mrb[0].mxu0
    %v484 = vadd.f32 %v309, %v483
    %v485 = vpop.f32.mrb[0].mxu0
    %v486 = vadd.f32 %v313, %v485
    %v487 = vpop.f32.mrb[0].mxu0
    %v488 = vadd.f32 %v309, %v487
    %v489 = vpop.f32.mrb[0].mxu0
    %v490 = vadd.f32 %v313, %v489
    %491 = vmatprep.mubr.bf16.mxu0 0
    %492 = vmatmul.mubr.bf16.gmra.mrb[0].mxu0 %v269
    %v493 = vpop.f32.mrb[0].mxu0
    %v494 = vadd.f32 %v309, %v493
    %v495 = vpop.f32.mrb[0].mxu0
    %v496 = vadd.f32 %v313, %v495
    %v497 = vpop.f32.mrb[0].mxu0
    %v498 = vadd.f32 %v309, %v497
    %v499 = vpop.f32.mrb[0].mxu0
    %v500 = vadd.f32 %v313, %v499
    %501 = vmatprep.mubr.bf16.mxu0 0
    %502 = vmatmul.mubr.bf16.gmra.mrb[0].mxu0 %v270
    %v503 = vpop.f32.mrb[0].mxu0
    %v504 = vadd.f32 %v309, %v503
    %v505 = vpop.f32.mrb[0].mxu0
    %v506 = vadd.f32 %v313, %v505
    %v507 = vpop.f32.mrb[0].mxu0
    %v508 = vadd.f32 %v309, %v507
    %v509 = vpop.f32.mrb[0].mxu0
    %v510 = vadd.f32 %v313, %v509
    %511 = vmatprep.mubr.bf16.mxu0 0
    %512 = vmatmul.mubr.bf16.gmra.mrb[0].mxu0 %v271
    %v513 = vpop.f32.mrb[0].mxu0
    %v514 = vadd.f32 %v309, %v513
    %v515 = vpop.f32.mrb[0].mxu0
    %v516 = vadd.f32 %v313, %v515
    %v517 = vpop.f32.mrb[0].mxu0
    %v518 = vadd.f32 %v309, %v517
    %v519 = vpop.f32.mrb[0].mxu0
    %v520 = vadd.f32 %v313, %v519
    %521 = vdwg.mxu0
    %522 = vmatprep.subr.bf16.mxu0 0
    %523 = vmatpush1.bf16.msra.mxu0 %v403
    %524 = vmatprep.subr.bf16.mxu0 0
    %525 = vmatpush1.bf16.msra.mxu0 %v406
    %526 = vmatprep.subr.bf16.mxu0 0
    %527 = vmatpush1.bf16.msra.mxu0 %v409
    %528 = vmatprep.subr.bf16.mxu0 0
    %529 = vmatpush1.bf16.msra.mxu0 %v412
    %530 = vmatprep.subr.bf16.mxu0 0
    %531 = vmatpush1.bf16.msra.mxu0 %v415
    %532 = vmatprep.subr.bf16.mxu0 0
    %533 = vmatpush1.bf16.msra.mxu0 %v418
    %534 = vmatprep.subr.bf16.mxu0 0
    %535 = vmatpush1.bf16.msra.mxu0 %v421
    %536 = vmatprep.subr.bf16.mxu0 0
    %537 = vmatpush1.bf16.msra.mxu0 %v424
    %538 = vmatprep.subr.bf16.mxu0 0
    %539 = vmatpush1.bf16.msra.mxu0 0
    %540 = vmatprep.subr.bf16.mxu0 0
    %541 = vmatpush1.bf16.msra.mxu0 0
    %542 = vmatprep.subr.bf16.mxu0 0
    %543 = vmatpush1.bf16.msra.mxu0 0
    %544 = vmatprep.subr.bf16.mxu0 0
    %545 = vmatpush1.bf16.msra.mxu0 0
    %546 = vmatprep.subr.bf16.mxu0 0
    %547 = vmatpush1.bf16.msra.mxu0 0
    %548 = vmatprep.subr.bf16.mxu0 0
    %549 = vmatpush1.bf16.msra.mxu0 0
    %550 = vmatprep.subr.bf16.mxu0 0
    %551 = vmatpush1.bf16.msra.mxu0 0
    %552 = vmatprep.subr.bf16.mxu0 0
    %553 = vmatpush1.bf16.msra.mxu0 0
    %554 = vmatprep.mubr.bf16.mxu0 0
    %555 = vmatmul.mubr.bf16.gmra.mrb[0].mxu0 %v268
    %v556 = vpop.f32.mrb[0].mxu0
    %v557 = vadd.f32 %v317, %v556
    %v558 = vpop.f32.mrb[0].mxu0
    %v559 = vpop.f32.mrb[0].mxu0
    %v560 = vadd.f32 %v317, %v559
    %v561 = vpop.f32.mrb[0].mxu0
    %562 = vmatprep.mubr.bf16.mxu0 0
    %563 = vmatmul.mubr.bf16.gmra.mrb[0].mxu0 %v269
    %v564 = vpop.f32.mrb[0].mxu0
    %v565 = vadd.f32 %v317, %v564
    %v566 = vpop.f32.mrb[0].mxu0
    %v567 = vpop.f32.mrb[0].mxu0
    %v568 = vadd.f32 %v317, %v567
    %v569 = vpop.f32.mrb[0].mxu0
    %570 = vmatprep.mubr.bf16.mxu0 0
    %571 = vmatmul.mubr.bf16.gmra.mrb[0].mxu0 %v270
    %v572 = vpop.f32.mrb[0].mxu0
    %v573 = vadd.f32 %v317, %v572
    %v574 = vpop.f32.mrb[0].mxu0
    %v575 = vpop.f32.mrb[0].mxu0
    %v576 = vadd.f32 %v317, %v575
    %v577 = vpop.f32.mrb[0].mxu0
    %578 = vmatprep.mubr.bf16.mxu0 0
    %579 = vmatmul.mubr.bf16.gmra.mrb[0].mxu0 %v271
    %v580 = vpop.f32.mrb[0].mxu0
    %v581 = vadd.f32 %v317, %v580
    %v582 = vpop.f32.mrb[0].mxu0
    %v583 = vpop.f32.mrb[0].mxu0
    %v584 = vadd.f32 %v317, %v583
    %v585 = vpop.f32.mrb[0].mxu0
    %586 = vdwg.mxu0
    %595 = vrot.lane.b32.xlu0 %v484, 96
    %v596 = vpop.permute.xlu0 %595
    %597 = vrot.lane.b32.xlu0 %v488, 96
    %v598 = vpop.permute.xlu0 %597
    %599 = vrot.lane.b32.xlu0 %v494, 96
    %v600 = vpop.permute.xlu0 %599
    %601 = vrot.lane.b32.xlu0 %v498, 96
    %v602 = vpop.permute.xlu0 %601
    %603 = vrot.lane.b32.xlu0 %v504, 96
    %v604 = vpop.permute.xlu0 %603
    %605 = vrot.lane.b32.xlu0 %v508, 96
    %v606 = vpop.permute.xlu0 %605
    %607 = vrot.lane.b32.xlu0 %v514, 96
    %v608 = vpop.permute.xlu0 %607
    %609 = vrot.lane.b32.xlu0 %v518, 96
    %v610 = vpop.permute.xlu0 %609
    %619 = vrot.lane.b32.xlu0 %v484, 64
    %v620 = vpop.permute.xlu0 %619
    %621 = vrot.lane.b32.xlu0 %v488, 64
    %v622 = vpop.permute.xlu0 %621
    %623 = vrot.lane.b32.xlu0 %v494, 64
    %v624 = vpop.permute.xlu0 %623
    %625 = vrot.lane.b32.xlu0 %v498, 64
    %v626 = vpop.permute.xlu0 %625
    %627 = vrot.lane.b32.xlu0 %v504, 64
    %v628 = vpop.permute.xlu0 %627
    %629 = vrot.lane.b32.xlu0 %v508, 64
    %v630 = vpop.permute.xlu0 %629
    %631 = vrot.lane.b32.xlu0 %v514, 64
    %v632 = vpop.permute.xlu0 %631
    %633 = vrot.lane.b32.xlu0 %v518, 64
    %v634 = vpop.permute.xlu0 %633
    %643 = vrot.lane.b32.xlu0 %v484, 32
    %v644 = vpop.permute.xlu0 %643
    %645 = vrot.lane.b32.xlu0 %v488, 32
    %v646 = vpop.permute.xlu0 %645
    %647 = vrot.lane.b32.xlu0 %v494, 32
    %v648 = vpop.permute.xlu0 %647
    %649 = vrot.lane.b32.xlu0 %v498, 32
    %v650 = vpop.permute.xlu0 %649
    %651 = vrot.lane.b32.xlu0 %v504, 32
    %v652 = vpop.permute.xlu0 %651
    %653 = vrot.lane.b32.xlu0 %v508, 32
    %v654 = vpop.permute.xlu0 %653
    %655 = vrot.lane.b32.xlu0 %v514, 32
    %v656 = vpop.permute.xlu0 %655
    %657 = vrot.lane.b32.xlu0 %v518, 32
    %v658 = vpop.permute.xlu0 %657
    %v667 = vpack.c.bf16 %v488, %v484
    %v668 = vpack.c.bf16 %v498, %v494
    %v669 = vpack.c.bf16 %v508, %v504
    %v670 = vpack.c.bf16 %v518, %v514
    %v671 = vpack.c.bf16 %v598, %v596
    %v672 = vpack.c.bf16 %v602, %v600
    %v673 = vpack.c.bf16 %v606, %v604
    %v674 = vpack.c.bf16 %v610, %v608
    %v675 = vpack.c.bf16 %v622, %v620
    %v676 = vpack.c.bf16 %v626, %v624
    %v677 = vpack.c.bf16 %v630, %v628
    %v678 = vpack.c.bf16 %v634, %v632
    %v679 = vpack.c.bf16 %v646, %v644
    %v680 = vpack.c.bf16 %v650, %v648
    %v681 = vpack.c.bf16 %v654, %v652
    %v682 = vpack.c.bf16 %v658, %v656
    %691 = vrot.lane.b32.xlu0 %v486, 96
    %v692 = vpop.permute.xlu0 %691
    %693 = vrot.lane.b32.xlu0 %v490, 96
    %v694 = vpop.permute.xlu0 %693
    %695 = vrot.lane.b32.xlu0 %v496, 96
    %v696 = vpop.permute.xlu0 %695
    %697 = vrot.lane.b32.xlu0 %v500, 96
    %v698 = vpop.permute.xlu0 %697
    %699 = vrot.lane.b32.xlu0 %v506, 96
    %v700 = vpop.permute.xlu0 %699
    %701 = vrot.lane.b32.xlu0 %v510, 96
    %v702 = vpop.permute.xlu0 %701
    %703 = vrot.lane.b32.xlu0 %v516, 96
    %v704 = vpop.permute.xlu0 %703
    %705 = vrot.lane.b32.xlu0 %v520, 96
    %v706 = vpop.permute.xlu0 %705
    %715 = vrot.lane.b32.xlu0 %v486, 64
    %v716 = vpop.permute.xlu0 %715
    %717 = vrot.lane.b32.xlu0 %v490, 64
    %v718 = vpop.permute.xlu0 %717
    %719 = vrot.lane.b32.xlu0 %v496, 64
    %v720 = vpop.permute.xlu0 %719
    %721 = vrot.lane.b32.xlu0 %v500, 64
    %v722 = vpop.permute.xlu0 %721
    %723 = vrot.lane.b32.xlu0 %v506, 64
    %v724 = vpop.permute.xlu0 %723
    %725 = vrot.lane.b32.xlu0 %v510, 64
    %v726 = vpop.permute.xlu0 %725
    %727 = vrot.lane.b32.xlu0 %v516, 64
    %v728 = vpop.permute.xlu0 %727
    %729 = vrot.lane.b32.xlu0 %v520, 64
    %v730 = vpop.permute.xlu0 %729
    %739 = vrot.lane.b32.xlu0 %v486, 32
    %v740 = vpop.permute.xlu0 %739
    %741 = vrot.lane.b32.xlu0 %v490, 32
    %v742 = vpop.permute.xlu0 %741
    %743 = vrot.lane.b32.xlu0 %v496, 32
    %v744 = vpop.permute.xlu0 %743
    %745 = vrot.lane.b32.xlu0 %v500, 32
    %v746 = vpop.permute.xlu0 %745
    %747 = vrot.lane.b32.xlu0 %v506, 32
    %v748 = vpop.permute.xlu0 %747
    %749 = vrot.lane.b32.xlu0 %v510, 32
    %v750 = vpop.permute.xlu0 %749
    %751 = vrot.lane.b32.xlu0 %v516, 32
    %v752 = vpop.permute.xlu0 %751
    %753 = vrot.lane.b32.xlu0 %v520, 32
    %v754 = vpop.permute.xlu0 %753
    %v763 = vpack.c.bf16 %v490, %v486
    %v764 = vpack.c.bf16 %v500, %v496
    %v765 = vpack.c.bf16 %v510, %v506
    %v766 = vpack.c.bf16 %v520, %v516
    %v767 = vpack.c.bf16 %v694, %v692
    %v768 = vpack.c.bf16 %v698, %v696
    %v769 = vpack.c.bf16 %v702, %v700
    %v770 = vpack.c.bf16 %v706, %v704
    %v771 = vpack.c.bf16 %v718, %v716
    %v772 = vpack.c.bf16 %v722, %v720
    %v773 = vpack.c.bf16 %v726, %v724
    %v774 = vpack.c.bf16 %v730, %v728
    %v775 = vpack.c.bf16 %v742, %v740
    %v776 = vpack.c.bf16 %v746, %v744
    %v777 = vpack.c.bf16 %v750, %v748
    %v778 = vpack.c.bf16 %v754, %v752
    %787 = vrot.lane.b32.xlu0 %v557, 96
    %v788 = vpop.permute.xlu0 %787
    %789 = vrot.lane.b32.xlu0 %v560, 96
    %v790 = vpop.permute.xlu0 %789
    %791 = vrot.lane.b32.xlu0 %v565, 96
    %v792 = vpop.permute.xlu0 %791
    %793 = vrot.lane.b32.xlu0 %v568, 96
    %v794 = vpop.permute.xlu0 %793
    %795 = vrot.lane.b32.xlu0 %v573, 96
    %v796 = vpop.permute.xlu0 %795
    %797 = vrot.lane.b32.xlu0 %v576, 96
    %v798 = vpop.permute.xlu0 %797
    %799 = vrot.lane.b32.xlu0 %v581, 96
    %v800 = vpop.permute.xlu0 %799
    %801 = vrot.lane.b32.xlu0 %v584, 96
    %v802 = vpop.permute.xlu0 %801
    %811 = vrot.lane.b32.xlu0 %v557, 64
    %v812 = vpop.permute.xlu0 %811
    %813 = vrot.lane.b32.xlu0 %v560, 64
    %v814 = vpop.permute.xlu0 %813
    %815 = vrot.lane.b32.xlu0 %v565, 64
    %v816 = vpop.permute.xlu0 %815
    %817 = vrot.lane.b32.xlu0 %v568, 64
    %v818 = vpop.permute.xlu0 %817
    %819 = vrot.lane.b32.xlu0 %v573, 64
    %v820 = vpop.permute.xlu0 %819
    %821 = vrot.lane.b32.xlu0 %v576, 64
    %v822 = vpop.permute.xlu0 %821
    %823 = vrot.lane.b32.xlu0 %v581, 64
    %v824 = vpop.permute.xlu0 %823
    %825 = vrot.lane.b32.xlu0 %v584, 64
    %v826 = vpop.permute.xlu0 %825
    %835 = vrot.lane.b32.xlu0 %v557, 32
    %v836 = vpop.permute.xlu0 %835
    %837 = vrot.lane.b32.xlu0 %v560, 32
    %v838 = vpop.permute.xlu0 %837
    %839 = vrot.lane.b32.xlu0 %v565, 32
    %v840 = vpop.permute.xlu0 %839
    %841 = vrot.lane.b32.xlu0 %v568, 32
    %v842 = vpop.permute.xlu0 %841
    %843 = vrot.lane.b32.xlu0 %v573, 32
    %v844 = vpop.permute.xlu0 %843
    %845 = vrot.lane.b32.xlu0 %v576, 32
    %v846 = vpop.permute.xlu0 %845
    %847 = vrot.lane.b32.xlu0 %v581, 32
    %v848 = vpop.permute.xlu0 %847
    %849 = vrot.lane.b32.xlu0 %v584, 32
    %v850 = vpop.permute.xlu0 %849
    %v859 = vpack.c.bf16 %v560, %v557
    %v860 = vpack.c.bf16 %v568, %v565
    %v861 = vpack.c.bf16 %v576, %v573
    %v862 = vpack.c.bf16 %v584, %v581
    %v863 = vpack.c.bf16 %v790, %v788
    %v864 = vpack.c.bf16 %v794, %v792
    %v865 = vpack.c.bf16 %v798, %v796
    %v866 = vpack.c.bf16 %v802, %v800
    %v867 = vpack.c.bf16 %v814, %v812
    %v868 = vpack.c.bf16 %v818, %v816
    %v869 = vpack.c.bf16 %v822, %v820
    %v870 = vpack.c.bf16 %v826, %v824
    %v871 = vpack.c.bf16 %v838, %v836
    %v872 = vpack.c.bf16 %v842, %v840
    %v873 = vpack.c.bf16 %v846, %v844
    %v874 = vpack.c.bf16 %v850, %v848
    %vm875 = vcmask 261120
    %v877 = vsel %vm875, %v667, 0
    %v880 = vsel %vm875, %v763, 0
    %882 = vmatprep.subr.bf16.mxu0 0
    %883 = vmatpush1.bf16.xpose.msra.mxu0 %v880
    %884 = vmatprep.subr.bf16.mxu0 0
    %885 = vmatpush1.bf16.xpose.msra.mxu0 0
    %886 = vmatprep.subr.bf16.mxu0 0
    %887 = vmatpush1.bf16.xpose.msra.mxu0 0
    %888 = vmatprep.subr.bf16.mxu0 0
    %889 = vmatpush1.bf16.xpose.msra.mxu0 0
    %890 = vmatprep.subr.bf16.mxu0 0
    %891 = vmatpush1.bf16.xpose.msra.mxu0 0
    %892 = vmatprep.subr.bf16.mxu0 0
    %893 = vmatpush1.bf16.xpose.msra.mxu0 0
    %894 = vmatprep.subr.bf16.mxu0 0
    %895 = vmatpush1.bf16.xpose.msra.mxu0 0
    %896 = vmatprep.subr.bf16.mxu0 0
    %897 = vmatpush1.bf16.xpose.msra.mxu0 0
    %898 = vmatprep.subr.bf16.mxu0 0
    %899 = vmatpush1.bf16.xpose.msra.mxu0 0
    %900 = vmatprep.subr.bf16.mxu0 0
    %901 = vmatpush1.bf16.xpose.msra.mxu0 0
    %902 = vmatprep.subr.bf16.mxu0 0
    %903 = vmatpush1.bf16.xpose.msra.mxu0 0
    %904 = vmatprep.subr.bf16.mxu0 0
    %905 = vmatpush1.bf16.xpose.msra.mxu0 0
    %906 = vmatprep.subr.bf16.mxu0 0
    %907 = vmatpush1.bf16.xpose.msra.mxu0 0
    %908 = vmatprep.subr.bf16.mxu0 0
    %909 = vmatpush1.bf16.xpose.msra.mxu0 0
    %910 = vmatprep.subr.bf16.mxu0 0
    %911 = vmatpush1.bf16.xpose.msra.mxu0 0
    %912 = vmatprep.subr.bf16.mxu0 0
    %913 = vmatpush1.bf16.xpose.msra.mxu0 0
    %914 = vmatprep.mubr.bf16.mxu0 0
    %915 = vmatmul.mubr.bf16.gmra.mrb[0].mxu0 %v877
    %v916 = vpop.f32.mrb[0].mxu0
    %v917 = vadd.f32 0.0, %v916
    %v918 = vpop.f32.mrb[0].mxu0
    %v919 = vpop.f32.mrb[0].mxu0
    %v920 = vadd.f32 0.0, %v919
    %v921 = vpop.f32.mrb[0].mxu0
    %922 = vdwg.mxu0
    %v924 = vsel %vm875, %v668, 0
    %v927 = vsel %vm875, %v764, 0
    %929 = vmatprep.subr.bf16.mxu0 0
    %930 = vmatpush1.bf16.xpose.msra.mxu0 %v927
    %931 = vmatprep.subr.bf16.mxu0 0
    %932 = vmatpush1.bf16.xpose.msra.mxu0 0
    %933 = vmatprep.subr.bf16.mxu0 0
    %934 = vmatpush1.bf16.xpose.msra.mxu0 0
    %935 = vmatprep.subr.bf16.mxu0 0
    %936 = vmatpush1.bf16.xpose.msra.mxu0 0
    %937 = vmatprep.subr.bf16.mxu0 0
    %938 = vmatpush1.bf16.xpose.msra.mxu0 0
    %939 = vmatprep.subr.bf16.mxu0 0
    %940 = vmatpush1.bf16.xpose.msra.mxu0 0
    %941 = vmatprep.subr.bf16.mxu0 0
    %942 = vmatpush1.bf16.xpose.msra.mxu0 0
    %943 = vmatprep.subr.bf16.mxu0 0
    %944 = vmatpush1.bf16.xpose.msra.mxu0 0
    %945 = vmatprep.subr.bf16.mxu0 0
    %946 = vmatpush1.bf16.xpose.msra.mxu0 0
    %947 = vmatprep.subr.bf16.mxu0 0
    %948 = vmatpush1.bf16.xpose.msra.mxu0 0
    %949 = vmatprep.subr.bf16.mxu0 0
    %950 = vmatpush1.bf16.xpose.msra.mxu0 0
    %951 = vmatprep.subr.bf16.mxu0 0
    %952 = vmatpush1.bf16.xpose.msra.mxu0 0
    %953 = vmatprep.subr.bf16.mxu0 0
    %954 = vmatpush1.bf16.xpose.msra.mxu0 0
    %955 = vmatprep.subr.bf16.mxu0 0
    %956 = vmatpush1.bf16.xpose.msra.mxu0 0
    %957 = vmatprep.subr.bf16.mxu0 0
    %958 = vmatpush1.bf16.xpose.msra.mxu0 0
    %959 = vmatprep.subr.bf16.mxu0 0
    %960 = vmatpush1.bf16.xpose.msra.mxu0 0
    %961 = vmatprep.mubr.bf16.mxu0 0
    %962 = vmatmul.mubr.bf16.gmra.mrb[0].mxu0 %v924
    %v963 = vpop.f32.mrb[0].mxu0
    %v964 = vadd.f32 0.0, %v963
    %v965 = vpop.f32.mrb[0].mxu0
    %v966 = vpop.f32.mrb[0].mxu0
    %v967 = vadd.f32 0.0, %v966
    %v968 = vpop.f32.mrb[0].mxu0
    %969 = vdwg.mxu0
    %v971 = vsel %vm875, %v669, 0
    %v974 = vsel %vm875, %v765, 0
    %976 = vmatprep.subr.bf16.mxu0 0
    %977 = vmatpush1.bf16.xpose.msra.mxu0 %v974
    %978 = vmatprep.subr.bf16.mxu0 0
    %979 = vmatpush1.bf16.xpose.msra.mxu0 0
    %980 = vmatprep.subr.bf16.mxu0 0
    %981 = vmatpush1.bf16.xpose.msra.mxu0 0
    %982 = vmatprep.subr.bf16.mxu0 0
    %983 = vmatpush1.bf16.xpose.msra.mxu0 0
    %984 = vmatprep.subr.bf16.mxu0 0
    %985 = vmatpush1.bf16.xpose.msra.mxu0 0
    %986 = vmatprep.subr.bf16.mxu0 0
    %987 = vmatpush1.bf16.xpose.msra.mxu0 0
    %988 = vmatprep.subr.bf16.mxu0 0
    %989 = vmatpush1.bf16.xpose.msra.mxu0 0
    %990 = vmatprep.subr.bf16.mxu0 0
    %991 = vmatpush1.bf16.xpose.msra.mxu0 0
    %992 = vmatprep.subr.bf16.mxu0 0
    %993 = vmatpush1.bf16.xpose.msra.mxu0 0
    %994 = vmatprep.subr.bf16.mxu0 0
    %995 = vmatpush1.bf16.xpose.msra.mxu0 0
    %996 = vmatprep.subr.bf16.mxu0 0
    %997 = vmatpush1.bf16.xpose.msra.mxu0 0
    %998 = vmatprep.subr.bf16.mxu0 0
    %999 = vmatpush1.bf16.xpose.msra.mxu0 0
    %1000 = vmatprep.subr.bf16.mxu0 0
    %1001 = vmatpush1.bf16.xpose.msra.mxu0 0
    %1002 = vmatprep.subr.bf16.mxu0 0
    %1003 = vmatpush1.bf16.xpose.msra.mxu0 0
    %1004 = vmatprep.subr.bf16.mxu0 0
    %1005 = vmatpush1.bf16.xpose.msra.mxu0 0
    %1006 = vmatprep.subr.bf16.mxu0 0
    %1007 = vmatpush1.bf16.xpose.msra.mxu0 0
    %1008 = vmatprep.mubr.bf16.mxu0 0
    %1009 = vmatmul.mubr.bf16.gmra.mrb[0].mxu0 %v971
    %v1010 = vpop.f32.mrb[0].mxu0
    %v1011 = vadd.f32 0.0, %v1010
    %v1012 = vpop.f32.mrb[0].mxu0
    %v1013 = vpop.f32.mrb[0].mxu0
    %v1014 = vadd.f32 0.0, %v1013
    %v1015 = vpop.f32.mrb[0].mxu0
    %1016 = vdwg.mxu0
    %v1018 = vsel %vm875, %v670, 0
    %v1021 = vsel %vm875, %v766, 0
    %1023 = vmatprep.subr.bf16.mxu0 0
    %1024 = vmatpush1.bf16.xpose.msra.mxu0 %v1021
    %1025 = vmatprep.subr.bf16.mxu0 0
    %1026 = vmatpush1.bf16.xpose.msra.mxu0 0
    %1027 = vmatprep.subr.bf16.mxu0 0
    %1028 = vmatpush1.bf16.xpose.msra.mxu0 0
    %1029 = vmatprep.subr.bf16.mxu0 0
    %1030 = vmatpush1.bf16.xpose.msra.mxu0 0
    %1031 = vmatprep.subr.bf16.mxu0 0
    %1032 = vmatpush1.bf16.xpose.msra.mxu0 0
    %1033 = vmatprep.subr.bf16.mxu0 0
    %1034 = vmatpush1.bf16.xpose.msra.mxu0 0
    %1035 = vmatprep.subr.bf16.mxu0 0
    %1036 = vmatpush1.bf16.xpose.msra.mxu0 0
    %1037 = vmatprep.subr.bf16.mxu0 0
    %1038 = vmatpush1.bf16.xpose.msra.mxu0 0
    %1039 = vmatprep.subr.bf16.mxu0 0
    %1040 = vmatpush1.bf16.xpose.msra.mxu0 0
    %1041 = vmatprep.subr.bf16.mxu0 0
    %1042 = vmatpush1.bf16.xpose.msra.mxu0 0
    %1043 = vmatprep.subr.bf16.mxu0 0
    %1044 = vmatpush1.bf16.xpose.msra.mxu0 0
    %1045 = vmatprep.subr.bf16.mxu0 0
    %1046 = vmatpush1.bf16.xpose.msra.mxu0 0
    %1047 = vmatprep.subr.bf16.mxu0 0
    %1048 = vmatpush1.bf16.xpose.msra.mxu0 0
    %1049 = vmatprep.subr.bf16.mxu0 0
    %1050 = vmatpush1.bf16.xpose.msra.mxu0 0
    %1051 = vmatprep.subr.bf16.mxu0 0
    %1052 = vmatpush1.bf16.xpose.msra.mxu0 0
    %1053 = vmatprep.subr.bf16.mxu0 0
    %1054 = vmatpush1.bf16.xpose.msra.mxu0 0
    %1055 = vmatprep.mubr.bf16.mxu0 0
    %1056 = vmatmul.mubr.bf16.gmra.mrb[0].mxu0 %v1018
    %v1057 = vpop.f32.mrb[0].mxu0
    %v1058 = vadd.f32 0.0, %v1057
    %v1059 = vpop.f32.mrb[0].mxu0
    %v1060 = vpop.f32.mrb[0].mxu0
    %v1061 = vadd.f32 0.0, %v1060
    %v1062 = vpop.f32.mrb[0].mxu0
    %1063 = vdwg.mxu0
    %v1065 = vsel %vm875, %v671, 0
    %v1068 = vsel %vm875, %v767, 0
    %1070 = vmatprep.subr.bf16.mxu0 0
    %1071 = vmatpush1.bf16.xpose.msra.mxu0 %v1068
    %1072 = vmatprep.subr.bf16.mxu0 0
    %1073 = vmatpush1.bf16.xpose.msra.mxu0 0
    %1074 = vmatprep.subr.bf16.mxu0 0
    %1075 = vmatpush1.bf16.xpose.msra.mxu0 0
    %1076 = vmatprep.subr.bf16.mxu0 0
    %1077 = vmatpush1.bf16.xpose.msra.mxu0 0
    %1078 = vmatprep.subr.bf16.mxu0 0
    %1079 = vmatpush1.bf16.xpose.msra.mxu0 0
    %1080 = vmatprep.subr.bf16.mxu0 0
    %1081 = vmatpush1.bf16.xpose.msra.mxu0 0
    %1082 = vmatprep.subr.bf16.mxu0 0
    %1083 = vmatpush1.bf16.xpose.msra.mxu0 0
    %1084 = vmatprep.subr.bf16.mxu0 0
    %1085 = vmatpush1.bf16.xpose.msra.mxu0 0
    %1086 = vmatprep.subr.bf16.mxu0 0
    %1087 = vmatpush1.bf16.xpose.msra.mxu0 0
    %1088 = vmatprep.subr.bf16.mxu0 0
    %1089 = vmatpush1.bf16.xpose.msra.mxu0 0
    %1090 = vmatprep.subr.bf16.mxu0 0
    %1091 = vmatpush1.bf16.xpose.msra.mxu0 0
    %1092 = vmatprep.subr.bf16.mxu0 0
    %1093 = vmatpush1.bf16.xpose.msra.mxu0 0
    %1094 = vmatprep.subr.bf16.mxu0 0
    %1095 = vmatpush1.bf16.xpose.msra.mxu0 0
    %1096 = vmatprep.subr.bf16.mxu0 0
    %1097 = vmatpush1.bf16.xpose.msra.mxu0 0
    %1098 = vmatprep.subr.bf16.mxu0 0
    %1099 = vmatpush1.bf16.xpose.msra.mxu0 0
    %1100 = vmatprep.subr.bf16.mxu0 0
    %1101 = vmatpush1.bf16.xpose.msra.mxu0 0
    %1102 = vmatprep.mubr.bf16.mxu0 0
    %1103 = vmatmul.mubr.bf16.gmra.mrb[0].mxu0 %v1065
    %v1104 = vpop.f32.mrb[0].mxu0
    %v1105 = vadd.f32 0.0, %v1104
    %v1106 = vpop.f32.mrb[0].mxu0
    %v1107 = vpop.f32.mrb[0].mxu0
    %v1108 = vadd.f32 0.0, %v1107
    %v1109 = vpop.f32.mrb[0].mxu0
    %1110 = vdwg.mxu0
    %v1112 = vsel %vm875, %v672, 0
    %v1115 = vsel %vm875, %v768, 0
    %1117 = vmatprep.subr.bf16.mxu0 0
    %1118 = vmatpush1.bf16.xpose.msra.mxu0 %v1115
    %1119 = vmatprep.subr.bf16.mxu0 0
    %1120 = vmatpush1.bf16.xpose.msra.mxu0 0
    %1121 = vmatprep.subr.bf16.mxu0 0
    %1122 = vmatpush1.bf16.xpose.msra.mxu0 0
    %1123 = vmatprep.subr.bf16.mxu0 0
    %1124 = vmatpush1.bf16.xpose.msra.mxu0 0
    %1125 = vmatprep.subr.bf16.mxu0 0
    %1126 = vmatpush1.bf16.xpose.msra.mxu0 0
    %1127 = vmatprep.subr.bf16.mxu0 0
    %1128 = vmatpush1.bf16.xpose.msra.mxu0 0
    %1129 = vmatprep.subr.bf16.mxu0 0
    %1130 = vmatpush1.bf16.xpose.msra.mxu0 0
    %1131 = vmatprep.subr.bf16.mxu0 0
    %1132 = vmatpush1.bf16.xpose.msra.mxu0 0
    %1133 = vmatprep.subr.bf16.mxu0 0
    %1134 = vmatpush1.bf16.xpose.msra.mxu0 0
    %1135 = vmatprep.subr.bf16.mxu0 0
    %1136 = vmatpush1.bf16.xpose.msra.mxu0 0
    %1137 = vmatprep.subr.bf16.mxu0 0
    %1138 = vmatpush1.bf16.xpose.msra.mxu0 0
    %1139 = vmatprep.subr.bf16.mxu0 0
    %1140 = vmatpush1.bf16.xpose.msra.mxu0 0
    %1141 = vmatprep.subr.bf16.mxu0 0
    %1142 = vmatpush1.bf16.xpose.msra.mxu0 0
    %1143 = vmatprep.subr.bf16.mxu0 0
    %1144 = vmatpush1.bf16.xpose.msra.mxu0 0
    %1145 = vmatprep.subr.bf16.mxu0 0
    %1146 = vmatpush1.bf16.xpose.msra.mxu0 0
    %1147 = vmatprep.subr.bf16.mxu0 0
    %1148 = vmatpush1.bf16.xpose.msra.mxu0 0
    %1149 = vmatprep.mubr.bf16.mxu0 0
    %1150 = vmatmul.mubr.bf16.gmra.mrb[0].mxu0 %v1112
    %v1151 = vpop.f32.mrb[0].mxu0
    %v1152 = vadd.f32 0.0, %v1151
    %v1153 = vpop.f32.mrb[0].mxu0
    %v1154 = vpop.f32.mrb[0].mxu0
    %v1155 = vadd.f32 0.0, %v1154
    %v1156 = vpop.f32.mrb[0].mxu0
    %1157 = vdwg.mxu0
    %v1159 = vsel %vm875, %v673, 0
    %v1162 = vsel %vm875, %v769, 0
    %1164 = vmatprep.subr.bf16.mxu0 0
    %1165 = vmatpush1.bf16.xpose.msra.mxu0 %v1162
    %1166 = vmatprep.subr.bf16.mxu0 0
    %1167 = vmatpush1.bf16.xpose.msra.mxu0 0
    %1168 = vmatprep.subr.bf16.mxu0 0
    %1169 = vmatpush1.bf16.xpose.msra.mxu0 0
    %1170 = vmatprep.subr.bf16.mxu0 0
    %1171 = vmatpush1.bf16.xpose.msra.mxu0 0
    %1172 = vmatprep.subr.bf16.mxu0 0
    %1173 = vmatpush1.bf16.xpose.msra.mxu0 0
    %1174 = vmatprep.subr.bf16.mxu0 0
    %1175 = vmatpush1.bf16.xpose.msra.mxu0 0
    %1176 = vmatprep.subr.bf16.mxu0 0
    %1177 = vmatpush1.bf16.xpose.msra.mxu0 0
    %1178 = vmatprep.subr.bf16.mxu0 0
    %1179 = vmatpush1.bf16.xpose.msra.mxu0 0
    %1180 = vmatprep.subr.bf16.mxu0 0
    %1181 = vmatpush1.bf16.xpose.msra.mxu0 0
    %1182 = vmatprep.subr.bf16.mxu0 0
    %1183 = vmatpush1.bf16.xpose.msra.mxu0 0
    %1184 = vmatprep.subr.bf16.mxu0 0
    %1185 = vmatpush1.bf16.xpose.msra.mxu0 0
    %1186 = vmatprep.subr.bf16.mxu0 0
    %1187 = vmatpush1.bf16.xpose.msra.mxu0 0
    %1188 = vmatprep.subr.bf16.mxu0 0
    %1189 = vmatpush1.bf16.xpose.msra.mxu0 0
    %1190 = vmatprep.subr.bf16.mxu0 0
    %1191 = vmatpush1.bf16.xpose.msra.mxu0 0
    %1192 = vmatprep.subr.bf16.mxu0 0
    %1193 = vmatpush1.bf16.xpose.msra.mxu0 0
    %1194 = vmatprep.subr.bf16.mxu0 0
    %1195 = vmatpush1.bf16.xpose.msra.mxu0 0
    %1196 = vmatprep.mubr.bf16.mxu0 0
    %1197 = vmatmul.mubr.bf16.gmra.mrb[0].mxu0 %v1159
    %v1198 = vpop.f32.mrb[0].mxu0
    %v1199 = vadd.f32 0.0, %v1198
    %v1200 = vpop.f32.mrb[0].mxu0
    %v1201 = vpop.f32.mrb[0].mxu0
    %v1202 = vadd.f32 0.0, %v1201
    %v1203 = vpop.f32.mrb[0].mxu0
    %1204 = vdwg.mxu0
    %v1206 = vsel %vm875, %v674, 0
    %v1209 = vsel %vm875, %v770, 0
    %1211 = vmatprep.subr.bf16.mxu0 0
    %1212 = vmatpush1.bf16.xpose.msra.mxu0 %v1209
    %1213 = vmatprep.subr.bf16.mxu0 0
    %1214 = vmatpush1.bf16.xpose.msra.mxu0 0
    %1215 = vmatprep.subr.bf16.mxu0 0
    %1216 = vmatpush1.bf16.xpose.msra.mxu0 0
    %1217 = vmatprep.subr.bf16.mxu0 0
    %1218 = vmatpush1.bf16.xpose.msra.mxu0 0
    %1219 = vmatprep.subr.bf16.mxu0 0
    %1220 = vmatpush1.bf16.xpose.msra.mxu0 0
    %1221 = vmatprep.subr.bf16.mxu0 0
    %1222 = vmatpush1.bf16.xpose.msra.mxu0 0
    %1223 = vmatprep.subr.bf16.mxu0 0
    %1224 = vmatpush1.bf16.xpose.msra.mxu0 0
    %1225 = vmatprep.subr.bf16.mxu0 0
    %1226 = vmatpush1.bf16.xpose.msra.mxu0 0
    %1227 = vmatprep.subr.bf16.mxu0 0
    %1228 = vmatpush1.bf16.xpose.msra.mxu0 0
    %1229 = vmatprep.subr.bf16.mxu0 0
    %1230 = vmatpush1.bf16.xpose.msra.mxu0 0
    %1231 = vmatprep.subr.bf16.mxu0 0
    %1232 = vmatpush1.bf16.xpose.msra.mxu0 0
    %1233 = vmatprep.subr.bf16.mxu0 0
    %1234 = vmatpush1.bf16.xpose.msra.mxu0 0
    %1235 = vmatprep.subr.bf16.mxu0 0
    %1236 = vmatpush1.bf16.xpose.msra.mxu0 0
    %1237 = vmatprep.subr.bf16.mxu0 0
    %1238 = vmatpush1.bf16.xpose.msra.mxu0 0
    %1239 = vmatprep.subr.bf16.mxu0 0
    %1240 = vmatpush1.bf16.xpose.msra.mxu0 0
    %1241 = vmatprep.subr.bf16.mxu0 0
    %1242 = vmatpush1.bf16.xpose.msra.mxu0 0
    %1243 = vmatprep.mubr.bf16.mxu0 0
    %1244 = vmatmul.mubr.bf16.gmra.mrb[0].mxu0 %v1206
    %v1245 = vpop.f32.mrb[0].mxu0
    %v1246 = vadd.f32 0.0, %v1245
    %v1247 = vpop.f32.mrb[0].mxu0
    %v1248 = vpop.f32.mrb[0].mxu0
    %v1249 = vadd.f32 0.0, %v1248
    %v1250 = vpop.f32.mrb[0].mxu0
    %1251 = vdwg.mxu0
    %v1253 = vsel %vm875, %v675, 0
    %v1256 = vsel %vm875, %v771, 0
    %1258 = vmatprep.subr.bf16.mxu0 0
    %1259 = vmatpush1.bf16.xpose.msra.mxu0 %v1256
    %1260 = vmatprep.subr.bf16.mxu0 0
    %1261 = vmatpush1.bf16.xpose.msra.mxu0 0
    %1262 = vmatprep.subr.bf16.mxu0 0
    %1263 = vmatpush1.bf16.xpose.msra.mxu0 0
    %1264 = vmatprep.subr.bf16.mxu0 0
    %1265 = vmatpush1.bf16.xpose.msra.mxu0 0
    %1266 = vmatprep.subr.bf16.mxu0 0
    %1267 = vmatpush1.bf16.xpose.msra.mxu0 0
    %1268 = vmatprep.subr.bf16.mxu0 0
    %1269 = vmatpush1.bf16.xpose.msra.mxu0 0
    %1270 = vmatprep.subr.bf16.mxu0 0
    %1271 = vmatpush1.bf16.xpose.msra.mxu0 0
    %1272 = vmatprep.subr.bf16.mxu0 0
    %1273 = vmatpush1.bf16.xpose.msra.mxu0 0
    %1274 = vmatprep.subr.bf16.mxu0 0
    %1275 = vmatpush1.bf16.xpose.msra.mxu0 0
    %1276 = vmatprep.subr.bf16.mxu0 0
    %1277 = vmatpush1.bf16.xpose.msra.mxu0 0
    %1278 = vmatprep.subr.bf16.mxu0 0
    %1279 = vmatpush1.bf16.xpose.msra.mxu0 0
    %1280 = vmatprep.subr.bf16.mxu0 0
    %1281 = vmatpush1.bf16.xpose.msra.mxu0 0
    %1282 = vmatprep.subr.bf16.mxu0 0
    %1283 = vmatpush1.bf16.xpose.msra.mxu0 0
    %1284 = vmatprep.subr.bf16.mxu0 0
    %1285 = vmatpush1.bf16.xpose.msra.mxu0 0
    %1286 = vmatprep.subr.bf16.mxu0 0
    %1287 = vmatpush1.bf16.xpose.msra.mxu0 0
    %1288 = vmatprep.subr.bf16.mxu0 0
    %1289 = vmatpush1.bf16.xpose.msra.mxu0 0
    %1290 = vmatprep.mubr.bf16.mxu0 0
    %1291 = vmatmul.mubr.bf16.gmra.mrb[0].mxu0 %v1253
    %v1292 = vpop.f32.mrb[0].mxu0
    %v1293 = vadd.f32 0.0, %v1292
    %v1294 = vpop.f32.mrb[0].mxu0
    %v1295 = vpop.f32.mrb[0].mxu0
    %v1296 = vadd.f32 0.0, %v1295
    %v1297 = vpop.f32.mrb[0].mxu0
    %1298 = vdwg.mxu0
    %v1300 = vsel %vm875, %v676, 0
    %v1303 = vsel %vm875, %v772, 0
    %1305 = vmatprep.subr.bf16.mxu0 0
    %1306 = vmatpush1.bf16.xpose.msra.mxu0 %v1303
    %1307 = vmatprep.subr.bf16.mxu0 0
    %1308 = vmatpush1.bf16.xpose.msra.mxu0 0
    %1309 = vmatprep.subr.bf16.mxu0 0
    %1310 = vmatpush1.bf16.xpose.msra.mxu0 0
    %1311 = vmatprep.subr.bf16.mxu0 0
    %1312 = vmatpush1.bf16.xpose.msra.mxu0 0
    %1313 = vmatprep.subr.bf16.mxu0 0
    %1314 = vmatpush1.bf16.xpose.msra.mxu0 0
    %1315 = vmatprep.subr.bf16.mxu0 0
    %1316 = vmatpush1.bf16.xpose.msra.mxu0 0
    %1317 = vmatprep.subr.bf16.mxu0 0
    %1318 = vmatpush1.bf16.xpose.msra.mxu0 0
    %1319 = vmatprep.subr.bf16.mxu0 0
    %1320 = vmatpush1.bf16.xpose.msra.mxu0 0
    %1321 = vmatprep.subr.bf16.mxu0 0
    %1322 = vmatpush1.bf16.xpose.msra.mxu0 0
    %1323 = vmatprep.subr.bf16.mxu0 0
    %1324 = vmatpush1.bf16.xpose.msra.mxu0 0
    %1325 = vmatprep.subr.bf16.mxu0 0
    %1326 = vmatpush1.bf16.xpose.msra.mxu0 0
    %1327 = vmatprep.subr.bf16.mxu0 0
    %1328 = vmatpush1.bf16.xpose.msra.mxu0 0
    %1329 = vmatprep.subr.bf16.mxu0 0
    %1330 = vmatpush1.bf16.xpose.msra.mxu0 0
    %1331 = vmatprep.subr.bf16.mxu0 0
    %1332 = vmatpush1.bf16.xpose.msra.mxu0 0
    %1333 = vmatprep.subr.bf16.mxu0 0
    %1334 = vmatpush1.bf16.xpose.msra.mxu0 0
    %1335 = vmatprep.subr.bf16.mxu0 0
    %1336 = vmatpush1.bf16.xpose.msra.mxu0 0
    %1337 = vmatprep.mubr.bf16.mxu0 0
    %1338 = vmatmul.mubr.bf16.gmra.mrb[0].mxu0 %v1300
    %v1339 = vpop.f32.mrb[0].mxu0
    %v1340 = vadd.f32 0.0, %v1339
    %v1341 = vpop.f32.mrb[0].mxu0
    %v1342 = vpop.f32.mrb[0].mxu0
    %v1343 = vadd.f32 0.0, %v1342
    %v1344 = vpop.f32.mrb[0].mxu0
    %1345 = vdwg.mxu0
    %v1347 = vsel %vm875, %v677, 0
    %v1350 = vsel %vm875, %v773, 0
    %1352 = vmatprep.subr.bf16.mxu0 0
    %1353 = vmatpush1.bf16.xpose.msra.mxu0 %v1350
    %1354 = vmatprep.subr.bf16.mxu0 0
    %1355 = vmatpush1.bf16.xpose.msra.mxu0 0
    %1356 = vmatprep.subr.bf16.mxu0 0
    %1357 = vmatpush1.bf16.xpose.msra.mxu0 0
    %1358 = vmatprep.subr.bf16.mxu0 0
    %1359 = vmatpush1.bf16.xpose.msra.mxu0 0
    %1360 = vmatprep.subr.bf16.mxu0 0
    %1361 = vmatpush1.bf16.xpose.msra.mxu0 0
    %1362 = vmatprep.subr.bf16.mxu0 0
    %1363 = vmatpush1.bf16.xpose.msra.mxu0 0
    %1364 = vmatprep.subr.bf16.mxu0 0
    %1365 = vmatpush1.bf16.xpose.msra.mxu0 0
    %1366 = vmatprep.subr.bf16.mxu0 0
    %1367 = vmatpush1.bf16.xpose.msra.mxu0 0
    %1368 = vmatprep.subr.bf16.mxu0 0
    %1369 = vmatpush1.bf16.xpose.msra.mxu0 0
    %1370 = vmatprep.subr.bf16.mxu0 0
    %1371 = vmatpush1.bf16.xpose.msra.mxu0 0
    %1372 = vmatprep.subr.bf16.mxu0 0
    %1373 = vmatpush1.bf16.xpose.msra.mxu0 0
    %1374 = vmatprep.subr.bf16.mxu0 0
    %1375 = vmatpush1.bf16.xpose.msra.mxu0 0
    %1376 = vmatprep.subr.bf16.mxu0 0
    %1377 = vmatpush1.bf16.xpose.msra.mxu0 0
    %1378 = vmatprep.subr.bf16.mxu0 0
    %1379 = vmatpush1.bf16.xpose.msra.mxu0 0
    %1380 = vmatprep.subr.bf16.mxu0 0
    %1381 = vmatpush1.bf16.xpose.msra.mxu0 0
    %1382 = vmatprep.subr.bf16.mxu0 0
    %1383 = vmatpush1.bf16.xpose.msra.mxu0 0
    %1384 = vmatprep.mubr.bf16.mxu0 0
    %1385 = vmatmul.mubr.bf16.gmra.mrb[0].mxu0 %v1347
    %v1386 = vpop.f32.mrb[0].mxu0
    %v1387 = vadd.f32 0.0, %v1386
    %v1388 = vpop.f32.mrb[0].mxu0
    %v1389 = vpop.f32.mrb[0].mxu0
    %v1390 = vadd.f32 0.0, %v1389
    %v1391 = vpop.f32.mrb[0].mxu0
    %1392 = vdwg.mxu0
    %v1394 = vsel %vm875, %v678, 0
    %v1397 = vsel %vm875, %v774, 0
    %1399 = vmatprep.subr.bf16.mxu0 0
    %1400 = vmatpush1.bf16.xpose.msra.mxu0 %v1397
    %1401 = vmatprep.subr.bf16.mxu0 0
    %1402 = vmatpush1.bf16.xpose.msra.mxu0 0
    %1403 = vmatprep.subr.bf16.mxu0 0
    %1404 = vmatpush1.bf16.xpose.msra.mxu0 0
    %1405 = vmatprep.subr.bf16.mxu0 0
    %1406 = vmatpush1.bf16.xpose.msra.mxu0 0
    %1407 = vmatprep.subr.bf16.mxu0 0
    %1408 = vmatpush1.bf16.xpose.msra.mxu0 0
    %1409 = vmatprep.subr.bf16.mxu0 0
    %1410 = vmatpush1.bf16.xpose.msra.mxu0 0
    %1411 = vmatprep.subr.bf16.mxu0 0
    %1412 = vmatpush1.bf16.xpose.msra.mxu0 0
    %1413 = vmatprep.subr.bf16.mxu0 0
    %1414 = vmatpush1.bf16.xpose.msra.mxu0 0
    %1415 = vmatprep.subr.bf16.mxu0 0
    %1416 = vmatpush1.bf16.xpose.msra.mxu0 0
    %1417 = vmatprep.subr.bf16.mxu0 0
    %1418 = vmatpush1.bf16.xpose.msra.mxu0 0
    %1419 = vmatprep.subr.bf16.mxu0 0
    %1420 = vmatpush1.bf16.xpose.msra.mxu0 0
    %1421 = vmatprep.subr.bf16.mxu0 0
    %1422 = vmatpush1.bf16.xpose.msra.mxu0 0
    %1423 = vmatprep.subr.bf16.mxu0 0
    %1424 = vmatpush1.bf16.xpose.msra.mxu0 0
    %1425 = vmatprep.subr.bf16.mxu0 0
    %1426 = vmatpush1.bf16.xpose.msra.mxu0 0
    %1427 = vmatprep.subr.bf16.mxu0 0
    %1428 = vmatpush1.bf16.xpose.msra.mxu0 0
    %1429 = vmatprep.subr.bf16.mxu0 0
    %1430 = vmatpush1.bf16.xpose.msra.mxu0 0
    %1431 = vmatprep.mubr.bf16.mxu0 0
    %1432 = vmatmul.mubr.bf16.gmra.mrb[0].mxu0 %v1394
    %v1433 = vpop.f32.mrb[0].mxu0
    %v1434 = vadd.f32 0.0, %v1433
    %v1435 = vpop.f32.mrb[0].mxu0
    %v1436 = vpop.f32.mrb[0].mxu0
    %v1437 = vadd.f32 0.0, %v1436
    %v1438 = vpop.f32.mrb[0].mxu0
    %1439 = vdwg.mxu0
    %v1441 = vsel %vm875, %v679, 0
    %v1444 = vsel %vm875, %v775, 0
    %1446 = vmatprep.subr.bf16.mxu0 0
    %1447 = vmatpush1.bf16.xpose.msra.mxu0 %v1444
    %1448 = vmatprep.subr.bf16.mxu0 0
    %1449 = vmatpush1.bf16.xpose.msra.mxu0 0
    %1450 = vmatprep.subr.bf16.mxu0 0
    %1451 = vmatpush1.bf16.xpose.msra.mxu0 0
    %1452 = vmatprep.subr.bf16.mxu0 0
    %1453 = vmatpush1.bf16.xpose.msra.mxu0 0
    %1454 = vmatprep.subr.bf16.mxu0 0
    %1455 = vmatpush1.bf16.xpose.msra.mxu0 0
    %1456 = vmatprep.subr.bf16.mxu0 0
    %1457 = vmatpush1.bf16.xpose.msra.mxu0 0
    %1458 = vmatprep.subr.bf16.mxu0 0
    %1459 = vmatpush1.bf16.xpose.msra.mxu0 0
    %1460 = vmatprep.subr.bf16.mxu0 0
    %1461 = vmatpush1.bf16.xpose.msra.mxu0 0
    %1462 = vmatprep.subr.bf16.mxu0 0
    %1463 = vmatpush1.bf16.xpose.msra.mxu0 0
    %1464 = vmatprep.subr.bf16.mxu0 0
    %1465 = vmatpush1.bf16.xpose.msra.mxu0 0
    %1466 = vmatprep.subr.bf16.mxu0 0
    %1467 = vmatpush1.bf16.xpose.msra.mxu0 0
    %1468 = vmatprep.subr.bf16.mxu0 0
    %1469 = vmatpush1.bf16.xpose.msra.mxu0 0
    %1470 = vmatprep.subr.bf16.mxu0 0
    %1471 = vmatpush1.bf16.xpose.msra.mxu0 0
    %1472 = vmatprep.subr.bf16.mxu0 0
    %1473 = vmatpush1.bf16.xpose.msra.mxu0 0
    %1474 = vmatprep.subr.bf16.mxu0 0
    %1475 = vmatpush1.bf16.xpose.msra.mxu0 0
    %1476 = vmatprep.subr.bf16.mxu0 0
    %1477 = vmatpush1.bf16.xpose.msra.mxu0 0
    %1478 = vmatprep.mubr.bf16.mxu0 0
    %1479 = vmatmul.mubr.bf16.gmra.mrb[0].mxu0 %v1441
    %v1480 = vpop.f32.mrb[0].mxu0
    %v1481 = vadd.f32 0.0, %v1480
    %v1482 = vpop.f32.mrb[0].mxu0
    %v1483 = vpop.f32.mrb[0].mxu0
    %v1484 = vadd.f32 0.0, %v1483
    %v1485 = vpop.f32.mrb[0].mxu0
    %1486 = vdwg.mxu0
    %v1488 = vsel %vm875, %v680, 0
    %v1491 = vsel %vm875, %v776, 0
    %1493 = vmatprep.subr.bf16.mxu0 0
    %1494 = vmatpush1.bf16.xpose.msra.mxu0 %v1491
    %1495 = vmatprep.subr.bf16.mxu0 0
    %1496 = vmatpush1.bf16.xpose.msra.mxu0 0
    %1497 = vmatprep.subr.bf16.mxu0 0
    %1498 = vmatpush1.bf16.xpose.msra.mxu0 0
    %1499 = vmatprep.subr.bf16.mxu0 0
    %1500 = vmatpush1.bf16.xpose.msra.mxu0 0
    %1501 = vmatprep.subr.bf16.mxu0 0
    %1502 = vmatpush1.bf16.xpose.msra.mxu0 0
    %1503 = vmatprep.subr.bf16.mxu0 0
    %1504 = vmatpush1.bf16.xpose.msra.mxu0 0
    %1505 = vmatprep.subr.bf16.mxu0 0
    %1506 = vmatpush1.bf16.xpose.msra.mxu0 0
    %1507 = vmatprep.subr.bf16.mxu0 0
    %1508 = vmatpush1.bf16.xpose.msra.mxu0 0
    %1509 = vmatprep.subr.bf16.mxu0 0
    %1510 = vmatpush1.bf16.xpose.msra.mxu0 0
    %1511 = vmatprep.subr.bf16.mxu0 0
    %1512 = vmatpush1.bf16.xpose.msra.mxu0 0
    %1513 = vmatprep.subr.bf16.mxu0 0
    %1514 = vmatpush1.bf16.xpose.msra.mxu0 0
    %1515 = vmatprep.subr.bf16.mxu0 0
    %1516 = vmatpush1.bf16.xpose.msra.mxu0 0
    %1517 = vmatprep.subr.bf16.mxu0 0
    %1518 = vmatpush1.bf16.xpose.msra.mxu0 0
    %1519 = vmatprep.subr.bf16.mxu0 0
    %1520 = vmatpush1.bf16.xpose.msra.mxu0 0
    %1521 = vmatprep.subr.bf16.mxu0 0
    %1522 = vmatpush1.bf16.xpose.msra.mxu0 0
    %1523 = vmatprep.subr.bf16.mxu0 0
    %1524 = vmatpush1.bf16.xpose.msra.mxu0 0
    %1525 = vmatprep.mubr.bf16.mxu0 0
    %1526 = vmatmul.mubr.bf16.gmra.mrb[0].mxu0 %v1488
    %v1527 = vpop.f32.mrb[0].mxu0
    %v1528 = vadd.f32 0.0, %v1527
    %v1529 = vpop.f32.mrb[0].mxu0
    %v1530 = vpop.f32.mrb[0].mxu0
    %v1531 = vadd.f32 0.0, %v1530
    %v1532 = vpop.f32.mrb[0].mxu0
    %1533 = vdwg.mxu0
    %v1535 = vsel %vm875, %v681, 0
    %v1538 = vsel %vm875, %v777, 0
    %1540 = vmatprep.subr.bf16.mxu0 0
    %1541 = vmatpush1.bf16.xpose.msra.mxu0 %v1538
    %1542 = vmatprep.subr.bf16.mxu0 0
    %1543 = vmatpush1.bf16.xpose.msra.mxu0 0
    %1544 = vmatprep.subr.bf16.mxu0 0
    %1545 = vmatpush1.bf16.xpose.msra.mxu0 0
    %1546 = vmatprep.subr.bf16.mxu0 0
    %1547 = vmatpush1.bf16.xpose.msra.mxu0 0
    %1548 = vmatprep.subr.bf16.mxu0 0
    %1549 = vmatpush1.bf16.xpose.msra.mxu0 0
    %1550 = vmatprep.subr.bf16.mxu0 0
    %1551 = vmatpush1.bf16.xpose.msra.mxu0 0
    %1552 = vmatprep.subr.bf16.mxu0 0
    %1553 = vmatpush1.bf16.xpose.msra.mxu0 0
    %1554 = vmatprep.subr.bf16.mxu0 0
    %1555 = vmatpush1.bf16.xpose.msra.mxu0 0
    %1556 = vmatprep.subr.bf16.mxu0 0
    %1557 = vmatpush1.bf16.xpose.msra.mxu0 0
    %1558 = vmatprep.subr.bf16.mxu0 0
    %1559 = vmatpush1.bf16.xpose.msra.mxu0 0
    %1560 = vmatprep.subr.bf16.mxu0 0
    %1561 = vmatpush1.bf16.xpose.msra.mxu0 0
    %1562 = vmatprep.subr.bf16.mxu0 0
    %1563 = vmatpush1.bf16.xpose.msra.mxu0 0
    %1564 = vmatprep.subr.bf16.mxu0 0
    %1565 = vmatpush1.bf16.xpose.msra.mxu0 0
    %1566 = vmatprep.subr.bf16.mxu0 0
    %1567 = vmatpush1.bf16.xpose.msra.mxu0 0
    %1568 = vmatprep.subr.bf16.mxu0 0
    %1569 = vmatpush1.bf16.xpose.msra.mxu0 0
    %1570 = vmatprep.subr.bf16.mxu0 0
    %1571 = vmatpush1.bf16.xpose.msra.mxu0 0
    %1572 = vmatprep.mubr.bf16.mxu0 0
    %1573 = vmatmul.mubr.bf16.gmra.mrb[0].mxu0 %v1535
    %v1574 = vpop.f32.mrb[0].mxu0
    %v1575 = vadd.f32 0.0, %v1574
    %v1576 = vpop.f32.mrb[0].mxu0
    %v1577 = vpop.f32.mrb[0].mxu0
    %v1578 = vadd.f32 0.0, %v1577
    %v1579 = vpop.f32.mrb[0].mxu0
    %1580 = vdwg.mxu0
    %v1582 = vsel %vm875, %v682, 0
    %v1585 = vsel %vm875, %v778, 0
    %1587 = vmatprep.subr.bf16.mxu0 0
    %1588 = vmatpush1.bf16.xpose.msra.mxu0 %v1585
    %1589 = vmatprep.subr.bf16.mxu0 0
    %1590 = vmatpush1.bf16.xpose.msra.mxu0 0
    %1591 = vmatprep.subr.bf16.mxu0 0
    %1592 = vmatpush1.bf16.xpose.msra.mxu0 0
    %1593 = vmatprep.subr.bf16.mxu0 0
    %1594 = vmatpush1.bf16.xpose.msra.mxu0 0
    %1595 = vmatprep.subr.bf16.mxu0 0
    %1596 = vmatpush1.bf16.xpose.msra.mxu0 0
    %1597 = vmatprep.subr.bf16.mxu0 0
    %1598 = vmatpush1.bf16.xpose.msra.mxu0 0
    %1599 = vmatprep.subr.bf16.mxu0 0
    %1600 = vmatpush1.bf16.xpose.msra.mxu0 0
    %1601 = vmatprep.subr.bf16.mxu0 0
    %1602 = vmatpush1.bf16.xpose.msra.mxu0 0
    %1603 = vmatprep.subr.bf16.mxu0 0
    %1604 = vmatpush1.bf16.xpose.msra.mxu0 0
    %1605 = vmatprep.subr.bf16.mxu0 0
    %1606 = vmatpush1.bf16.xpose.msra.mxu0 0
    %1607 = vmatprep.subr.bf16.mxu0 0
    %1608 = vmatpush1.bf16.xpose.msra.mxu0 0
    %1609 = vmatprep.subr.bf16.mxu0 0
    %1610 = vmatpush1.bf16.xpose.msra.mxu0 0
    %1611 = vmatprep.subr.bf16.mxu0 0
    %1612 = vmatpush1.bf16.xpose.msra.mxu0 0
    %1613 = vmatprep.subr.bf16.mxu0 0
    %1614 = vmatpush1.bf16.xpose.msra.mxu0 0
    %1615 = vmatprep.subr.bf16.mxu0 0
    %1616 = vmatpush1.bf16.xpose.msra.mxu0 0
    %1617 = vmatprep.subr.bf16.mxu0 0
    %1618 = vmatpush1.bf16.xpose.msra.mxu0 0
    %1619 = vmatprep.mubr.bf16.mxu0 0
    %1620 = vmatmul.mubr.bf16.gmra.mrb[0].mxu0 %v1582
    %v1621 = vpop.f32.mrb[0].mxu0
    %v1622 = vadd.f32 0.0, %v1621
    %v1623 = vpop.f32.mrb[0].mxu0
    %v1624 = vpop.f32.mrb[0].mxu0
    %v1625 = vadd.f32 0.0, %v1624
    %v1626 = vpop.f32.mrb[0].mxu0
    %1627 = vdwg.mxu0
    %v1628 = vld [vmem:[#allocation7] sm:$0xff]
    %v1629 = vld [vmem:[#allocation7 + $0x8] sm:$0xff]
    %v1630 = vld [vmem:[#allocation7 + $0x10] sm:$0xff]
    %v1631 = vld [vmem:[#allocation7 + $0x18] sm:$0xff]
    %v1632 = vld [vmem:[#allocation7 + $0x20] sm:$0xff]
    %v1633 = vld [vmem:[#allocation7 + $0x28] sm:$0xff]
    %v1634 = vld [vmem:[#allocation7 + $0x30] sm:$0xff]
    %v1635 = vld [vmem:[#allocation7 + $0x38] sm:$0xff]
    %v1636 = vadd.f32 %v917, %v1628
    %v1637 = vadd.f32 %v920, %v1629
    %v1638 = vadd.f32 %v964, %v1628
    %v1639 = vadd.f32 %v967, %v1629
    %v1640 = vadd.f32 %v1011, %v1628
    %v1641 = vadd.f32 %v1014, %v1629
    %v1642 = vadd.f32 %v1058, %v1628
    %v1643 = vadd.f32 %v1061, %v1629
    %v1644 = vadd.f32 %v1105, %v1630
    %v1645 = vadd.f32 %v1108, %v1631
    %v1646 = vadd.f32 %v1152, %v1630
    %v1647 = vadd.f32 %v1155, %v1631
    %v1648 = vadd.f32 %v1199, %v1630
    %v1649 = vadd.f32 %v1202, %v1631
    %v1650 = vadd.f32 %v1246, %v1630
    %v1651 = vadd.f32 %v1249, %v1631
    %v1652 = vadd.f32 %v1293, %v1632
    %v1653 = vadd.f32 %v1296, %v1633
    %v1654 = vadd.f32 %v1340, %v1632
    %v1655 = vadd.f32 %v1343, %v1633
    %v1656 = vadd.f32 %v1387, %v1632
    %v1657 = vadd.f32 %v1390, %v1633
    %v1658 = vadd.f32 %v1434, %v1632
    %v1659 = vadd.f32 %v1437, %v1633
    %v1660 = vadd.f32 %v1481, %v1634
    %v1661 = vadd.f32 %v1484, %v1635
    %v1662 = vadd.f32 %v1528, %v1634
    %v1663 = vadd.f32 %v1531, %v1635
    %v1664 = vadd.f32 %v1575, %v1634
    %v1665 = vadd.f32 %v1578, %v1635
    %v1666 = vadd.f32 %v1622, %v1634
    %v1667 = vadd.f32 %v1625, %v1635
    %v1672 = vlaneseq
    %v1673 = vshrl.u32 %v1672, 7
    %v1674 = vsub.s32 0, %v1673
    %v1675 = vrot.slane %v149, %v1674
    %v1676 = vlaneseq
    %v1677 = vshrl.u32 %v1676, 7
    %v1678 = vsub.s32 0, %v1677
    %v1679 = vrot.slane %v150, %v1678
    %v1680 = vlaneseq
    %v1681 = vshrl.u32 %v1680, 7
    %v1682 = vsub.s32 0, %v1681
    %v1683 = vrot.slane %v151, %v1682
    %v1684 = vlaneseq
    %v1685 = vshrl.u32 %v1684, 7
    %v1686 = vsub.s32 0, %v1685
    %v1687 = vrot.slane %v152, %v1686
    %v1692 = vadd.f32 %v1636, %v1675
    %v1693 = vadd.f32 %v1637, %v1675
    %v1694 = vadd.f32 %v1638, %v1679
    %v1695 = vadd.f32 %v1639, %v1679
    %v1696 = vadd.f32 %v1640, %v1683
    %v1697 = vadd.f32 %v1641, %v1683
    %v1698 = vadd.f32 %v1642, %v1687
    %v1699 = vadd.f32 %v1643, %v1687
    %v1700 = vadd.f32 %v1644, %v1675
    %v1701 = vadd.f32 %v1645, %v1675
    %v1702 = vadd.f32 %v1646, %v1679
    %v1703 = vadd.f32 %v1647, %v1679
    %v1704 = vadd.f32 %v1648, %v1683
    %v1705 = vadd.f32 %v1649, %v1683
    %v1706 = vadd.f32 %v1650, %v1687
    %v1707 = vadd.f32 %v1651, %v1687
    %v1708 = vadd.f32 %v1652, %v1675
    %v1709 = vadd.f32 %v1653, %v1675
    %v1710 = vadd.f32 %v1654, %v1679
    %v1711 = vadd.f32 %v1655, %v1679
    %v1712 = vadd.f32 %v1656, %v1683
    %v1713 = vadd.f32 %v1657, %v1683
    %v1714 = vadd.f32 %v1658, %v1687
    %v1715 = vadd.f32 %v1659, %v1687
    %v1716 = vadd.f32 %v1660, %v1675
    %v1717 = vadd.f32 %v1661, %v1675
    %v1718 = vadd.f32 %v1662, %v1679
    %v1719 = vadd.f32 %v1663, %v1679
    %v1720 = vadd.f32 %v1664, %v1683
    %v1721 = vadd.f32 %v1665, %v1683
    %v1722 = vadd.f32 %v1666, %v1687
    %v1723 = vadd.f32 %v1667, %v1687
    %vm1724 = vcmask 130048
    %v1725 = vsel %vm1724, %v1692, -inf
    %1726 = vmax.xlane.f32.xlu0 %v1725
    %v1727 = vpop.xlane.xlu0 %1726
    %v1728 = vsel %vm1724, %v1693, -inf
    %1729 = vmax.xlane.f32.xlu0 %v1728
    %v1730 = vpop.xlane.xlu0 %1729
    %v1731 = vsel %vm1724, %v1694, -inf
    %1732 = vmax.xlane.f32.xlu0 %v1731
    %v1733 = vpop.xlane.xlu0 %1732
    %v1734 = vsel %vm1724, %v1695, -inf
    %1735 = vmax.xlane.f32.xlu0 %v1734
    %v1736 = vpop.xlane.xlu0 %1735
    %v1737 = vsel %vm1724, %v1696, -inf
    %1738 = vmax.xlane.f32.xlu0 %v1737
    %v1739 = vpop.xlane.xlu0 %1738
    %v1740 = vsel %vm1724, %v1697, -inf
    %1741 = vmax.xlane.f32.xlu0 %v1740
    %v1742 = vpop.xlane.xlu0 %1741
    %v1743 = vsel %vm1724, %v1698, -inf
    %1744 = vmax.xlane.f32.xlu0 %v1743
    %v1745 = vpop.xlane.xlu0 %1744
    %v1746 = vsel %vm1724, %v1699, -inf
    %1747 = vmax.xlane.f32.xlu0 %v1746
    %v1748 = vpop.xlane.xlu0 %1747
    %v1749 = vsel %vm1724, %v1700, -inf
    %1750 = vmax.xlane.f32.xlu0 %v1749
    %v1751 = vpop.xlane.xlu0 %1750
    %v1752 = vsel %vm1724, %v1701, -inf
    %1753 = vmax.xlane.f32.xlu0 %v1752
    %v1754 = vpop.xlane.xlu0 %1753
    %v1755 = vsel %vm1724, %v1702, -inf
    %1756 = vmax.xlane.f32.xlu0 %v1755
    %v1757 = vpop.xlane.xlu0 %1756
    %v1758 = vsel %vm1724, %v1703, -inf
    %1759 = vmax.xlane.f32.xlu0 %v1758
    %v1760 = vpop.xlane.xlu0 %1759
    %v1761 = vsel %vm1724, %v1704, -inf
    %1762 = vmax.xlane.f32.xlu0 %v1761
    %v1763 = vpop.xlane.xlu0 %1762
    %v1764 = vsel %vm1724, %v1705, -inf
    %1765 = vmax.xlane.f32.xlu0 %v1764
    %v1766 = vpop.xlane.xlu0 %1765
    %v1767 = vsel %vm1724, %v1706, -inf
    %1768 = vmax.xlane.f32.xlu0 %v1767
    %v1769 = vpop.xlane.xlu0 %1768
    %v1770 = vsel %vm1724, %v1707, -inf
    %1771 = vmax.xlane.f32.xlu0 %v1770
    %v1772 = vpop.xlane.xlu0 %1771
    %v1773 = vsel %vm1724, %v1708, -inf
    %1774 = vmax.xlane.f32.xlu0 %v1773
    %v1775 = vpop.xlane.xlu0 %1774
    %v1776 = vsel %vm1724, %v1709, -inf
    %1777 = vmax.xlane.f32.xlu0 %v1776
    %v1778 = vpop.xlane.xlu0 %1777
    %v1779 = vsel %vm1724, %v1710, -inf
    %1780 = vmax.xlane.f32.xlu0 %v1779
    %v1781 = vpop.xlane.xlu0 %1780
    %v1782 = vsel %vm1724, %v1711, -inf
    %1783 = vmax.xlane.f32.xlu0 %v1782
    %v1784 = vpop.xlane.xlu0 %1783
    %v1785 = vsel %vm1724, %v1712, -inf
    %1786 = vmax.xlane.f32.xlu0 %v1785
    %v1787 = vpop.xlane.xlu0 %1786
    %v1788 = vsel %vm1724, %v1713, -inf
    %1789 = vmax.xlane.f32.xlu0 %v1788
    %v1790 = vpop.xlane.xlu0 %1789
    %v1791 = vsel %vm1724, %v1714, -inf
    %1792 = vmax.xlane.f32.xlu0 %v1791
    %v1793 = vpop.xlane.xlu0 %1792
    %v1794 = vsel %vm1724, %v1715, -inf
    %1795 = vmax.xlane.f32.xlu0 %v1794
    %v1796 = vpop.xlane.xlu0 %1795
    %v1797 = vsel %vm1724, %v1716, -inf
    %1798 = vmax.xlane.f32.xlu0 %v1797
    %v1799 = vpop.xlane.xlu0 %1798
    %v1800 = vsel %vm1724, %v1717, -inf
    %1801 = vmax.xlane.f32.xlu0 %v1800
    %v1802 = vpop.xlane.xlu0 %1801
    %v1803 = vsel %vm1724, %v1718, -inf
    %1804 = vmax.xlane.f32.xlu0 %v1803
    %v1805 = vpop.xlane.xlu0 %1804
    %v1806 = vsel %vm1724, %v1719, -inf
    %1807 = vmax.xlane.f32.xlu0 %v1806
    %v1808 = vpop.xlane.xlu0 %1807
    %v1809 = vsel %vm1724, %v1720, -inf
    %1810 = vmax.xlane.f32.xlu0 %v1809
    %v1811 = vpop.xlane.xlu0 %1810
    %v1812 = vsel %vm1724, %v1721, -inf
    %1813 = vmax.xlane.f32.xlu0 %v1812
    %v1814 = vpop.xlane.xlu0 %1813
    %v1815 = vsel %vm1724, %v1722, -inf
    %1816 = vmax.xlane.f32.xlu0 %v1815
    %v1817 = vpop.xlane.xlu0 %1816
    %v1818 = vsel %vm1724, %v1723, -inf
    %1819 = vmax.xlane.f32.xlu0 %v1818
    %v1820 = vpop.xlane.xlu0 %1819
    %v1821 = vsub.f32 %v1692, %v1727
    %v1822 = vsub.f32 %v1693, %v1730
    %v1823 = vsub.f32 %v1694, %v1733
    %v1824 = vsub.f32 %v1695, %v1736
    %v1825 = vsub.f32 %v1696, %v1739
    %v1826 = vsub.f32 %v1697, %v1742
    %v1827 = vsub.f32 %v1698, %v1745
    %v1828 = vsub.f32 %v1699, %v1748
    %v1829 = vsub.f32 %v1700, %v1751
    %v1830 = vsub.f32 %v1701, %v1754
    %v1831 = vsub.f32 %v1702, %v1757
    %v1832 = vsub.f32 %v1703, %v1760
    %v1833 = vsub.f32 %v1704, %v1763
    %v1834 = vsub.f32 %v1705, %v1766
    %v1835 = vsub.f32 %v1706, %v1769
    %v1836 = vsub.f32 %v1707, %v1772
    %v1837 = vsub.f32 %v1708, %v1775
    %v1838 = vsub.f32 %v1709, %v1778
    %v1839 = vsub.f32 %v1710, %v1781
    %v1840 = vsub.f32 %v1711, %v1784
    %v1841 = vsub.f32 %v1712, %v1787
    %v1842 = vsub.f32 %v1713, %v1790
    %v1843 = vsub.f32 %v1714, %v1793
    %v1844 = vsub.f32 %v1715, %v1796
    %v1845 = vsub.f32 %v1716, %v1799
    %v1846 = vsub.f32 %v1717, %v1802
    %v1847 = vsub.f32 %v1718, %v1805
    %v1848 = vsub.f32 %v1719, %v1808
    %v1849 = vsub.f32 %v1720, %v1811
    %v1850 = vsub.f32 %v1721, %v1814
    %v1851 = vsub.f32 %v1722, %v1817
    %v1852 = vsub.f32 %v1723, %v1820
    %v1853 = vmul.f32 %v1821, 1.442695
    %v1854 = vpow.pop %v1853
    %v1855 = vmul.f32 %v1822, 1.442695
    %v1856 = vpow.pop %v1855
    %v1857 = vmul.f32 %v1823, 1.442695
    %v1858 = vpow.pop %v1857
    %v1859 = vmul.f32 %v1824, 1.442695
    %v1860 = vpow.pop %v1859
    %v1861 = vmul.f32 %v1825, 1.442695
    %v1862 = vpow.pop %v1861
    %v1863 = vmul.f32 %v1826, 1.442695
    %v1864 = vpow.pop %v1863
    %v1865 = vmul.f32 %v1827, 1.442695
    %v1866 = vpow.pop %v1865
    %v1867 = vmul.f32 %v1828, 1.442695
    %v1868 = vpow.pop %v1867
    %v1869 = vmul.f32 %v1829, 1.442695
    %v1870 = vpow.pop %v1869
    %v1871 = vmul.f32 %v1830, 1.442695
    %v1872 = vpow.pop %v1871
    %v1873 = vmul.f32 %v1831, 1.442695
    %v1874 = vpow.pop %v1873
    %v1875 = vmul.f32 %v1832, 1.442695
    %v1876 = vpow.pop %v1875
    %v1877 = vmul.f32 %v1833, 1.442695
    %v1878 = vpow.pop %v1877
    %v1879 = vmul.f32 %v1834, 1.442695
    %v1880 = vpow.pop %v1879
    %v1881 = vmul.f32 %v1835, 1.442695
    %v1882 = vpow.pop %v1881
    %v1883 = vmul.f32 %v1836, 1.442695
    %v1884 = vpow.pop %v1883
    %v1885 = vmul.f32 %v1837, 1.442695
    %v1886 = vpow.pop %v1885
    %v1887 = vmul.f32 %v1838, 1.442695
    %v1888 = vpow.pop %v1887
    %v1889 = vmul.f32 %v1839, 1.442695
    %v1890 = vpow.pop %v1889
    %v1891 = vmul.f32 %v1840, 1.442695
    %v1892 = vpow.pop %v1891
    %v1893 = vmul.f32 %v1841, 1.442695
    %v1894 = vpow.pop %v1893
    %v1895 = vmul.f32 %v1842, 1.442695
    %v1896 = vpow.pop %v1895
    %v1897 = vmul.f32 %v1843, 1.442695
    %v1898 = vpow.pop %v1897
    %v1899 = vmul.f32 %v1844, 1.442695
    %v1900 = vpow.pop %v1899
    %v1901 = vmul.f32 %v1845, 1.442695
    %v1902 = vpow.pop %v1901
    %v1903 = vmul.f32 %v1846, 1.442695
    %v1904 = vpow.pop %v1903
    %v1905 = vmul.f32 %v1847, 1.442695
    %v1906 = vpow.pop %v1905
    %v1907 = vmul.f32 %v1848, 1.442695
    %v1908 = vpow.pop %v1907
    %v1909 = vmul.f32 %v1849, 1.442695
    %v1910 = vpow.pop %v1909
    %v1911 = vmul.f32 %v1850, 1.442695
    %v1912 = vpow.pop %v1911
    %v1913 = vmul.f32 %v1851, 1.442695
    %v1914 = vpow.pop %v1913
    %v1915 = vmul.f32 %v1852, 1.442695
    %v1916 = vpow.pop %v1915
    %v1917 = vsel %vm1724, %v1854, 0.0
    %1918 = vadd.xlane.f32.xlu0 %v1917
    %v1919 = vpop.xlane.xlu0 %1918
    %v1920 = vsel %vm1724, %v1856, 0.0
    %1921 = vadd.xlane.f32.xlu0 %v1920
    %v1922 = vpop.xlane.xlu0 %1921
    %v1923 = vsel %vm1724, %v1858, 0.0
    %1924 = vadd.xlane.f32.xlu0 %v1923
    %v1925 = vpop.xlane.xlu0 %1924
    %v1926 = vsel %vm1724, %v1860, 0.0
    %1927 = vadd.xlane.f32.xlu0 %v1926
    %v1928 = vpop.xlane.xlu0 %1927
    %v1929 = vsel %vm1724, %v1862, 0.0
    %1930 = vadd.xlane.f32.xlu0 %v1929
    %v1931 = vpop.xlane.xlu0 %1930
    %v1932 = vsel %vm1724, %v1864, 0.0
    %1933 = vadd.xlane.f32.xlu0 %v1932
    %v1934 = vpop.xlane.xlu0 %1933
    %v1935 = vsel %vm1724, %v1866, 0.0
    %1936 = vadd.xlane.f32.xlu0 %v1935
    %v1937 = vpop.xlane.xlu0 %1936
    %v1938 = vsel %vm1724, %v1868, 0.0
    %1939 = vadd.xlane.f32.xlu0 %v1938
    %v1940 = vpop.xlane.xlu0 %1939
    %v1941 = vsel %vm1724, %v1870, 0.0
    %1942 = vadd.xlane.f32.xlu0 %v1941
    %v1943 = vpop.xlane.xlu0 %1942
    %v1944 = vsel %vm1724, %v1872, 0.0
    %1945 = vadd.xlane.f32.xlu0 %v1944
    %v1946 = vpop.xlane.xlu0 %1945
    %v1947 = vsel %vm1724, %v1874, 0.0
    %1948 = vadd.xlane.f32.xlu0 %v1947
    %v1949 = vpop.xlane.xlu0 %1948
    %v1950 = vsel %vm1724, %v1876, 0.0
    %1951 = vadd.xlane.f32.xlu0 %v1950
    %v1952 = vpop.xlane.xlu0 %1951
    %v1953 = vsel %vm1724, %v1878, 0.0
    %1954 = vadd.xlane.f32.xlu0 %v1953
    %v1955 = vpop.xlane.xlu0 %1954
    %v1956 = vsel %vm1724, %v1880, 0.0
    %1957 = vadd.xlane.f32.xlu0 %v1956
    %v1958 = vpop.xlane.xlu0 %1957
    %v1959 = vsel %vm1724, %v1882, 0.0
    %1960 = vadd.xlane.f32.xlu0 %v1959
    %v1961 = vpop.xlane.xlu0 %1960
    %v1962 = vsel %vm1724, %v1884, 0.0
    %1963 = vadd.xlane.f32.xlu0 %v1962
    %v1964 = vpop.xlane.xlu0 %1963
    %v1965 = vsel %vm1724, %v1886, 0.0
    %1966 = vadd.xlane.f32.xlu0 %v1965
    %v1967 = vpop.xlane.xlu0 %1966
    %v1968 = vsel %vm1724, %v1888, 0.0
    %1969 = vadd.xlane.f32.xlu0 %v1968
    %v1970 = vpop.xlane.xlu0 %1969
    %v1971 = vsel %vm1724, %v1890, 0.0
    %1972 = vadd.xlane.f32.xlu0 %v1971
    %v1973 = vpop.xlane.xlu0 %1972
    %v1974 = vsel %vm1724, %v1892, 0.0
    %1975 = vadd.xlane.f32.xlu0 %v1974
    %v1976 = vpop.xlane.xlu0 %1975
    %v1977 = vsel %vm1724, %v1894, 0.0
    %1978 = vadd.xlane.f32.xlu0 %v1977
    %v1979 = vpop.xlane.xlu0 %1978
    %v1980 = vsel %vm1724, %v1896, 0.0
    %1981 = vadd.xlane.f32.xlu0 %v1980
    %v1982 = vpop.xlane.xlu0 %1981
    %v1983 = vsel %vm1724, %v1898, 0.0
    %1984 = vadd.xlane.f32.xlu0 %v1983
    %v1985 = vpop.xlane.xlu0 %1984
    %v1986 = vsel %vm1724, %v1900, 0.0
    %1987 = vadd.xlane.f32.xlu0 %v1986
    %v1988 = vpop.xlane.xlu0 %1987
    %v1989 = vsel %vm1724, %v1902, 0.0
    %1990 = vadd.xlane.f32.xlu0 %v1989
    %v1991 = vpop.xlane.xlu0 %1990
    %v1992 = vsel %vm1724, %v1904, 0.0
    %1993 = vadd.xlane.f32.xlu0 %v1992
    %v1994 = vpop.xlane.xlu0 %1993
    %v1995 = vsel %vm1724, %v1906, 0.0
    %1996 = vadd.xlane.f32.xlu0 %v1995
    %v1997 = vpop.xlane.xlu0 %1996
    %v1998 = vsel %vm1724, %v1908, 0.0
    %1999 = vadd.xlane.f32.xlu0 %v1998
    %v2000 = vpop.xlane.xlu0 %1999
    %v2001 = vsel %vm1724, %v1910, 0.0
    %2002 = vadd.xlane.f32.xlu0 %v2001
    %v2003 = vpop.xlane.xlu0 %2002
    %v2004 = vsel %vm1724, %v1912, 0.0
    %2005 = vadd.xlane.f32.xlu0 %v2004
    %v2006 = vpop.xlane.xlu0 %2005
    %v2007 = vsel %vm1724, %v1914, 0.0
    %2008 = vadd.xlane.f32.xlu0 %v2007
    %v2009 = vpop.xlane.xlu0 %2008
    %v2010 = vsel %vm1724, %v1916, 0.0
    %2011 = vadd.xlane.f32.xlu0 %v2010
    %v2012 = vpop.xlane.xlu0 %2011
    %v2013 = vrcp.pop %v1919
    %v2014 = vrcp.pop %v1922
    %v2015 = vrcp.pop %v1925
    %v2016 = vrcp.pop %v1928
    %v2017 = vrcp.pop %v1931
    %v2018 = vrcp.pop %v1934
    %v2019 = vrcp.pop %v1937
    %v2020 = vrcp.pop %v1940
    %v2021 = vrcp.pop %v1943
    %v2022 = vrcp.pop %v1946
    %v2023 = vrcp.pop %v1949
    %v2024 = vrcp.pop %v1952
    %v2025 = vrcp.pop %v1955
    %v2026 = vrcp.pop %v1958
    %v2027 = vrcp.pop %v1961
    %v2028 = vrcp.pop %v1964
    %v2029 = vrcp.pop %v1967
    %v2030 = vrcp.pop %v1970
    %v2031 = vrcp.pop %v1973
    %v2032 = vrcp.pop %v1976
    %v2033 = vrcp.pop %v1979
    %v2034 = vrcp.pop %v1982
    %v2035 = vrcp.pop %v1985
    %v2036 = vrcp.pop %v1988
    %v2037 = vrcp.pop %v1991
    %v2038 = vrcp.pop %v1994
    %v2039 = vrcp.pop %v1997
    %v2040 = vrcp.pop %v2000
    %v2041 = vrcp.pop %v2003
    %v2042 = vrcp.pop %v2006
    %v2043 = vrcp.pop %v2009
    %v2044 = vrcp.pop %v2012
    %v2045 = vmul.f32 %v1854, %v2013
    %v2046 = vmul.f32 %v1856, %v2014
    %v2047 = vmul.f32 %v1858, %v2015
    %v2048 = vmul.f32 %v1860, %v2016
    %v2049 = vmul.f32 %v1862, %v2017
    %v2050 = vmul.f32 %v1864, %v2018
    %v2051 = vmul.f32 %v1866, %v2019
    %v2052 = vmul.f32 %v1868, %v2020
    %v2053 = vmul.f32 %v1870, %v2021
    %v2054 = vmul.f32 %v1872, %v2022
    %v2055 = vmul.f32 %v1874, %v2023
    %v2056 = vmul.f32 %v1876, %v2024
    %v2057 = vmul.f32 %v1878, %v2025
    %v2058 = vmul.f32 %v1880, %v2026
    %v2059 = vmul.f32 %v1882, %v2027
    %v2060 = vmul.f32 %v1884, %v2028
    %v2061 = vmul.f32 %v1886, %v2029
    %v2062 = vmul.f32 %v1888, %v2030
    %v2063 = vmul.f32 %v1890, %v2031
    %v2064 = vmul.f32 %v1892, %v2032
    %v2065 = vmul.f32 %v1894, %v2033
    %v2066 = vmul.f32 %v1896, %v2034
    %v2067 = vmul.f32 %v1898, %v2035
    %v2068 = vmul.f32 %v1900, %v2036
    %v2069 = vmul.f32 %v1902, %v2037
    %v2070 = vmul.f32 %v1904, %v2038
    %v2071 = vmul.f32 %v1906, %v2039
    %v2072 = vmul.f32 %v1908, %v2040
    %v2073 = vmul.f32 %v1910, %v2041
    %v2074 = vmul.f32 %v1912, %v2042
    %v2075 = vmul.f32 %v1914, %v2043
    %v2076 = vmul.f32 %v1916, %v2044
    %v2077 = vpack.c.bf16 %v2046, %v2045
    %v2078 = vpack.c.bf16 %v2048, %v2047
    %v2079 = vpack.c.bf16 %v2050, %v2049
    %v2080 = vpack.c.bf16 %v2052, %v2051
    %v2081 = vpack.c.bf16 %v2054, %v2053
    %v2082 = vpack.c.bf16 %v2056, %v2055
    %v2083 = vpack.c.bf16 %v2058, %v2057
    %v2084 = vpack.c.bf16 %v2060, %v2059
    %v2085 = vpack.c.bf16 %v2062, %v2061
    %v2086 = vpack.c.bf16 %v2064, %v2063
    %v2087 = vpack.c.bf16 %v2066, %v2065
    %v2088 = vpack.c.bf16 %v2068, %v2067
    %v2089 = vpack.c.bf16 %v2070, %v2069
    %v2090 = vpack.c.bf16 %v2072, %v2071
    %v2091 = vpack.c.bf16 %v2074, %v2073
    %v2092 = vpack.c.bf16 %v2076, %v2075
    %v2094 = vsel %vm1724, %v2077, 0
    %2096 = vmatprep.subr.bf16.mxu0 0
    %2097 = vmatpush1.bf16.msra.mxu0 %v859
    %2098 = vmatprep.subr.bf16.mxu0 0
    %2099 = vmatpush1.bf16.msra.mxu0 0
    %2100 = vmatprep.subr.bf16.mxu0 0
    %2101 = vmatpush1.bf16.msra.mxu0 0
    %2102 = vmatprep.subr.bf16.mxu0 0
    %2103 = vmatpush1.bf16.msra.mxu0 0
    %2104 = vmatprep.subr.bf16.mxu0 0
    %2105 = vmatpush1.bf16.msra.mxu0 0
    %2106 = vmatprep.subr.bf16.mxu0 0
    %2107 = vmatpush1.bf16.msra.mxu0 0
    %2108 = vmatprep.subr.bf16.mxu0 0
    %2109 = vmatpush1.bf16.msra.mxu0 0
    %2110 = vmatprep.subr.bf16.mxu0 0
    %2111 = vmatpush1.bf16.msra.mxu0 0
    %2112 = vmatprep.subr.bf16.mxu0 0
    %2113 = vmatpush1.bf16.msra.mxu0 0
    %2114 = vmatprep.subr.bf16.mxu0 0
    %2115 = vmatpush1.bf16.msra.mxu0 0
    %2116 = vmatprep.subr.bf16.mxu0 0
    %2117 = vmatpush1.bf16.msra.mxu0 0
    %2118 = vmatprep.subr.bf16.mxu0 0
    %2119 = vmatpush1.bf16.msra.mxu0 0
    %2120 = vmatprep.subr.bf16.mxu0 0
    %2121 = vmatpush1.bf16.msra.mxu0 0
    %2122 = vmatprep.subr.bf16.mxu0 0
    %2123 = vmatpush1.bf16.msra.mxu0 0
    %2124 = vmatprep.subr.bf16.mxu0 0
    %2125 = vmatpush1.bf16.msra.mxu0 0
    %2126 = vmatprep.subr.bf16.mxu0 0
    %2127 = vmatpush1.bf16.msra.mxu0 0
    %2128 = vmatprep.mubr.bf16.mxu0 0
    %2129 = vmatmul.mubr.bf16.gmra.mrb[0].mxu0 %v2094
    %v2130 = vpop.f32.mrb[0].mxu0
    %v2131 = vadd.f32 0.0, %v2130
    %v2132 = vpop.f32.mrb[0].mxu0
    %v2133 = vpop.f32.mrb[0].mxu0
    %v2134 = vadd.f32 0.0, %v2133
    %v2135 = vpop.f32.mrb[0].mxu0
    %2136 = vdwg.mxu0
    %v2138 = vsel %vm1724, %v2078, 0
    %2140 = vmatprep.subr.bf16.mxu0 0
    %2141 = vmatpush1.bf16.msra.mxu0 %v860
    %2142 = vmatprep.subr.bf16.mxu0 0
    %2143 = vmatpush1.bf16.msra.mxu0 0
    %2144 = vmatprep.subr.bf16.mxu0 0
    %2145 = vmatpush1.bf16.msra.mxu0 0
    %2146 = vmatprep.subr.bf16.mxu0 0
    %2147 = vmatpush1.bf16.msra.mxu0 0
    %2148 = vmatprep.subr.bf16.mxu0 0
    %2149 = vmatpush1.bf16.msra.mxu0 0
    %2150 = vmatprep.subr.bf16.mxu0 0
    %2151 = vmatpush1.bf16.msra.mxu0 0
    %2152 = vmatprep.subr.bf16.mxu0 0
    %2153 = vmatpush1.bf16.msra.mxu0 0
    %2154 = vmatprep.subr.bf16.mxu0 0
    %2155 = vmatpush1.bf16.msra.mxu0 0
    %2156 = vmatprep.subr.bf16.mxu0 0
    %2157 = vmatpush1.bf16.msra.mxu0 0
    %2158 = vmatprep.subr.bf16.mxu0 0
    %2159 = vmatpush1.bf16.msra.mxu0 0
    %2160 = vmatprep.subr.bf16.mxu0 0
    %2161 = vmatpush1.bf16.msra.mxu0 0
    %2162 = vmatprep.subr.bf16.mxu0 0
    %2163 = vmatpush1.bf16.msra.mxu0 0
    %2164 = vmatprep.subr.bf16.mxu0 0
    %2165 = vmatpush1.bf16.msra.mxu0 0
    %2166 = vmatprep.subr.bf16.mxu0 0
    %2167 = vmatpush1.bf16.msra.mxu0 0
    %2168 = vmatprep.subr.bf16.mxu0 0
    %2169 = vmatpush1.bf16.msra.mxu0 0
    %2170 = vmatprep.subr.bf16.mxu0 0
    %2171 = vmatpush1.bf16.msra.mxu0 0
    %2172 = vmatprep.mubr.bf16.mxu0 0
    %2173 = vmatmul.mubr.bf16.gmra.mrb[0].mxu0 %v2138
    %v2174 = vpop.f32.mrb[0].mxu0
    %v2175 = vadd.f32 0.0, %v2174
    %v2176 = vpop.f32.mrb[0].mxu0
    %v2177 = vpop.f32.mrb[0].mxu0
    %v2178 = vadd.f32 0.0, %v2177
    %v2179 = vpop.f32.mrb[0].mxu0
    %2180 = vdwg.mxu0
    %v2182 = vsel %vm1724, %v2079, 0
    %2184 = vmatprep.subr.bf16.mxu0 0
    %2185 = vmatpush1.bf16.msra.mxu0 %v861
    %2186 = vmatprep.subr.bf16.mxu0 0
    %2187 = vmatpush1.bf16.msra.mxu0 0
    %2188 = vmatprep.subr.bf16.mxu0 0
    %2189 = vmatpush1.bf16.msra.mxu0 0
    %2190 = vmatprep.subr.bf16.mxu0 0
    %2191 = vmatpush1.bf16.msra.mxu0 0
    %2192 = vmatprep.subr.bf16.mxu0 0
    %2193 = vmatpush1.bf16.msra.mxu0 0
    %2194 = vmatprep.subr.bf16.mxu0 0
    %2195 = vmatpush1.bf16.msra.mxu0 0
    %2196 = vmatprep.subr.bf16.mxu0 0
    %2197 = vmatpush1.bf16.msra.mxu0 0
    %2198 = vmatprep.subr.bf16.mxu0 0
    %2199 = vmatpush1.bf16.msra.mxu0 0
    %2200 = vmatprep.subr.bf16.mxu0 0
    %2201 = vmatpush1.bf16.msra.mxu0 0
    %2202 = vmatprep.subr.bf16.mxu0 0
    %2203 = vmatpush1.bf16.msra.mxu0 0
    %2204 = vmatprep.subr.bf16.mxu0 0
    %2205 = vmatpush1.bf16.msra.mxu0 0
    %2206 = vmatprep.subr.bf16.mxu0 0
    %2207 = vmatpush1.bf16.msra.mxu0 0
    %2208 = vmatprep.subr.bf16.mxu0 0
    %2209 = vmatpush1.bf16.msra.mxu0 0
    %2210 = vmatprep.subr.bf16.mxu0 0
    %2211 = vmatpush1.bf16.msra.mxu0 0
    %2212 = vmatprep.subr.bf16.mxu0 0
    %2213 = vmatpush1.bf16.msra.mxu0 0
    %2214 = vmatprep.subr.bf16.mxu0 0
    %2215 = vmatpush1.bf16.msra.mxu0 0
    %2216 = vmatprep.mubr.bf16.mxu0 0
    %2217 = vmatmul.mubr.bf16.gmra.mrb[0].mxu0 %v2182
    %v2218 = vpop.f32.mrb[0].mxu0
    %v2219 = vadd.f32 0.0, %v2218
    %v2220 = vpop.f32.mrb[0].mxu0
    %v2221 = vpop.f32.mrb[0].mxu0
    %v2222 = vadd.f32 0.0, %v2221
    %v2223 = vpop.f32.mrb[0].mxu0
    %2224 = vdwg.mxu0
    %v2226 = vsel %vm1724, %v2080, 0
    %2228 = vmatprep.subr.bf16.mxu0 0
    %2229 = vmatpush1.bf16.msra.mxu0 %v862
    %2230 = vmatprep.subr.bf16.mxu0 0
    %2231 = vmatpush1.bf16.msra.mxu0 0
    %2232 = vmatprep.subr.bf16.mxu0 0
    %2233 = vmatpush1.bf16.msra.mxu0 0
    %2234 = vmatprep.subr.bf16.mxu0 0
    %2235 = vmatpush1.bf16.msra.mxu0 0
    %2236 = vmatprep.subr.bf16.mxu0 0
    %2237 = vmatpush1.bf16.msra.mxu0 0
    %2238 = vmatprep.subr.bf16.mxu0 0
    %2239 = vmatpush1.bf16.msra.mxu0 0
    %2240 = vmatprep.subr.bf16.mxu0 0
    %2241 = vmatpush1.bf16.msra.mxu0 0
    %2242 = vmatprep.subr.bf16.mxu0 0
    %2243 = vmatpush1.bf16.msra.mxu0 0
    %2244 = vmatprep.subr.bf16.mxu0 0
    %2245 = vmatpush1.bf16.msra.mxu0 0
    %2246 = vmatprep.subr.bf16.mxu0 0
    %2247 = vmatpush1.bf16.msra.mxu0 0
    %2248 = vmatprep.subr.bf16.mxu0 0
    %2249 = vmatpush1.bf16.msra.mxu0 0
    %2250 = vmatprep.subr.bf16.mxu0 0
    %2251 = vmatpush1.bf16.msra.mxu0 0
    %2252 = vmatprep.subr.bf16.mxu0 0
    %2253 = vmatpush1.bf16.msra.mxu0 0
    %2254 = vmatprep.subr.bf16.mxu0 0
    %2255 = vmatpush1.bf16.msra.mxu0 0
    %2256 = vmatprep.subr.bf16.mxu0 0
    %2257 = vmatpush1.bf16.msra.mxu0 0
    %2258 = vmatprep.subr.bf16.mxu0 0
    %2259 = vmatpush1.bf16.msra.mxu0 0
    %2260 = vmatprep.mubr.bf16.mxu0 0
    %2261 = vmatmul.mubr.bf16.gmra.mrb[0].mxu0 %v2226
    %v2262 = vpop.f32.mrb[0].mxu0
    %v2263 = vadd.f32 0.0, %v2262
    %v2264 = vpop.f32.mrb[0].mxu0
    %v2265 = vpop.f32.mrb[0].mxu0
    %v2266 = vadd.f32 0.0, %v2265
    %v2267 = vpop.f32.mrb[0].mxu0
    %2268 = vdwg.mxu0
    %v2270 = vsel %vm1724, %v2081, 0
    %2272 = vmatprep.subr.bf16.mxu0 0
    %2273 = vmatpush1.bf16.msra.mxu0 %v863
    %2274 = vmatprep.subr.bf16.mxu0 0
    %2275 = vmatpush1.bf16.msra.mxu0 0
    %2276 = vmatprep.subr.bf16.mxu0 0
    %2277 = vmatpush1.bf16.msra.mxu0 0
    %2278 = vmatprep.subr.bf16.mxu0 0
    %2279 = vmatpush1.bf16.msra.mxu0 0
    %2280 = vmatprep.subr.bf16.mxu0 0
    %2281 = vmatpush1.bf16.msra.mxu0 0
    %2282 = vmatprep.subr.bf16.mxu0 0
    %2283 = vmatpush1.bf16.msra.mxu0 0
    %2284 = vmatprep.subr.bf16.mxu0 0
    %2285 = vmatpush1.bf16.msra.mxu0 0
    %2286 = vmatprep.subr.bf16.mxu0 0
    %2287 = vmatpush1.bf16.msra.mxu0 0
    %2288 = vmatprep.subr.bf16.mxu0 0
    %2289 = vmatpush1.bf16.msra.mxu0 0
    %2290 = vmatprep.subr.bf16.mxu0 0
    %2291 = vmatpush1.bf16.msra.mxu0 0
    %2292 = vmatprep.subr.bf16.mxu0 0
    %2293 = vmatpush1.bf16.msra.mxu0 0
    %2294 = vmatprep.subr.bf16.mxu0 0
    %2295 = vmatpush1.bf16.msra.mxu0 0
    %2296 = vmatprep.subr.bf16.mxu0 0
    %2297 = vmatpush1.bf16.msra.mxu0 0
    %2298 = vmatprep.subr.bf16.mxu0 0
    %2299 = vmatpush1.bf16.msra.mxu0 0
    %2300 = vmatprep.subr.bf16.mxu0 0
    %2301 = vmatpush1.bf16.msra.mxu0 0
    %2302 = vmatprep.subr.bf16.mxu0 0
    %2303 = vmatpush1.bf16.msra.mxu0 0
    %2304 = vmatprep.mubr.bf16.mxu0 0
    %2305 = vmatmul.mubr.bf16.gmra.mrb[0].mxu0 %v2270
    %v2306 = vpop.f32.mrb[0].mxu0
    %v2307 = vadd.f32 0.0, %v2306
    %v2308 = vpop.f32.mrb[0].mxu0
    %v2309 = vpop.f32.mrb[0].mxu0
    %v2310 = vadd.f32 0.0, %v2309
    %v2311 = vpop.f32.mrb[0].mxu0
    %2312 = vdwg.mxu0
    %v2314 = vsel %vm1724, %v2082, 0
    %2316 = vmatprep.subr.bf16.mxu0 0
    %2317 = vmatpush1.bf16.msra.mxu0 %v864
    %2318 = vmatprep.subr.bf16.mxu0 0
    %2319 = vmatpush1.bf16.msra.mxu0 0
    %2320 = vmatprep.subr.bf16.mxu0 0
    %2321 = vmatpush1.bf16.msra.mxu0 0
    %2322 = vmatprep.subr.bf16.mxu0 0
    %2323 = vmatpush1.bf16.msra.mxu0 0
    %2324 = vmatprep.subr.bf16.mxu0 0
    %2325 = vmatpush1.bf16.msra.mxu0 0
    %2326 = vmatprep.subr.bf16.mxu0 0
    %2327 = vmatpush1.bf16.msra.mxu0 0
    %2328 = vmatprep.subr.bf16.mxu0 0
    %2329 = vmatpush1.bf16.msra.mxu0 0
    %2330 = vmatprep.subr.bf16.mxu0 0
    %2331 = vmatpush1.bf16.msra.mxu0 0
    %2332 = vmatprep.subr.bf16.mxu0 0
    %2333 = vmatpush1.bf16.msra.mxu0 0
    %2334 = vmatprep.subr.bf16.mxu0 0
    %2335 = vmatpush1.bf16.msra.mxu0 0
    %2336 = vmatprep.subr.bf16.mxu0 0
    %2337 = vmatpush1.bf16.msra.mxu0 0
    %2338 = vmatprep.subr.bf16.mxu0 0
    %2339 = vmatpush1.bf16.msra.mxu0 0
    %2340 = vmatprep.subr.bf16.mxu0 0
    %2341 = vmatpush1.bf16.msra.mxu0 0
    %2342 = vmatprep.subr.bf16.mxu0 0
    %2343 = vmatpush1.bf16.msra.mxu0 0
    %2344 = vmatprep.subr.bf16.mxu0 0
    %2345 = vmatpush1.bf16.msra.mxu0 0
    %2346 = vmatprep.subr.bf16.mxu0 0
    %2347 = vmatpush1.bf16.msra.mxu0 0
    %2348 = vmatprep.mubr.bf16.mxu0 0
    %2349 = vmatmul.mubr.bf16.gmra.mrb[0].mxu0 %v2314
    %v2350 = vpop.f32.mrb[0].mxu0
    %v2351 = vadd.f32 0.0, %v2350
    %v2352 = vpop.f32.mrb[0].mxu0
    %v2353 = vpop.f32.mrb[0].mxu0
    %v2354 = vadd.f32 0.0, %v2353
    %v2355 = vpop.f32.mrb[0].mxu0
    %2356 = vdwg.mxu0
    %v2358 = vsel %vm1724, %v2083, 0
    %2360 = vmatprep.subr.bf16.mxu0 0
    %2361 = vmatpush1.bf16.msra.mxu0 %v865
    %2362 = vmatprep.subr.bf16.mxu0 0
    %2363 = vmatpush1.bf16.msra.mxu0 0
    %2364 = vmatprep.subr.bf16.mxu0 0
    %2365 = vmatpush1.bf16.msra.mxu0 0
    %2366 = vmatprep.subr.bf16.mxu0 0
    %2367 = vmatpush1.bf16.msra.mxu0 0
    %2368 = vmatprep.subr.bf16.mxu0 0
    %2369 = vmatpush1.bf16.msra.mxu0 0
    %2370 = vmatprep.subr.bf16.mxu0 0
    %2371 = vmatpush1.bf16.msra.mxu0 0
    %2372 = vmatprep.subr.bf16.mxu0 0
    %2373 = vmatpush1.bf16.msra.mxu0 0
    %2374 = vmatprep.subr.bf16.mxu0 0
    %2375 = vmatpush1.bf16.msra.mxu0 0
    %2376 = vmatprep.subr.bf16.mxu0 0
    %2377 = vmatpush1.bf16.msra.mxu0 0
    %2378 = vmatprep.subr.bf16.mxu0 0
    %2379 = vmatpush1.bf16.msra.mxu0 0
    %2380 = vmatprep.subr.bf16.mxu0 0
    %2381 = vmatpush1.bf16.msra.mxu0 0
    %2382 = vmatprep.subr.bf16.mxu0 0
    %2383 = vmatpush1.bf16.msra.mxu0 0
    %2384 = vmatprep.subr.bf16.mxu0 0
    %2385 = vmatpush1.bf16.msra.mxu0 0
    %2386 = vmatprep.subr.bf16.mxu0 0
    %2387 = vmatpush1.bf16.msra.mxu0 0
    %2388 = vmatprep.subr.bf16.mxu0 0
    %2389 = vmatpush1.bf16.msra.mxu0 0
    %2390 = vmatprep.subr.bf16.mxu0 0
    %2391 = vmatpush1.bf16.msra.mxu0 0
    %2392 = vmatprep.mubr.bf16.mxu0 0
    %2393 = vmatmul.mubr.bf16.gmra.mrb[0].mxu0 %v2358
    %v2394 = vpop.f32.mrb[0].mxu0
    %v2395 = vadd.f32 0.0, %v2394
    %v2396 = vpop.f32.mrb[0].mxu0
    %v2397 = vpop.f32.mrb[0].mxu0
    %v2398 = vadd.f32 0.0, %v2397
    %v2399 = vpop.f32.mrb[0].mxu0
    %2400 = vdwg.mxu0
    %v2402 = vsel %vm1724, %v2084, 0
    %2404 = vmatprep.subr.bf16.mxu0 0
    %2405 = vmatpush1.bf16.msra.mxu0 %v866
    %2406 = vmatprep.subr.bf16.mxu0 0
    %2407 = vmatpush1.bf16.msra.mxu0 0
    %2408 = vmatprep.subr.bf16.mxu0 0
    %2409 = vmatpush1.bf16.msra.mxu0 0
    %2410 = vmatprep.subr.bf16.mxu0 0
    %2411 = vmatpush1.bf16.msra.mxu0 0
    %2412 = vmatprep.subr.bf16.mxu0 0
    %2413 = vmatpush1.bf16.msra.mxu0 0
    %2414 = vmatprep.subr.bf16.mxu0 0
    %2415 = vmatpush1.bf16.msra.mxu0 0
    %2416 = vmatprep.subr.bf16.mxu0 0
    %2417 = vmatpush1.bf16.msra.mxu0 0
    %2418 = vmatprep.subr.bf16.mxu0 0
    %2419 = vmatpush1.bf16.msra.mxu0 0
    %2420 = vmatprep.subr.bf16.mxu0 0
    %2421 = vmatpush1.bf16.msra.mxu0 0
    %2422 = vmatprep.subr.bf16.mxu0 0
    %2423 = vmatpush1.bf16.msra.mxu0 0
    %2424 = vmatprep.subr.bf16.mxu0 0
    %2425 = vmatpush1.bf16.msra.mxu0 0
    %2426 = vmatprep.subr.bf16.mxu0 0
    %2427 = vmatpush1.bf16.msra.mxu0 0
    %2428 = vmatprep.subr.bf16.mxu0 0
    %2429 = vmatpush1.bf16.msra.mxu0 0
    %2430 = vmatprep.subr.bf16.mxu0 0
    %2431 = vmatpush1.bf16.msra.mxu0 0
    %2432 = vmatprep.subr.bf16.mxu0 0
    %2433 = vmatpush1.bf16.msra.mxu0 0
    %2434 = vmatprep.subr.bf16.mxu0 0
    %2435 = vmatpush1.bf16.msra.mxu0 0
    %2436 = vmatprep.mubr.bf16.mxu0 0
    %2437 = vmatmul.mubr.bf16.gmra.mrb[0].mxu0 %v2402
    %v2438 = vpop.f32.mrb[0].mxu0
    %v2439 = vadd.f32 0.0, %v2438
    %v2440 = vpop.f32.mrb[0].mxu0
    %v2441 = vpop.f32.mrb[0].mxu0
    %v2442 = vadd.f32 0.0, %v2441
    %v2443 = vpop.f32.mrb[0].mxu0
    %2444 = vdwg.mxu0
    %v2446 = vsel %vm1724, %v2085, 0
    %2448 = vmatprep.subr.bf16.mxu0 0
    %2449 = vmatpush1.bf16.msra.mxu0 %v867
    %2450 = vmatprep.subr.bf16.mxu0 0
    %2451 = vmatpush1.bf16.msra.mxu0 0
    %2452 = vmatprep.subr.bf16.mxu0 0
    %2453 = vmatpush1.bf16.msra.mxu0 0
    %2454 = vmatprep.subr.bf16.mxu0 0
    %2455 = vmatpush1.bf16.msra.mxu0 0
    %2456 = vmatprep.subr.bf16.mxu0 0
    %2457 = vmatpush1.bf16.msra.mxu0 0
    %2458 = vmatprep.subr.bf16.mxu0 0
    %2459 = vmatpush1.bf16.msra.mxu0 0
    %2460 = vmatprep.subr.bf16.mxu0 0
    %2461 = vmatpush1.bf16.msra.mxu0 0
    %2462 = vmatprep.subr.bf16.mxu0 0
    %2463 = vmatpush1.bf16.msra.mxu0 0
    %2464 = vmatprep.subr.bf16.mxu0 0
    %2465 = vmatpush1.bf16.msra.mxu0 0
    %2466 = vmatprep.subr.bf16.mxu0 0
    %2467 = vmatpush1.bf16.msra.mxu0 0
    %2468 = vmatprep.subr.bf16.mxu0 0
    %2469 = vmatpush1.bf16.msra.mxu0 0
    %2470 = vmatprep.subr.bf16.mxu0 0
    %2471 = vmatpush1.bf16.msra.mxu0 0
    %2472 = vmatprep.subr.bf16.mxu0 0
    %2473 = vmatpush1.bf16.msra.mxu0 0
    %2474 = vmatprep.subr.bf16.mxu0 0
    %2475 = vmatpush1.bf16.msra.mxu0 0
    %2476 = vmatprep.subr.bf16.mxu0 0
    %2477 = vmatpush1.bf16.msra.mxu0 0
    %2478 = vmatprep.subr.bf16.mxu0 0
    %2479 = vmatpush1.bf16.msra.mxu0 0
    %2480 = vmatprep.mubr.bf16.mxu0 0
    %2481 = vmatmul.mubr.bf16.gmra.mrb[0].mxu0 %v2446
    %v2482 = vpop.f32.mrb[0].mxu0
    %v2483 = vadd.f32 0.0, %v2482
    %v2484 = vpop.f32.mrb[0].mxu0
    %v2485 = vpop.f32.mrb[0].mxu0
    %v2486 = vadd.f32 0.0, %v2485
    %v2487 = vpop.f32.mrb[0].mxu0
    %2488 = vdwg.mxu0
    %v2490 = vsel %vm1724, %v2086, 0
    %2492 = vmatprep.subr.bf16.mxu0 0
    %2493 = vmatpush1.bf16.msra.mxu0 %v868
    %2494 = vmatprep.subr.bf16.mxu0 0
    %2495 = vmatpush1.bf16.msra.mxu0 0
    %2496 = vmatprep.subr.bf16.mxu0 0
    %2497 = vmatpush1.bf16.msra.mxu0 0
    %2498 = vmatprep.subr.bf16.mxu0 0
    %2499 = vmatpush1.bf16.msra.mxu0 0
    %2500 = vmatprep.subr.bf16.mxu0 0
    %2501 = vmatpush1.bf16.msra.mxu0 0
    %2502 = vmatprep.subr.bf16.mxu0 0
    %2503 = vmatpush1.bf16.msra.mxu0 0
    %2504 = vmatprep.subr.bf16.mxu0 0
    %2505 = vmatpush1.bf16.msra.mxu0 0
    %2506 = vmatprep.subr.bf16.mxu0 0
    %2507 = vmatpush1.bf16.msra.mxu0 0
    %2508 = vmatprep.subr.bf16.mxu0 0
    %2509 = vmatpush1.bf16.msra.mxu0 0
    %2510 = vmatprep.subr.bf16.mxu0 0
    %2511 = vmatpush1.bf16.msra.mxu0 0
    %2512 = vmatprep.subr.bf16.mxu0 0
    %2513 = vmatpush1.bf16.msra.mxu0 0
    %2514 = vmatprep.subr.bf16.mxu0 0
    %2515 = vmatpush1.bf16.msra.mxu0 0
    %2516 = vmatprep.subr.bf16.mxu0 0
    %2517 = vmatpush1.bf16.msra.mxu0 0
    %2518 = vmatprep.subr.bf16.mxu0 0
    %2519 = vmatpush1.bf16.msra.mxu0 0
    %2520 = vmatprep.subr.bf16.mxu0 0
    %2521 = vmatpush1.bf16.msra.mxu0 0
    %2522 = vmatprep.subr.bf16.mxu0 0
    %2523 = vmatpush1.bf16.msra.mxu0 0
    %2524 = vmatprep.mubr.bf16.mxu0 0
    %2525 = vmatmul.mubr.bf16.gmra.mrb[0].mxu0 %v2490
    %v2526 = vpop.f32.mrb[0].mxu0
    %v2527 = vadd.f32 0.0, %v2526
    %v2528 = vpop.f32.mrb[0].mxu0
    %v2529 = vpop.f32.mrb[0].mxu0
    %v2530 = vadd.f32 0.0, %v2529
    %v2531 = vpop.f32.mrb[0].mxu0
    %2532 = vdwg.mxu0
    %v2534 = vsel %vm1724, %v2087, 0
    %2536 = vmatprep.subr.bf16.mxu0 0
    %2537 = vmatpush1.bf16.msra.mxu0 %v869
    %2538 = vmatprep.subr.bf16.mxu0 0
    %2539 = vmatpush1.bf16.msra.mxu0 0
    %2540 = vmatprep.subr.bf16.mxu0 0
    %2541 = vmatpush1.bf16.msra.mxu0 0
    %2542 = vmatprep.subr.bf16.mxu0 0
    %2543 = vmatpush1.bf16.msra.mxu0 0
    %2544 = vmatprep.subr.bf16.mxu0 0
    %2545 = vmatpush1.bf16.msra.mxu0 0
    %2546 = vmatprep.subr.bf16.mxu0 0
    %2547 = vmatpush1.bf16.msra.mxu0 0
    %2548 = vmatprep.subr.bf16.mxu0 0
    %2549 = vmatpush1.bf16.msra.mxu0 0
    %2550 = vmatprep.subr.bf16.mxu0 0
    %2551 = vmatpush1.bf16.msra.mxu0 0
    %2552 = vmatprep.subr.bf16.mxu0 0
    %2553 = vmatpush1.bf16.msra.mxu0 0
    %2554 = vmatprep.subr.bf16.mxu0 0
    %2555 = vmatpush1.bf16.msra.mxu0 0
    %2556 = vmatprep.subr.bf16.mxu0 0
    %2557 = vmatpush1.bf16.msra.mxu0 0
    %2558 = vmatprep.subr.bf16.mxu0 0
    %2559 = vmatpush1.bf16.msra.mxu0 0
    %2560 = vmatprep.subr.bf16.mxu0 0
    %2561 = vmatpush1.bf16.msra.mxu0 0
    %2562 = vmatprep.subr.bf16.mxu0 0
    %2563 = vmatpush1.bf16.msra.mxu0 0
    %2564 = vmatprep.subr.bf16.mxu0 0
    %2565 = vmatpush1.bf16.msra.mxu0 0
    %2566 = vmatprep.subr.bf16.mxu0 0
    %2567 = vmatpush1.bf16.msra.mxu0 0
    %2568 = vmatprep.mubr.bf16.mxu0 0
    %2569 = vmatmul.mubr.bf16.gmra.mrb[0].mxu0 %v2534
    %v2570 = vpop.f32.mrb[0].mxu0
    %v2571 = vadd.f32 0.0, %v2570
    %v2572 = vpop.f32.mrb[0].mxu0
    %v2573 = vpop.f32.mrb[0].mxu0
    %v2574 = vadd.f32 0.0, %v2573
    %v2575 = vpop.f32.mrb[0].mxu0
    %2576 = vdwg.mxu0
    %v2578 = vsel %vm1724, %v2088, 0
    %2580 = vmatprep.subr.bf16.mxu0 0
    %2581 = vmatpush1.bf16.msra.mxu0 %v870
    %2582 = vmatprep.subr.bf16.mxu0 0
    %2583 = vmatpush1.bf16.msra.mxu0 0
    %2584 = vmatprep.subr.bf16.mxu0 0
    %2585 = vmatpush1.bf16.msra.mxu0 0
    %2586 = vmatprep.subr.bf16.mxu0 0
    %2587 = vmatpush1.bf16.msra.mxu0 0
    %2588 = vmatprep.subr.bf16.mxu0 0
    %2589 = vmatpush1.bf16.msra.mxu0 0
    %2590 = vmatprep.subr.bf16.mxu0 0
    %2591 = vmatpush1.bf16.msra.mxu0 0
    %2592 = vmatprep.subr.bf16.mxu0 0
    %2593 = vmatpush1.bf16.msra.mxu0 0
    %2594 = vmatprep.subr.bf16.mxu0 0
    %2595 = vmatpush1.bf16.msra.mxu0 0
    %2596 = vmatprep.subr.bf16.mxu0 0
    %2597 = vmatpush1.bf16.msra.mxu0 0
    %2598 = vmatprep.subr.bf16.mxu0 0
    %2599 = vmatpush1.bf16.msra.mxu0 0
    %2600 = vmatprep.subr.bf16.mxu0 0
    %2601 = vmatpush1.bf16.msra.mxu0 0
    %2602 = vmatprep.subr.bf16.mxu0 0
    %2603 = vmatpush1.bf16.msra.mxu0 0
    %2604 = vmatprep.subr.bf16.mxu0 0
    %2605 = vmatpush1.bf16.msra.mxu0 0
    %2606 = vmatprep.subr.bf16.mxu0 0
    %2607 = vmatpush1.bf16.msra.mxu0 0
    %2608 = vmatprep.subr.bf16.mxu0 0
    %2609 = vmatpush1.bf16.msra.mxu0 0
    %2610 = vmatprep.subr.bf16.mxu0 0
    %2611 = vmatpush1.bf16.msra.mxu0 0
    %2612 = vmatprep.mubr.bf16.mxu0 0
    %2613 = vmatmul.mubr.bf16.gmra.mrb[0].mxu0 %v2578
    %v2614 = vpop.f32.mrb[0].mxu0
    %v2615 = vadd.f32 0.0, %v2614
    %v2616 = vpop.f32.mrb[0].mxu0
    %v2617 = vpop.f32.mrb[0].mxu0
    %v2618 = vadd.f32 0.0, %v2617
    %v2619 = vpop.f32.mrb[0].mxu0
    %2620 = vdwg.mxu0
    %v2622 = vsel %vm1724, %v2089, 0
    %2624 = vmatprep.subr.bf16.mxu0 0
    %2625 = vmatpush1.bf16.msra.mxu0 %v871
    %2626 = vmatprep.subr.bf16.mxu0 0
    %2627 = vmatpush1.bf16.msra.mxu0 0
    %2628 = vmatprep.subr.bf16.mxu0 0
    %2629 = vmatpush1.bf16.msra.mxu0 0
    %2630 = vmatprep.subr.bf16.mxu0 0
    %2631 = vmatpush1.bf16.msra.mxu0 0
    %2632 = vmatprep.subr.bf16.mxu0 0
    %2633 = vmatpush1.bf16.msra.mxu0 0
    %2634 = vmatprep.subr.bf16.mxu0 0
    %2635 = vmatpush1.bf16.msra.mxu0 0
    %2636 = vmatprep.subr.bf16.mxu0 0
    %2637 = vmatpush1.bf16.msra.mxu0 0
    %2638 = vmatprep.subr.bf16.mxu0 0
    %2639 = vmatpush1.bf16.msra.mxu0 0
    %2640 = vmatprep.subr.bf16.mxu0 0
    %2641 = vmatpush1.bf16.msra.mxu0 0
    %2642 = vmatprep.subr.bf16.mxu0 0
    %2643 = vmatpush1.bf16.msra.mxu0 0
    %2644 = vmatprep.subr.bf16.mxu0 0
    %2645 = vmatpush1.bf16.msra.mxu0 0
    %2646 = vmatprep.subr.bf16.mxu0 0
    %2647 = vmatpush1.bf16.msra.mxu0 0
    %2648 = vmatprep.subr.bf16.mxu0 0
    %2649 = vmatpush1.bf16.msra.mxu0 0
    %2650 = vmatprep.subr.bf16.mxu0 0
    %2651 = vmatpush1.bf16.msra.mxu0 0
    %2652 = vmatprep.subr.bf16.mxu0 0
    %2653 = vmatpush1.bf16.msra.mxu0 0
    %2654 = vmatprep.subr.bf16.mxu0 0
    %2655 = vmatpush1.bf16.msra.mxu0 0
    %2656 = vmatprep.mubr.bf16.mxu0 0
    %2657 = vmatmul.mubr.bf16.gmra.mrb[0].mxu0 %v2622
    %v2658 = vpop.f32.mrb[0].mxu0
    %v2659 = vadd.f32 0.0, %v2658
    %v2660 = vpop.f32.mrb[0].mxu0
    %v2661 = vpop.f32.mrb[0].mxu0
    %v2662 = vadd.f32 0.0, %v2661
    %v2663 = vpop.f32.mrb[0].mxu0
    %2664 = vdwg.mxu0
    %v2666 = vsel %vm1724, %v2090, 0
    %2668 = vmatprep.subr.bf16.mxu0 0
    %2669 = vmatpush1.bf16.msra.mxu0 %v872
    %2670 = vmatprep.subr.bf16.mxu0 0
    %2671 = vmatpush1.bf16.msra.mxu0 0
    %2672 = vmatprep.subr.bf16.mxu0 0
    %2673 = vmatpush1.bf16.msra.mxu0 0
    %2674 = vmatprep.subr.bf16.mxu0 0
    %2675 = vmatpush1.bf16.msra.mxu0 0
    %2676 = vmatprep.subr.bf16.mxu0 0
    %2677 = vmatpush1.bf16.msra.mxu0 0
    %2678 = vmatprep.subr.bf16.mxu0 0
    %2679 = vmatpush1.bf16.msra.mxu0 0
    %2680 = vmatprep.subr.bf16.mxu0 0
    %2681 = vmatpush1.bf16.msra.mxu0 0
    %2682 = vmatprep.subr.bf16.mxu0 0
    %2683 = vmatpush1.bf16.msra.mxu0 0
    %2684 = vmatprep.subr.bf16.mxu0 0
    %2685 = vmatpush1.bf16.msra.mxu0 0
    %2686 = vmatprep.subr.bf16.mxu0 0
    %2687 = vmatpush1.bf16.msra.mxu0 0
    %2688 = vmatprep.subr.bf16.mxu0 0
    %2689 = vmatpush1.bf16.msra.mxu0 0
    %2690 = vmatprep.subr.bf16.mxu0 0
    %2691 = vmatpush1.bf16.msra.mxu0 0
    %2692 = vmatprep.subr.bf16.mxu0 0
    %2693 = vmatpush1.bf16.msra.mxu0 0
    %2694 = vmatprep.subr.bf16.mxu0 0
    %2695 = vmatpush1.bf16.msra.mxu0 0
    %2696 = vmatprep.subr.bf16.mxu0 0
    %2697 = vmatpush1.bf16.msra.mxu0 0
    %2698 = vmatprep.subr.bf16.mxu0 0
    %2699 = vmatpush1.bf16.msra.mxu0 0
    %2700 = vmatprep.mubr.bf16.mxu0 0
    %2701 = vmatmul.mubr.bf16.gmra.mrb[0].mxu0 %v2666
    %v2702 = vpop.f32.mrb[0].mxu0
    %v2703 = vadd.f32 0.0, %v2702
    %v2704 = vpop.f32.mrb[0].mxu0
    %v2705 = vpop.f32.mrb[0].mxu0
    %v2706 = vadd.f32 0.0, %v2705
    %v2707 = vpop.f32.mrb[0].mxu0
    %2708 = vdwg.mxu0
    %v2710 = vsel %vm1724, %v2091, 0
    %2712 = vmatprep.subr.bf16.mxu0 0
    %2713 = vmatpush1.bf16.msra.mxu0 %v873
    %2714 = vmatprep.subr.bf16.mxu0 0
    %2715 = vmatpush1.bf16.msra.mxu0 0
    %2716 = vmatprep.subr.bf16.mxu0 0
    %2717 = vmatpush1.bf16.msra.mxu0 0
    %2718 = vmatprep.subr.bf16.mxu0 0
    %2719 = vmatpush1.bf16.msra.mxu0 0
    %2720 = vmatprep.subr.bf16.mxu0 0
    %2721 = vmatpush1.bf16.msra.mxu0 0
    %2722 = vmatprep.subr.bf16.mxu0 0
    %2723 = vmatpush1.bf16.msra.mxu0 0
    %2724 = vmatprep.subr.bf16.mxu0 0
    %2725 = vmatpush1.bf16.msra.mxu0 0
    %2726 = vmatprep.subr.bf16.mxu0 0
    %2727 = vmatpush1.bf16.msra.mxu0 0
    %2728 = vmatprep.subr.bf16.mxu0 0
    %2729 = vmatpush1.bf16.msra.mxu0 0
    %2730 = vmatprep.subr.bf16.mxu0 0
    %2731 = vmatpush1.bf16.msra.mxu0 0
    %2732 = vmatprep.subr.bf16.mxu0 0
    %2733 = vmatpush1.bf16.msra.mxu0 0
    %2734 = vmatprep.subr.bf16.mxu0 0
    %2735 = vmatpush1.bf16.msra.mxu0 0
    %2736 = vmatprep.subr.bf16.mxu0 0
    %2737 = vmatpush1.bf16.msra.mxu0 0
    %2738 = vmatprep.subr.bf16.mxu0 0
    %2739 = vmatpush1.bf16.msra.mxu0 0
    %2740 = vmatprep.subr.bf16.mxu0 0
    %2741 = vmatpush1.bf16.msra.mxu0 0
    %2742 = vmatprep.subr.bf16.mxu0 0
    %2743 = vmatpush1.bf16.msra.mxu0 0
    %2744 = vmatprep.mubr.bf16.mxu0 0
    %2745 = vmatmul.mubr.bf16.gmra.mrb[0].mxu0 %v2710
    %v2746 = vpop.f32.mrb[0].mxu0
    %v2747 = vadd.f32 0.0, %v2746
    %v2748 = vpop.f32.mrb[0].mxu0
    %v2749 = vpop.f32.mrb[0].mxu0
    %v2750 = vadd.f32 0.0, %v2749
    %v2751 = vpop.f32.mrb[0].mxu0
    %2752 = vdwg.mxu0
    %v2754 = vsel %vm1724, %v2092, 0
    %2756 = vmatprep.subr.bf16.mxu0 0
    %2757 = vmatpush1.bf16.msra.mxu0 %v874
    %2758 = vmatprep.subr.bf16.mxu0 0
    %2759 = vmatpush1.bf16.msra.mxu0 0
    %2760 = vmatprep.subr.bf16.mxu0 0
    %2761 = vmatpush1.bf16.msra.mxu0 0
    %2762 = vmatprep.subr.bf16.mxu0 0
    %2763 = vmatpush1.bf16.msra.mxu0 0
    %2764 = vmatprep.subr.bf16.mxu0 0
    %2765 = vmatpush1.bf16.msra.mxu0 0
    %2766 = vmatprep.subr.bf16.mxu0 0
    %2767 = vmatpush1.bf16.msra.mxu0 0
    %2768 = vmatprep.subr.bf16.mxu0 0
    %2769 = vmatpush1.bf16.msra.mxu0 0
    %2770 = vmatprep.subr.bf16.mxu0 0
    %2771 = vmatpush1.bf16.msra.mxu0 0
    %2772 = vmatprep.subr.bf16.mxu0 0
    %2773 = vmatpush1.bf16.msra.mxu0 0
    %2774 = vmatprep.subr.bf16.mxu0 0
    %2775 = vmatpush1.bf16.msra.mxu0 0
    %2776 = vmatprep.subr.bf16.mxu0 0
    %2777 = vmatpush1.bf16.msra.mxu0 0
    %2778 = vmatprep.subr.bf16.mxu0 0
    %2779 = vmatpush1.bf16.msra.mxu0 0
    %2780 = vmatprep.subr.bf16.mxu0 0
    %2781 = vmatpush1.bf16.msra.mxu0 0
    %2782 = vmatprep.subr.bf16.mxu0 0
    %2783 = vmatpush1.bf16.msra.mxu0 0
    %2784 = vmatprep.subr.bf16.mxu0 0
    %2785 = vmatpush1.bf16.msra.mxu0 0
    %2786 = vmatprep.subr.bf16.mxu0 0
    %2787 = vmatpush1.bf16.msra.mxu0 0
    %2788 = vmatprep.mubr.bf16.mxu0 0
    %2789 = vmatmul.mubr.bf16.gmra.mrb[0].mxu0 %v2754
    %v2790 = vpop.f32.mrb[0].mxu0
    %v2791 = vadd.f32 0.0, %v2790
    %v2792 = vpop.f32.mrb[0].mxu0
    %v2793 = vpop.f32.mrb[0].mxu0
    %v2794 = vadd.f32 0.0, %v2793
    %v2795 = vpop.f32.mrb[0].mxu0
    %2796 = vdwg.mxu0
    %2805 = vrot.lane.b32.xlu0 %v2307, 32
    %v2806 = vpop.permute.xlu0 %2805
    %2807 = vrot.lane.b32.xlu0 %v2310, 32
    %v2808 = vpop.permute.xlu0 %2807
    %2809 = vrot.lane.b32.xlu0 %v2351, 32
    %v2810 = vpop.permute.xlu0 %2809
    %2811 = vrot.lane.b32.xlu0 %v2354, 32
    %v2812 = vpop.permute.xlu0 %2811
    %2813 = vrot.lane.b32.xlu0 %v2395, 32
    %v2814 = vpop.permute.xlu0 %2813
    %2815 = vrot.lane.b32.xlu0 %v2398, 32
    %v2816 = vpop.permute.xlu0 %2815
    %2817 = vrot.lane.b32.xlu0 %v2439, 32
    %v2818 = vpop.permute.xlu0 %2817
    %2819 = vrot.lane.b32.xlu0 %v2442, 32
    %v2820 = vpop.permute.xlu0 %2819
    %2837 = vrot.lane.b32.xlu0 %v2483, 64
    %v2838 = vpop.permute.xlu0 %2837
    %2839 = vrot.lane.b32.xlu0 %v2486, 64
    %v2840 = vpop.permute.xlu0 %2839
    %2841 = vrot.lane.b32.xlu0 %v2527, 64
    %v2842 = vpop.permute.xlu0 %2841
    %2843 = vrot.lane.b32.xlu0 %v2530, 64
    %v2844 = vpop.permute.xlu0 %2843
    %2845 = vrot.lane.b32.xlu0 %v2571, 64
    %v2846 = vpop.permute.xlu0 %2845
    %2847 = vrot.lane.b32.xlu0 %v2574, 64
    %v2848 = vpop.permute.xlu0 %2847
    %2849 = vrot.lane.b32.xlu0 %v2615, 64
    %v2850 = vpop.permute.xlu0 %2849
    %2851 = vrot.lane.b32.xlu0 %v2618, 64
    %v2852 = vpop.permute.xlu0 %2851
    %2869 = vrot.lane.b32.xlu0 %v2659, 96
    %v2870 = vpop.permute.xlu0 %2869
    %2871 = vrot.lane.b32.xlu0 %v2662, 96
    %v2872 = vpop.permute.xlu0 %2871
    %2873 = vrot.lane.b32.xlu0 %v2703, 96
    %v2874 = vpop.permute.xlu0 %2873
    %2875 = vrot.lane.b32.xlu0 %v2706, 96
    %v2876 = vpop.permute.xlu0 %2875
    %2877 = vrot.lane.b32.xlu0 %v2747, 96
    %v2878 = vpop.permute.xlu0 %2877
    %2879 = vrot.lane.b32.xlu0 %v2750, 96
    %v2880 = vpop.permute.xlu0 %2879
    %2881 = vrot.lane.b32.xlu0 %v2791, 96
    %v2882 = vpop.permute.xlu0 %2881
    %2883 = vrot.lane.b32.xlu0 %v2794, 96
    %v2884 = vpop.permute.xlu0 %2883
    %v2893 = vsel %vm875, %v2131, %v2806
    %v2894 = vsel %vm875, %v2134, %v2808
    %v2895 = vsel %vm875, %v2175, %v2810
    %v2896 = vsel %vm875, %v2178, %v2812
    %v2897 = vsel %vm875, %v2219, %v2814
    %v2898 = vsel %vm875, %v2222, %v2816
    %v2899 = vsel %vm875, %v2263, %v2818
    %v2900 = vsel %vm875, %v2266, %v2820
    %vm2901 = vcmask 523264
    %v2902 = vsel %vm2901, %v2893, %v2838
    %v2903 = vsel %vm2901, %v2894, %v2840
    %v2904 = vsel %vm2901, %v2895, %v2842
    %v2905 = vsel %vm2901, %v2896, %v2844
    %v2906 = vsel %vm2901, %v2897, %v2846
    %v2907 = vsel %vm2901, %v2898, %v2848
    %v2908 = vsel %vm2901, %v2899, %v2850
    %v2909 = vsel %vm2901, %v2900, %v2852
    %vm2910 = vcmask 785408
    %v2911 = vsel %vm2910, %v2902, %v2870
    %v2912 = vsel %vm2910, %v2903, %v2872
    %v2913 = vsel %vm2910, %v2904, %v2874
    %v2914 = vsel %vm2910, %v2905, %v2876
    %v2915 = vsel %vm2910, %v2906, %v2878
    %v2916 = vsel %vm2910, %v2907, %v2880
    %v2917 = vsel %vm2910, %v2908, %v2882
    %v2918 = vsel %vm2910, %v2909, %v2884
    %v2919 = vpack.c.bf16 %v2912, %v2911
    %v2920 = vpack.c.bf16 %v2914, %v2913
    %v2921 = vpack.c.bf16 %v2916, %v2915
    %v2922 = vpack.c.bf16 %v2918, %v2917
    %v2923 = vld [vmem:[#allocation10] sm:$0xf]
    %v2924 = vld [vmem:[#allocation10 + $0x4] sm:$0xf]
    %v2925 = vld [vmem:[#allocation10 + $0x8] sm:$0xf]
    %v2926 = vld [vmem:[#allocation10 + $0xc] sm:$0xf]
    %v2927 = vld [vmem:[#allocation10 + $0x10] sm:$0xf]
    %v2928 = vld [vmem:[#allocation10 + $0x14] sm:$0xf]
    %v2929 = vld [vmem:[#allocation10 + $0x18] sm:$0xf]
    %v2930 = vld [vmem:[#allocation10 + $0x1c] sm:$0xf]
    %v2931 = vld [vmem:[#allocation10 + $0x20] sm:$0xf]
    %v2932 = vld [vmem:[#allocation10 + $0x24] sm:$0xf]
    %v2933 = vld [vmem:[#allocation10 + $0x28] sm:$0xf]
    %v2934 = vld [vmem:[#allocation10 + $0x2c] sm:$0xf]
    %v2935 = vld [vmem:[#allocation10 + $0x30] sm:$0xf]
    %v2936 = vld [vmem:[#allocation10 + $0x34] sm:$0xf]
    %v2937 = vld [vmem:[#allocation10 + $0x38] sm:$0xf]
    %v2938 = vld [vmem:[#allocation10 + $0x3c] sm:$0xf]
    %v2955 = vunpack.c.l.b16 %v2923
    %v2956 = vunpack.c.l.b16 %v2924
    %v2957 = vunpack.c.l.b16 %v2925
    %v2958 = vunpack.c.l.b16 %v2926
    %v2959 = vunpack.c.l.b16 %v2927
    %v2960 = vunpack.c.l.b16 %v2928
    %v2961 = vunpack.c.l.b16 %v2929
    %v2962 = vunpack.c.l.b16 %v2930
    %v2963 = vunpack.c.l.b16 %v2931
    %v2964 = vunpack.c.l.b16 %v2932
    %v2965 = vunpack.c.l.b16 %v2933
    %v2966 = vunpack.c.l.b16 %v2934
    %v2967 = vunpack.c.l.b16 %v2935
    %v2968 = vunpack.c.l.b16 %v2936
    %v2969 = vunpack.c.l.b16 %v2937
    %v2970 = vunpack.c.l.b16 %v2938
    %v2971 = vpack.c.b16 %v2956, %v2955
    %v2972 = vpack.c.b16 %v2958, %v2957
    %v2973 = vpack.c.b16 %v2960, %v2959
    %v2974 = vpack.c.b16 %v2962, %v2961
    %v2975 = vpack.c.b16 %v2964, %v2963
    %v2976 = vpack.c.b16 %v2966, %v2965
    %v2977 = vpack.c.b16 %v2968, %v2967
    %v2978 = vpack.c.b16 %v2970, %v2969
    %2987 = vmatprep.subr.bf16.mxu0 0
    %2988 = vmatpush1.bf16.msra.mxu0 %v2971
    %2989 = vmatprep.subr.bf16.mxu0 0
    %2990 = vmatpush1.bf16.msra.mxu0 %v2972
    %2991 = vmatprep.subr.bf16.mxu0 0
    %2992 = vmatpush1.bf16.msra.mxu0 %v2973
    %2993 = vmatprep.subr.bf16.mxu0 0
    %2994 = vmatpush1.bf16.msra.mxu0 %v2974
    %2995 = vmatprep.subr.bf16.mxu0 0
    %2996 = vmatpush1.bf16.msra.mxu0 %v2975
    %2997 = vmatprep.subr.bf16.mxu0 0
    %2998 = vmatpush1.bf16.msra.mxu0 %v2976
    %2999 = vmatprep.subr.bf16.mxu0 0
    %3000 = vmatpush1.bf16.msra.mxu0 %v2977
    %3001 = vmatprep.subr.bf16.mxu0 0
    %3002 = vmatpush1.bf16.msra.mxu0 %v2978
    %3003 = vmatprep.subr.bf16.mxu0 0
    %3004 = vmatpush1.bf16.msra.mxu0 0
    %3005 = vmatprep.subr.bf16.mxu0 0
    %3006 = vmatpush1.bf16.msra.mxu0 0
    %3007 = vmatprep.subr.bf16.mxu0 0
    %3008 = vmatpush1.bf16.msra.mxu0 0
    %3009 = vmatprep.subr.bf16.mxu0 0
    %3010 = vmatpush1.bf16.msra.mxu0 0
    %3011 = vmatprep.subr.bf16.mxu0 0
    %3012 = vmatpush1.bf16.msra.mxu0 0
    %3013 = vmatprep.subr.bf16.mxu0 0
    %3014 = vmatpush1.bf16.msra.mxu0 0
    %3015 = vmatprep.subr.bf16.mxu0 0
    %3016 = vmatpush1.bf16.msra.mxu0 0
    %3017 = vmatprep.subr.bf16.mxu0 0
    %3018 = vmatpush1.bf16.msra.mxu0 0
    %3019 = vmatprep.mubr.bf16.mxu0 0
    %3020 = vmatmul.mubr.bf16.gmra.mrb[0].mxu0 %v2919
    %v3021 = vpop.f32.mrb[0].mxu0
    %v3022 = vadd.f32 0.0, %v3021
    %v3023 = vpop.f32.mrb[0].mxu0
    %v3024 = vpop.f32.mrb[0].mxu0
    %v3025 = vadd.f32 0.0, %v3024
    %v3026 = vpop.f32.mrb[0].mxu0
    %3027 = vmatprep.mubr.bf16.mxu0 0
    %3028 = vmatmul.mubr.bf16.gmra.mrb[0].mxu0 %v2920
    %v3029 = vpop.f32.mrb[0].mxu0
    %v3030 = vadd.f32 0.0, %v3029
    %v3031 = vpop.f32.mrb[0].mxu0
    %v3032 = vpop.f32.mrb[0].mxu0
    %v3033 = vadd.f32 0.0, %v3032
    %v3034 = vpop.f32.mrb[0].mxu0
    %3035 = vmatprep.mubr.bf16.mxu0 0
    %3036 = vmatmul.mubr.bf16.gmra.mrb[0].mxu0 %v2921
    %v3037 = vpop.f32.mrb[0].mxu0
    %v3038 = vadd.f32 0.0, %v3037
    %v3039 = vpop.f32.mrb[0].mxu0
    %v3040 = vpop.f32.mrb[0].mxu0
    %v3041 = vadd.f32 0.0, %v3040
    %v3042 = vpop.f32.mrb[0].mxu0
    %3043 = vmatprep.mubr.bf16.mxu0 0
    %3044 = vmatmul.mubr.bf16.gmra.mrb[0].mxu0 %v2922
    %v3045 = vpop.f32.mrb[0].mxu0
    %v3046 = vadd.f32 0.0, %v3045
    %v3047 = vpop.f32.mrb[0].mxu0
    %v3048 = vpop.f32.mrb[0].mxu0
    %v3049 = vadd.f32 0.0, %v3048
    %v3050 = vpop.f32.mrb[0].mxu0
    %3051 = vdwg.mxu0
    %v3052 = vadd.f32 %v141, %v3022
    %v3053 = vadd.f32 %v142, %v3025
    %v3054 = vadd.f32 %v143, %v3030
    %v3055 = vadd.f32 %v144, %v3033
    %v3056 = vadd.f32 %v145, %v3038
    %v3057 = vadd.f32 %v146, %v3041
    %v3058 = vadd.f32 %v147, %v3046
    %v3059 = vadd.f32 %v148, %v3049
    %v3060 = vld [vmem:[%s6] sm:$0x1]
    %v3062 = vlaneseq
    %v3063 = vshrl.u32 %v3062, 7
    %v3064 = vsub.s32 0, %v3063
    %v3065 = vrot.slane %v3060, %v3064
    %v3067 = vadd.f32 %v3052, %v3065
    %v3068 = vadd.f32 %v3053, %v3065
    %v3069 = vadd.f32 %v3054, %v3065
    %v3070 = vadd.f32 %v3055, %v3065
    %v3071 = vadd.f32 %v3056, %v3065
    %v3072 = vadd.f32 %v3057, %v3065
    %v3073 = vadd.f32 %v3058, %v3065
    %v3074 = vadd.f32 %v3059, %v3065
    %v3075 = vld [vmem:[%s11 + $0x1] sm:$0x1]
    %v3076 = vld [vmem:[%s12 + $0x1] sm:$0x1]
    %3077 = vadd.xlane.f32.xlu0 %v3067
    %v3078 = vpop.xlane.xlu0 %3077
    %3079 = vadd.xlane.f32.xlu0 %v3068
    %v3080 = vpop.xlane.xlu0 %3079
    %3081 = vadd.xlane.f32.xlu0 %v3069
    %v3082 = vpop.xlane.xlu0 %3081
    %3083 = vadd.xlane.f32.xlu0 %v3070
    %v3084 = vpop.xlane.xlu0 %3083
    %3085 = vadd.xlane.f32.xlu0 %v3071
    %v3086 = vpop.xlane.xlu0 %3085
    %3087 = vadd.xlane.f32.xlu0 %v3072
    %v3088 = vpop.xlane.xlu0 %3087
    %3089 = vadd.xlane.f32.xlu0 %v3073
    %v3090 = vpop.xlane.xlu0 %3089
    %3091 = vadd.xlane.f32.xlu0 %v3074
    %v3092 = vpop.xlane.xlu0 %3091
    %v3093 = vmul.f32 %v3078, %v171
    %v3094 = vmul.f32 %v3080, %v171
    %v3095 = vmul.f32 %v3082, %v171
    %v3096 = vmul.f32 %v3084, %v171
    %v3097 = vmul.f32 %v3086, %v171
    %v3098 = vmul.f32 %v3088, %v171
    %v3099 = vmul.f32 %v3090, %v171
    %v3100 = vmul.f32 %v3092, %v171
    %v3101 = vsub.f32 %v3067, %v3093
    %v3102 = vsub.f32 %v3068, %v3094
    %v3103 = vsub.f32 %v3069, %v3095
    %v3104 = vsub.f32 %v3070, %v3096
    %v3105 = vsub.f32 %v3071, %v3097
    %v3106 = vsub.f32 %v3072, %v3098
    %v3107 = vsub.f32 %v3073, %v3099
    %v3108 = vsub.f32 %v3074, %v3100
    %v3109 = vmul.f32 %v3101, %v3101
    %v3110 = vmul.f32 %v3102, %v3102
    %v3111 = vmul.f32 %v3103, %v3103
    %v3112 = vmul.f32 %v3104, %v3104
    %v3113 = vmul.f32 %v3105, %v3105
    %v3114 = vmul.f32 %v3106, %v3106
    %v3115 = vmul.f32 %v3107, %v3107
    %v3116 = vmul.f32 %v3108, %v3108
    %3117 = vadd.xlane.f32.xlu0 %v3109
    %v3118 = vpop.xlane.xlu0 %3117
    %3119 = vadd.xlane.f32.xlu0 %v3110
    %v3120 = vpop.xlane.xlu0 %3119
    %3121 = vadd.xlane.f32.xlu0 %v3111
    %v3122 = vpop.xlane.xlu0 %3121
    %3123 = vadd.xlane.f32.xlu0 %v3112
    %v3124 = vpop.xlane.xlu0 %3123
    %3125 = vadd.xlane.f32.xlu0 %v3113
    %v3126 = vpop.xlane.xlu0 %3125
    %3127 = vadd.xlane.f32.xlu0 %v3114
    %v3128 = vpop.xlane.xlu0 %3127
    %3129 = vadd.xlane.f32.xlu0 %v3115
    %v3130 = vpop.xlane.xlu0 %3129
    %3131 = vadd.xlane.f32.xlu0 %v3116
    %v3132 = vpop.xlane.xlu0 %3131
    %v3133 = vmul.f32 %v3118, %v171
    %v3134 = vmul.f32 %v3120, %v171
    %v3135 = vmul.f32 %v3122, %v171
    %v3136 = vmul.f32 %v3124, %v171
    %v3137 = vmul.f32 %v3126, %v171
    %v3138 = vmul.f32 %v3128, %v171
    %v3139 = vmul.f32 %v3130, %v171
    %v3140 = vmul.f32 %v3132, %v171
    %v3141 = vadd.f32 %v3133, 1e-05
    %v3142 = vadd.f32 %v3134, 1e-05
    %v3143 = vadd.f32 %v3135, 1e-05
    %v3144 = vadd.f32 %v3136, 1e-05
    %v3145 = vadd.f32 %v3137, 1e-05
    %v3146 = vadd.f32 %v3138, 1e-05
    %v3147 = vadd.f32 %v3139, 1e-05
    %v3148 = vadd.f32 %v3140, 1e-05
    %v3149 = vrsqrt.pop %v3141
    %v3150 = vrsqrt.pop %v3142
    %v3151 = vrsqrt.pop %v3143
    %v3152 = vrsqrt.pop %v3144
    %v3153 = vrsqrt.pop %v3145
    %v3154 = vrsqrt.pop %v3146
    %v3155 = vrsqrt.pop %v3147
    %v3156 = vrsqrt.pop %v3148
    %v3157 = vmul.f32 %v3101, %v3149
    %v3158 = vmul.f32 %v3102, %v3150
    %v3159 = vmul.f32 %v3103, %v3151
    %v3160 = vmul.f32 %v3104, %v3152
    %v3161 = vmul.f32 %v3105, %v3153
    %v3162 = vmul.f32 %v3106, %v3154
    %v3163 = vmul.f32 %v3107, %v3155
    %v3164 = vmul.f32 %v3108, %v3156
    %v3165 = vlaneseq
    %v3166 = vshrl.u32 %v3165, 7
    %v3167 = vsub.s32 0, %v3166
    %v3168 = vrot.slane %v3075, %v3167
    %v3169 = vmul.f32 %v3157, %v3168
    %v3170 = vmul.f32 %v3158, %v3168
    %v3171 = vmul.f32 %v3159, %v3168
    %v3172 = vmul.f32 %v3160, %v3168
    %v3173 = vmul.f32 %v3161, %v3168
    %v3174 = vmul.f32 %v3162, %v3168
    %v3175 = vmul.f32 %v3163, %v3168
    %v3176 = vmul.f32 %v3164, %v3168
    %v3177 = vlaneseq
    %v3178 = vshrl.u32 %v3177, 7
    %v3179 = vsub.s32 0, %v3178
    %v3180 = vrot.slane %v3076, %v3179
    %v3181 = vadd.f32 %v3169, %v3180
    %v3182 = vadd.f32 %v3170, %v3180
    %v3183 = vadd.f32 %v3171, %v3180
    %v3184 = vadd.f32 %v3172, %v3180
    %v3185 = vadd.f32 %v3173, %v3180
    %v3186 = vadd.f32 %v3174, %v3180
    %v3187 = vadd.f32 %v3175, %v3180
    %v3188 = vadd.f32 %v3176, %v3180
    %v3189 = vpack.c.bf16 %v3182, %v3181
    %v3190 = vpack.c.bf16 %v3184, %v3183
    %v3191 = vpack.c.bf16 %v3186, %v3185
    %v3192 = vpack.c.bf16 %v3188, %v3187
    %v3193 = vld [vmem:[#allocation11] sm:$0xff]
    %v3194 = vld [vmem:[#allocation11 + $0x8] sm:$0xff]
    %v3195 = vld [vmem:[#allocation11 + $0x10] sm:$0xff]
    %v3196 = vld [vmem:[#allocation11 + $0x18] sm:$0xff]
    %v3197 = vld [vmem:[#allocation11 + $0x20] sm:$0xff]
    %v3198 = vld [vmem:[#allocation11 + $0x28] sm:$0xff]
    %v3199 = vld [vmem:[#allocation11 + $0x30] sm:$0xff]
    %v3200 = vld [vmem:[#allocation11 + $0x38] sm:$0xff]
    %v3201 = vld [vmem:[#allocation11 + $0x40] sm:$0xff]
    %v3202 = vld [vmem:[#allocation11 + $0x48] sm:$0xff]
    %v3203 = vld [vmem:[#allocation11 + $0x50] sm:$0xff]
    %v3204 = vld [vmem:[#allocation11 + $0x58] sm:$0xff]
    %v3205 = vld [vmem:[#allocation11 + $0x60] sm:$0xff]
    %v3206 = vld [vmem:[#allocation11 + $0x68] sm:$0xff]
    %v3207 = vld [vmem:[#allocation11 + $0x70] sm:$0xff]
    %v3208 = vld [vmem:[#allocation11 + $0x78] sm:$0xff]
    %v3209 = vld [vmem:[%s8] sm:$0x3]
    %v3211 = vlaneseq
    %v3212 = vshrl.u32 %v3211, 7
    %v3213 = vsub.s32 0, %v3212
    %v3214 = vrot.slane %v3209, %v3213
    %v3215 = vlaneseq
    %v3216 = vshrl.u32 %v3215, 7
    %v3217 = vsub.s32 1, %v3216
    %v3218 = vrot.slane %v3209, %v3217
    %v3237 = vunpack.c.l.b16 %v3193
    %v3238 = vunpack.c.h.b16 %v3193
    %v3239 = vunpack.c.l.b16 %v3194
    %v3240 = vunpack.c.h.b16 %v3194
    %v3241 = vunpack.c.l.b16 %v3195
    %v3242 = vunpack.c.h.b16 %v3195
    %v3243 = vunpack.c.l.b16 %v3196
    %v3244 = vunpack.c.h.b16 %v3196
    %v3245 = vunpack.c.l.b16 %v3197
    %v3246 = vunpack.c.h.b16 %v3197
    %v3247 = vunpack.c.l.b16 %v3198
    %v3248 = vunpack.c.h.b16 %v3198
    %v3249 = vunpack.c.l.b16 %v3199
    %v3250 = vunpack.c.h.b16 %v3199
    %v3251 = vunpack.c.l.b16 %v3200
    %v3252 = vunpack.c.h.b16 %v3200
    %v3253 = vunpack.c.l.b16 %v3201
    %v3254 = vunpack.c.h.b16 %v3201
    %v3255 = vunpack.c.l.b16 %v3202
    %v3256 = vunpack.c.h.b16 %v3202
    %v3257 = vunpack.c.l.b16 %v3203
    %v3258 = vunpack.c.h.b16 %v3203
    %v3259 = vunpack.c.l.b16 %v3204
    %v3260 = vunpack.c.h.b16 %v3204
    %v3261 = vunpack.c.l.b16 %v3205
    %v3262 = vunpack.c.h.b16 %v3205
    %v3263 = vunpack.c.l.b16 %v3206
    %v3264 = vunpack.c.h.b16 %v3206
    %v3265 = vunpack.c.l.b16 %v3207
    %v3266 = vunpack.c.h.b16 %v3207
    %v3267 = vunpack.c.l.b16 %v3208
    %v3268 = vunpack.c.h.b16 %v3208
    %v3269 = vpack.c.b16 %v3239, %v3237
    %v3270 = vpack.c.b16 %v3240, %v3238
    %v3271 = vpack.c.b16 %v3243, %v3241
    %v3272 = vpack.c.b16 %v3244, %v3242
    %v3273 = vpack.c.b16 %v3247, %v3245
    %v3274 = vpack.c.b16 %v3248, %v3246
    %v3275 = vpack.c.b16 %v3251, %v3249
    %v3276 = vpack.c.b16 %v3252, %v3250
    %v3277 = vpack.c.b16 %v3255, %v3253
    %v3278 = vpack.c.b16 %v3256, %v3254
    %v3279 = vpack.c.b16 %v3259, %v3257
    %v3280 = vpack.c.b16 %v3260, %v3258
    %v3281 = vpack.c.b16 %v3263, %v3261
    %v3282 = vpack.c.b16 %v3264, %v3262
    %v3283 = vpack.c.b16 %v3267, %v3265
    %v3284 = vpack.c.b16 %v3268, %v3266
    %3301 = vmatprep.subr.bf16.mxu0 %v3270
    %3302 = vmatpush1.bf16.msra.mxu0 %v3269
    %3303 = vmatprep.subr.bf16.mxu0 %v3272
    %3304 = vmatpush1.bf16.msra.mxu0 %v3271
    %3305 = vmatprep.subr.bf16.mxu0 %v3274
    %3306 = vmatpush1.bf16.msra.mxu0 %v3273
    %3307 = vmatprep.subr.bf16.mxu0 %v3276
    %3308 = vmatpush1.bf16.msra.mxu0 %v3275
    %3309 = vmatprep.subr.bf16.mxu0 %v3278
    %3310 = vmatpush1.bf16.msra.mxu0 %v3277
    %3311 = vmatprep.subr.bf16.mxu0 %v3280
    %3312 = vmatpush1.bf16.msra.mxu0 %v3279
    %3313 = vmatprep.subr.bf16.mxu0 %v3282
    %3314 = vmatpush1.bf16.msra.mxu0 %v3281
    %3315 = vmatprep.subr.bf16.mxu0 %v3284
    %3316 = vmatpush1.bf16.msra.mxu0 %v3283
    %3317 = vmatprep.subr.bf16.mxu0 0
    %3318 = vmatpush1.bf16.msra.mxu0 0
    %3319 = vmatprep.subr.bf16.mxu0 0
    %3320 = vmatpush1.bf16.msra.mxu0 0
    %3321 = vmatprep.subr.bf16.mxu0 0
    %3322 = vmatpush1.bf16.msra.mxu0 0
    %3323 = vmatprep.subr.bf16.mxu0 0
    %3324 = vmatpush1.bf16.msra.mxu0 0
    %3325 = vmatprep.subr.bf16.mxu0 0
    %3326 = vmatpush1.bf16.msra.mxu0 0
    %3327 = vmatprep.subr.bf16.mxu0 0
    %3328 = vmatpush1.bf16.msra.mxu0 0
    %3329 = vmatprep.subr.bf16.mxu0 0
    %3330 = vmatpush1.bf16.msra.mxu0 0
    %3331 = vmatprep.subr.bf16.mxu0 0
    %3332 = vmatpush1.bf16.msra.mxu0 0
    %3333 = vmatprep.mubr.bf16.mxu0 0
    %3334 = vmatmul.mubr.bf16.gmra.mrb[0].mxu0 %v3189
    %v3335 = vpop.f32.mrb[0].mxu0
    %v3336 = vadd.f32 %v3214, %v3335
    %v3337 = vpop.f32.mrb[0].mxu0
    %v3338 = vadd.f32 %v3218, %v3337
    %v3339 = vpop.f32.mrb[0].mxu0
    %v3340 = vadd.f32 %v3214, %v3339
    %v3341 = vpop.f32.mrb[0].mxu0
    %v3342 = vadd.f32 %v3218, %v3341
    %3343 = vmatprep.mubr.bf16.mxu0 0
    %3344 = vmatmul.mubr.bf16.gmra.mrb[0].mxu0 %v3190
    %v3345 = vpop.f32.mrb[0].mxu0
    %v3346 = vadd.f32 %v3214, %v3345
    %v3347 = vpop.f32.mrb[0].mxu0
    %v3348 = vadd.f32 %v3218, %v3347
    %v3349 = vpop.f32.mrb[0].mxu0
    %v3350 = vadd.f32 %v3214, %v3349
    %v3351 = vpop.f32.mrb[0].mxu0
    %v3352 = vadd.f32 %v3218, %v3351
    %3353 = vmatprep.mubr.bf16.mxu0 0
    %3354 = vmatmul.mubr.bf16.gmra.mrb[0].mxu0 %v3191
    %v3355 = vpop.f32.mrb[0].mxu0
    %v3356 = vadd.f32 %v3214, %v3355
    %v3357 = vpop.f32.mrb[0].mxu0
    %v3358 = vadd.f32 %v3218, %v3357
    %v3359 = vpop.f32.mrb[0].mxu0
    %v3360 = vadd.f32 %v3214, %v3359
    %v3361 = vpop.f32.mrb[0].mxu0
    %v3362 = vadd.f32 %v3218, %v3361
    %3363 = vmatprep.mubr.bf16.mxu0 0
    %3364 = vmatmul.mubr.bf16.gmra.mrb[0].mxu0 %v3192
    %v3365 = vpop.f32.mrb[0].mxu0
    %v3366 = vadd.f32 %v3214, %v3365
    %v3367 = vpop.f32.mrb[0].mxu0
    %v3368 = vadd.f32 %v3218, %v3367
    %v3369 = vpop.f32.mrb[0].mxu0
    %v3370 = vadd.f32 %v3214, %v3369
    %v3371 = vpop.f32.mrb[0].mxu0
    %v3372 = vadd.f32 %v3218, %v3371
    %3373 = vdwg.mxu0
    %v3374 = vmul.f32 %v3336, %v3336
    %v3375 = vmul.f32 %v3338, %v3338
    %v3376 = vmul.f32 %v3340, %v3340
    %v3377 = vmul.f32 %v3342, %v3342
    %v3378 = vmul.f32 %v3346, %v3346
    %v3379 = vmul.f32 %v3348, %v3348
    %v3380 = vmul.f32 %v3350, %v3350
    %v3381 = vmul.f32 %v3352, %v3352
    %v3382 = vmul.f32 %v3356, %v3356
    %v3383 = vmul.f32 %v3358, %v3358
    %v3384 = vmul.f32 %v3360, %v3360
    %v3385 = vmul.f32 %v3362, %v3362
    %v3386 = vmul.f32 %v3366, %v3366
    %v3387 = vmul.f32 %v3368, %v3368
    %v3388 = vmul.f32 %v3370, %v3370
    %v3389 = vmul.f32 %v3372, %v3372
    %v3390 = vmul.f32 %v3336, %v3374
    %v3391 = vmul.f32 %v3338, %v3375
    %v3392 = vmul.f32 %v3340, %v3376
    %v3393 = vmul.f32 %v3342, %v3377
    %v3394 = vmul.f32 %v3346, %v3378
    %v3395 = vmul.f32 %v3348, %v3379
    %v3396 = vmul.f32 %v3350, %v3380
    %v3397 = vmul.f32 %v3352, %v3381
    %v3398 = vmul.f32 %v3356, %v3382
    %v3399 = vmul.f32 %v3358, %v3383
    %v3400 = vmul.f32 %v3360, %v3384
    %v3401 = vmul.f32 %v3362, %v3385
    %v3402 = vmul.f32 %v3366, %v3386
    %v3403 = vmul.f32 %v3368, %v3387
    %v3404 = vmul.f32 %v3370, %v3388
    %v3405 = vmul.f32 %v3372, %v3389
    %v3406 = vmul.f32 %v3390, 0.044715
    %v3407 = vmul.f32 %v3391, 0.044715
    %v3408 = vmul.f32 %v3392, 0.044715
    %v3409 = vmul.f32 %v3393, 0.044715
    %v3410 = vmul.f32 %v3394, 0.044715
    %v3411 = vmul.f32 %v3395, 0.044715
    %v3412 = vmul.f32 %v3396, 0.044715
    %v3413 = vmul.f32 %v3397, 0.044715
    %v3414 = vmul.f32 %v3398, 0.044715
    %v3415 = vmul.f32 %v3399, 0.044715
    %v3416 = vmul.f32 %v3400, 0.044715
    %v3417 = vmul.f32 %v3401, 0.044715
    %v3418 = vmul.f32 %v3402, 0.044715
    %v3419 = vmul.f32 %v3403, 0.044715
    %v3420 = vmul.f32 %v3404, 0.044715
    %v3421 = vmul.f32 %v3405, 0.044715
    %v3422 = vadd.f32 %v3336, %v3406
    %v3423 = vadd.f32 %v3338, %v3407
    %v3424 = vadd.f32 %v3340, %v3408
    %v3425 = vadd.f32 %v3342, %v3409
    %v3426 = vadd.f32 %v3346, %v3410
    %v3427 = vadd.f32 %v3348, %v3411
    %v3428 = vadd.f32 %v3350, %v3412
    %v3429 = vadd.f32 %v3352, %v3413
    %v3430 = vadd.f32 %v3356, %v3414
    %v3431 = vadd.f32 %v3358, %v3415
    %v3432 = vadd.f32 %v3360, %v3416
    %v3433 = vadd.f32 %v3362, %v3417
    %v3434 = vadd.f32 %v3366, %v3418
    %v3435 = vadd.f32 %v3368, %v3419
    %v3436 = vadd.f32 %v3370, %v3420
    %v3437 = vadd.f32 %v3372, %v3421
    %v3438 = vmul.f32 %v3422, 0.7978846
    %v3439 = vmul.f32 %v3423, 0.7978846
    %v3440 = vmul.f32 %v3424, 0.7978846
    %v3441 = vmul.f32 %v3425, 0.7978846
    %v3442 = vmul.f32 %v3426, 0.7978846
    %v3443 = vmul.f32 %v3427, 0.7978846
    %v3444 = vmul.f32 %v3428, 0.7978846
    %v3445 = vmul.f32 %v3429, 0.7978846
    %v3446 = vmul.f32 %v3430, 0.7978846
    %v3447 = vmul.f32 %v3431, 0.7978846
    %v3448 = vmul.f32 %v3432, 0.7978846
    %v3449 = vmul.f32 %v3433, 0.7978846
    %v3450 = vmul.f32 %v3434, 0.7978846
    %v3451 = vmul.f32 %v3435, 0.7978846
    %v3452 = vmul.f32 %v3436, 0.7978846
    %v3453 = vmul.f32 %v3437, 0.7978846
    %v3454 = vtanh.pop %v3438
    %v3455 = vtanh.pop %v3439
    %v3456 = vtanh.pop %v3440
    %v3457 = vtanh.pop %v3441
    %v3458 = vtanh.pop %v3442
    %v3459 = vtanh.pop %v3443
    %v3460 = vtanh.pop %v3444
    %v3461 = vtanh.pop %v3445
    %v3462 = vtanh.pop %v3446
    %v3463 = vtanh.pop %v3447
    %v3464 = vtanh.pop %v3448
    %v3465 = vtanh.pop %v3449
    %v3466 = vtanh.pop %v3450
    %v3467 = vtanh.pop %v3451
    %v3468 = vtanh.pop %v3452
    %v3469 = vtanh.pop %v3453
    %v3470 = vadd.f32 %v3454, 1.0
    %v3471 = vadd.f32 %v3455, 1.0
    %v3472 = vadd.f32 %v3456, 1.0
    %v3473 = vadd.f32 %v3457, 1.0
    %v3474 = vadd.f32 %v3458, 1.0
    %v3475 = vadd.f32 %v3459, 1.0
    %v3476 = vadd.f32 %v3460, 1.0
    %v3477 = vadd.f32 %v3461, 1.0
    %v3478 = vadd.f32 %v3462, 1.0
    %v3479 = vadd.f32 %v3463, 1.0
    %v3480 = vadd.f32 %v3464, 1.0
    %v3481 = vadd.f32 %v3465, 1.0
    %v3482 = vadd.f32 %v3466, 1.0
    %v3483 = vadd.f32 %v3467, 1.0
    %v3484 = vadd.f32 %v3468, 1.0
    %v3485 = vadd.f32 %v3469, 1.0
    %v3486 = vmul.f32 %v3470, 0.5
    %v3487 = vmul.f32 %v3471, 0.5
    %v3488 = vmul.f32 %v3472, 0.5
    %v3489 = vmul.f32 %v3473, 0.5
    %v3490 = vmul.f32 %v3474, 0.5
    %v3491 = vmul.f32 %v3475, 0.5
    %v3492 = vmul.f32 %v3476, 0.5
    %v3493 = vmul.f32 %v3477, 0.5
    %v3494 = vmul.f32 %v3478, 0.5
    %v3495 = vmul.f32 %v3479, 0.5
    %v3496 = vmul.f32 %v3480, 0.5
    %v3497 = vmul.f32 %v3481, 0.5
    %v3498 = vmul.f32 %v3482, 0.5
    %v3499 = vmul.f32 %v3483, 0.5
    %v3500 = vmul.f32 %v3484, 0.5
    %v3501 = vmul.f32 %v3485, 0.5
    %v3502 = vmul.f32 %v3336, %v3486
    %v3503 = vmul.f32 %v3338, %v3487
    %v3504 = vmul.f32 %v3340, %v3488
    %v3505 = vmul.f32 %v3342, %v3489
    %v3506 = vmul.f32 %v3346, %v3490
    %v3507 = vmul.f32 %v3348, %v3491
    %v3508 = vmul.f32 %v3350, %v3492
    %v3509 = vmul.f32 %v3352, %v3493
    %v3510 = vmul.f32 %v3356, %v3494
    %v3511 = vmul.f32 %v3358, %v3495
    %v3512 = vmul.f32 %v3360, %v3496
    %v3513 = vmul.f32 %v3362, %v3497
    %v3514 = vmul.f32 %v3366, %v3498
    %v3515 = vmul.f32 %v3368, %v3499
    %v3516 = vmul.f32 %v3370, %v3500
    %v3517 = vmul.f32 %v3372, %v3501
    %v3518 = vpack.c.bf16 %v3504, %v3502
    %v3519 = vpack.c.bf16 %v3505, %v3503
    %v3520 = vpack.c.bf16 %v3508, %v3506
    %v3521 = vpack.c.bf16 %v3509, %v3507
    %v3522 = vpack.c.bf16 %v3512, %v3510
    %v3523 = vpack.c.bf16 %v3513, %v3511
    %v3524 = vpack.c.bf16 %v3516, %v3514
    %v3525 = vpack.c.bf16 %v3517, %v3515
    %v3526 = vld [vmem:[#allocation13] sm:$0xf]
    %v3527 = vld [vmem:[#allocation13 + $0x4] sm:$0xf]
    %v3528 = vld [vmem:[#allocation13 + $0x8] sm:$0xf]
    %v3529 = vld [vmem:[#allocation13 + $0xc] sm:$0xf]
    %v3530 = vld [vmem:[#allocation13 + $0x10] sm:$0xf]
    %v3531 = vld [vmem:[#allocation13 + $0x14] sm:$0xf]
    %v3532 = vld [vmem:[#allocation13 + $0x18] sm:$0xf]
    %v3533 = vld [vmem:[#allocation13 + $0x1c] sm:$0xf]
    %v3534 = vld [vmem:[#allocation13 + $0x20] sm:$0xf]
    %v3535 = vld [vmem:[#allocation13 + $0x24] sm:$0xf]
    %v3536 = vld [vmem:[#allocation13 + $0x28] sm:$0xf]
    %v3537 = vld [vmem:[#allocation13 + $0x2c] sm:$0xf]
    %v3538 = vld [vmem:[#allocation13 + $0x30] sm:$0xf]
    %v3539 = vld [vmem:[#allocation13 + $0x34] sm:$0xf]
    %v3540 = vld [vmem:[#allocation13 + $0x38] sm:$0xf]
    %v3541 = vld [vmem:[#allocation13 + $0x3c] sm:$0xf]
    %v3542 = vld [vmem:[#allocation13 + $0x40] sm:$0xf]
    %v3543 = vld [vmem:[#allocation13 + $0x44] sm:$0xf]
    %v3544 = vld [vmem:[#allocation13 + $0x48] sm:$0xf]
    %v3545 = vld [vmem:[#allocation13 + $0x4c] sm:$0xf]
    %v3546 = vld [vmem:[#allocation13 + $0x50] sm:$0xf]
    %v3547 = vld [vmem:[#allocation13 + $0x54] sm:$0xf]
    %v3548 = vld [vmem:[#allocation13 + $0x58] sm:$0xf]
    %v3549 = vld [vmem:[#allocation13 + $0x5c] sm:$0xf]
    %v3550 = vld [vmem:[#allocation13 + $0x60] sm:$0xf]
    %v3551 = vld [vmem:[#allocation13 + $0x64] sm:$0xf]
    %v3552 = vld [vmem:[#allocation13 + $0x68] sm:$0xf]
    %v3553 = vld [vmem:[#allocation13 + $0x6c] sm:$0xf]
    %v3554 = vld [vmem:[#allocation13 + $0x70] sm:$0xf]
    %v3555 = vld [vmem:[#allocation13 + $0x74] sm:$0xf]
    %v3556 = vld [vmem:[#allocation13 + $0x78] sm:$0xf]
    %v3557 = vld [vmem:[#allocation13 + $0x7c] sm:$0xf]
    %v3558 = vld [vmem:[%s10] sm:$0x1]
    %v3560 = vlaneseq
    %v3561 = vshrl.u32 %v3560, 7
    %v3562 = vsub.s32 0, %v3561
    %v3563 = vrot.slane %v3558, %v3562
    %v3597 = vunpack.c.l.b16 %v3526
    %v3598 = vunpack.c.l.b16 %v3527
    %v3599 = vunpack.c.l.b16 %v3528
    %v3600 = vunpack.c.l.b16 %v3529
    %v3601 = vunpack.c.l.b16 %v3530
    %v3602 = vunpack.c.l.b16 %v3531
    %v3603 = vunpack.c.l.b16 %v3532
    %v3604 = vunpack.c.l.b16 %v3533
    %v3605 = vunpack.c.l.b16 %v3534
    %v3606 = vunpack.c.l.b16 %v3535
    %v3607 = vunpack.c.l.b16 %v3536
    %v3608 = vunpack.c.l.b16 %v3537
    %v3609 = vunpack.c.l.b16 %v3538
    %v3610 = vunpack.c.l.b16 %v3539
    %v3611 = vunpack.c.l.b16 %v3540
    %v3612 = vunpack.c.l.b16 %v3541
    %v3613 = vunpack.c.l.b16 %v3542
    %v3614 = vunpack.c.l.b16 %v3543
    %v3615 = vunpack.c.l.b16 %v3544
    %v3616 = vunpack.c.l.b16 %v3545
    %v3617 = vunpack.c.l.b16 %v3546
    %v3618 = vunpack.c.l.b16 %v3547
    %v3619 = vunpack.c.l.b16 %v3548
    %v3620 = vunpack.c.l.b16 %v3549
    %v3621 = vunpack.c.l.b16 %v3550
    %v3622 = vunpack.c.l.b16 %v3551
    %v3623 = vunpack.c.l.b16 %v3552
    %v3624 = vunpack.c.l.b16 %v3553
    %v3625 = vunpack.c.l.b16 %v3554
    %v3626 = vunpack.c.l.b16 %v3555
    %v3627 = vunpack.c.l.b16 %v3556
    %v3628 = vunpack.c.l.b16 %v3557
    %v3629 = vpack.c.b16 %v3598, %v3597
    %v3630 = vpack.c.b16 %v3600, %v3599
    %v3631 = vpack.c.b16 %v3602, %v3601
    %v3632 = vpack.c.b16 %v3604, %v3603
    %v3633 = vpack.c.b16 %v3606, %v3605
    %v3634 = vpack.c.b16 %v3608, %v3607
    %v3635 = vpack.c.b16 %v3610, %v3609
    %v3636 = vpack.c.b16 %v3612, %v3611
    %v3637 = vpack.c.b16 %v3614, %v3613
    %v3638 = vpack.c.b16 %v3616, %v3615
    %v3639 = vpack.c.b16 %v3618, %v3617
    %v3640 = vpack.c.b16 %v3620, %v3619
    %v3641 = vpack.c.b16 %v3622, %v3621
    %v3642 = vpack.c.b16 %v3624, %v3623
    %v3643 = vpack.c.b16 %v3626, %v3625
    %v3644 = vpack.c.b16 %v3628, %v3627
    %3661 = vmatprep.subr.bf16.mxu0 0
    %3662 = vmatpush1.bf16.msra.mxu0 %v3629
    %3663 = vmatprep.subr.bf16.mxu0 0
    %3664 = vmatpush1.bf16.msra.mxu0 %v3630
    %3665 = vmatprep.subr.bf16.mxu0 0
    %3666 = vmatpush1.bf16.msra.mxu0 %v3631
    %3667 = vmatprep.subr.bf16.mxu0 0
    %3668 = vmatpush1.bf16.msra.mxu0 %v3632
    %3669 = vmatprep.subr.bf16.mxu0 0
    %3670 = vmatpush1.bf16.msra.mxu0 %v3633
    %3671 = vmatprep.subr.bf16.mxu0 0
    %3672 = vmatpush1.bf16.msra.mxu0 %v3634
    %3673 = vmatprep.subr.bf16.mxu0 0
    %3674 = vmatpush1.bf16.msra.mxu0 %v3635
    %3675 = vmatprep.subr.bf16.mxu0 0
    %3676 = vmatpush1.bf16.msra.mxu0 %v3636
    %3677 = vmatprep.subr.bf16.mxu0 0
    %3678 = vmatpush1.bf16.msra.mxu0 %v3637
    %3679 = vmatprep.subr.bf16.mxu0 0
    %3680 = vmatpush1.bf16.msra.mxu0 %v3638
    %3681 = vmatprep.subr.bf16.mxu0 0
    %3682 = vmatpush1.bf16.msra.mxu0 %v3639
    %3683 = vmatprep.subr.bf16.mxu0 0
    %3684 = vmatpush1.bf16.msra.mxu0 %v3640
    %3685 = vmatprep.subr.bf16.mxu0 0
    %3686 = vmatpush1.bf16.msra.mxu0 %v3641
    %3687 = vmatprep.subr.bf16.mxu0 0
    %3688 = vmatpush1.bf16.msra.mxu0 %v3642
    %3689 = vmatprep.subr.bf16.mxu0 0
    %3690 = vmatpush1.bf16.msra.mxu0 %v3643
    %3691 = vmatprep.subr.bf16.mxu0 0
    %3692 = vmatpush1.bf16.msra.mxu0 %v3644
    %3693 = vmatprep.mubr.bf16.mxu0 %v3519
    %3694 = vmatmul.mubr.bf16.gmra.mrb[0].mxu0 %v3518
    %v3695 = vpop.f32.mrb[0].mxu0
    %v3696 = vadd.f32 %v3563, %v3695
    %v3697 = vpop.f32.mrb[0].mxu0
    %v3698 = vpop.f32.mrb[0].mxu0
    %v3699 = vadd.f32 %v3563, %v3698
    %v3700 = vpop.f32.mrb[0].mxu0
    %3701 = vmatprep.mubr.bf16.mxu0 %v3521
    %3702 = vmatmul.mubr.bf16.gmra.mrb[0].mxu0 %v3520
    %v3703 = vpop.f32.mrb[0].mxu0
    %v3704 = vadd.f32 %v3563, %v3703
    %v3705 = vpop.f32.mrb[0].mxu0
    %v3706 = vpop.f32.mrb[0].mxu0
    %v3707 = vadd.f32 %v3563, %v3706
    %v3708 = vpop.f32.mrb[0].mxu0
    %3709 = vmatprep.mubr.bf16.mxu0 %v3523
    %3710 = vmatmul.mubr.bf16.gmra.mrb[0].mxu0 %v3522
    %v3711 = vpop.f32.mrb[0].mxu0
    %v3712 = vadd.f32 %v3563, %v3711
    %v3713 = vpop.f32.mrb[0].mxu0
    %v3714 = vpop.f32.mrb[0].mxu0
    %v3715 = vadd.f32 %v3563, %v3714
    %v3716 = vpop.f32.mrb[0].mxu0
    %3717 = vmatprep.mubr.bf16.mxu0 %v3525
    %3718 = vmatmul.mubr.bf16.gmra.mrb[0].mxu0 %v3524
    %v3719 = vpop.f32.mrb[0].mxu0
    %v3720 = vadd.f32 %v3563, %v3719
    %v3721 = vpop.f32.mrb[0].mxu0
    %v3722 = vpop.f32.mrb[0].mxu0
    %v3723 = vadd.f32 %v3563, %v3722
    %v3724 = vpop.f32.mrb[0].mxu0
    %3725 = vdwg.mxu0
    %v3726 = vadd.f32 %v3067, %v3696
    %v3727 = vadd.f32 %v3068, %v3699
    %v3728 = vadd.f32 %v3069, %v3704
    %v3729 = vadd.f32 %v3070, %v3707
    %v3730 = vadd.f32 %v3071, %v3712
    %v3731 = vadd.f32 %v3072, %v3715
    %v3732 = vadd.f32 %v3073, %v3720
    %v3733 = vadd.f32 %v3074, %v3723
    %3734 = vst [vmem:[#allocation14] sm:$0xff] %v3726
    %3735 = vst [vmem:[#allocation14 + $0x8] sm:$0xff] %v3727
    %3736 = vst [vmem:[#allocation14 + $0x10] sm:$0xff] %v3728
    %3737 = vst [vmem:[#allocation14 + $0x18] sm:$0xff] %v3729
    %3738 = vst [vmem:[#allocation14 + $0x20] sm:$0xff] %v3730
    %3739 = vst [vmem:[#allocation14 + $0x28] sm:$0xff] %v3731
    %3740 = vst [vmem:[#allocation14 + $0x30] sm:$0xff] %v3732
    %3741 = vst [vmem:[#allocation14 + $0x38] sm:$0xff] %v3733
    // Predicated region
    $region82: #{tpu_custom_call.1} parent=1 // pred_check
      _
    $region83: #{tpu_custom_call.1} parent=1 // pred_check_branch
      %3743 = sbr.rel (0) target = $region85
    $region84: #{tpu_custom_call.1} parent=1 // pred_region
      %s3745 = ssub.s32 1024, 1024
      %3746 = vsyncadd [#allocation4], %s3745
      %s3747 = sshll.u32 [#allocation14], 4
      %s3748 = int_to_ptr.vmem [resolvable:$true] %s3747
      %3753 = dma.vmem_to_hbm [thread:$0]  %s3748, 1024, %s13, [#allocation4], 128, 128, 8
    $region85: #{tpu_custom_call.1} parent=1 // pred_fallthru
      _
    // Predicated region
    $region86: #{tpu_custom_call.1} parent=1 // pred_check
      _
    $region87: #{tpu_custom_call.1} parent=1 // pred_check_branch
      %3755 = sbr.rel (0) target = $region89
    $region88: #{tpu_custom_call.1} parent=1 // pred_region
      %3756 = dma.done [#allocation4], 1024
    $region89: #{tpu_custom_call.1} parent=1 // pred_fallthru
      _
    %3757 = vsyncpa [#allocation3], 1
    %3758 = vsyncpa [#allocation6], 1
    %3759 = vsyncpa [#allocation9], 1
    %3760 = vsyncpa [#allocation12], 1
    %3761 = vsyncpa [#allocation4], 1

</llo_original>
